<compile_context>
chip_gen: v5e
topology: v5e:2x2
jax: 0.10.0
libtpu: 0.0.40
codegen_flags: <defaults>
</compile_context>

<pallas_src>
import functools

import jax
import jax.numpy as jnp
from jax import lax
from jax.experimental import pallas as pl
from jax.experimental.pallas import tpu as pltpu

EPS = 1e-5          # nn.BatchNorm3d default eps
NEG_SLOPE = 0.1     # nn.LeakyReLU default in the module


# ---------------------------------------------------------------- kernel ----

def _resblock_kernel(x_ref, t1_ref, t2sc_ref, b1_ref, b2_ref, o_ref,
                     xpad_ref, hpad_ref, col1_ref, col2_ref):
    _, n, _, nci = x_ref.shape            # block: (1, n, n, n*Cin)
    nco = o_ref.shape[-1]                 # n*Cout
    M = n * n                             # rows per grid step (D*H)

    def lrelu(v):
        return jnp.where(v >= 0, v, NEG_SLOPE * v)

    # ---- zero ONLY the D/H halo rows/cols of the padded scratches ---------
    # (4 thin stripes each, per step; interiors are fully overwritten below.
    #  Done every step so it is safe under "parallel" grid scheduling.)
    xpad_ref[pl.ds(0, 1), :, :] = jnp.zeros((1, n + 2, nci), jnp.float32)
    xpad_ref[pl.ds(n + 1, 1), :, :] = jnp.zeros((1, n + 2, nci), jnp.float32)
    xpad_ref[:, pl.ds(0, 1), :] = jnp.zeros((n + 2, 1, nci), jnp.float32)
    xpad_ref[:, pl.ds(n + 1, 1), :] = jnp.zeros((n + 2, 1, nci), jnp.float32)
    hpad_ref[pl.ds(0, 1), :, :] = jnp.zeros((1, n + 2, nco), jnp.float32)
    hpad_ref[pl.ds(n + 1, 1), :, :] = jnp.zeros((1, n + 2, nco), jnp.float32)
    hpad_ref[:, pl.ds(0, 1), :] = jnp.zeros((n + 2, 1, nco), jnp.float32)
    hpad_ref[:, pl.ds(n + 1, 1), :] = jnp.zeros((n + 2, 1, nco), jnp.float32)

    # ---- padded input interior (W halo lives inside the banded weights) ---
    x_f32 = x_ref[...].reshape(n, n, nci)
    xpad_ref[pl.ds(1, n), pl.ds(1, n), :] = x_f32

    # shortcut operand goes into the tail K-slot of the conv2 im2col slab
    col2_ref[:, pl.ds(9 * nco, nci)] = (
        x_f32.reshape(M, nci).astype(jnp.bfloat16))

    # ---- im2col for conv1: 9 (kd,kh) tap slabs, lane-aligned bf16 writes ---
    for kd in range(3):
        for kh in range(3):
            t = kd * 3 + kh
            slab = xpad_ref[pl.ds(kd, n), pl.ds(kh, n), :]
            col1_ref[:, pl.ds(t * nci, nci)] = (
                slab.reshape(M, nci).astype(jnp.bfloat16))

    # conv1 + BN1 (folded) + LeakyReLU: ONE (M,9*nci)@(9*nci,nco) MXU matmul
    h = lrelu(jnp.dot(col1_ref[...], t1_ref[...],
                      preferred_element_type=jnp.float32) + b1_ref[...])

    # ---- padded h interior, then im2col for conv2 --------------------------
    hpad_ref[pl.ds(1, n), pl.ds(1, n), :] = h.reshape(n, n, nco)
    for kd in range(3):
        for kh in range(3):
            t = kd * 3 + kh
            slab = hpad_ref[pl.ds(kd, n), pl.ds(kh, n), :]
            col2_ref[:, pl.ds(t * nco, nco)] = (
                slab.reshape(M, nco).astype(jnp.bfloat16))

    # conv2 + BN2 (folded) + shortcut(1x1 conv + BNsc, folded) + LeakyReLU:
    # ONE (M, 9*nco+nci)@(9*nco+nci, nco) matmul, single accumulation chain.
    out = jnp.dot(col2_ref[...], t2sc_ref[...],
                  preferred_element_type=jnp.float32) + b2_ref[...]
    o_ref[...] = lrelu(out).reshape(1, n, n, nco)


# ----------------------------------------------- one-time weight folding ----

def _banded_weight(conv_w, scale, n):
    """(Cout,Cin,3,3,3) conv weight (with BN scale folded) -> 9 banded
    matrices (9, n*Cin, n*Cout): tap (kd,kh) applied to a (W,C)-lane-packed
    row; the kw taps and W-boundary zeros live in the block-Toeplitz band."""
    cout, cin = conv_w.shape[0], conv_w.shape[1]
    wk = jnp.transpose(conv_w * scale.reshape(cout, 1, 1, 1, 1),
                       (2, 3, 4, 1, 0))                  # (kd,kh,kw,Cin,Cout)
    t = jnp.zeros((9, n, cin, n, cout), jnp.float32)
    for kw in range(3):
        blk = wk[:, :, kw].reshape(9, cin, cout)
        for wo in range(n):
            wi = wo + kw - 1
            if 0 <= wi < n:
                t = t.at[:, wi, :, wo, :].set(blk)
    return t.reshape(9, n * cin, n * cout)


def _pointwise_weight(conv_w, scale, n):
    """(Cout,Cin,1,1,1) conv weight (BN scale folded) -> block-diagonal
    (n*Cin, n*Cout) matrix acting on (W,C)-lane-packed rows."""
    cout, cin = conv_w.shape[0], conv_w.shape[1]
    wf = (conv_w.reshape(cout, cin) * scale.reshape(cout, 1)).T   # (Cin,Cout)
    t = jnp.zeros((n, cin, n, cout), jnp.float32)
    for w in range(n):
        t = t.at[w, :, w, :].set(wf)
    return t.reshape(n * cin, n * cout)


def fold_params(p, *, n):
    """Fold eval-mode BN into the conv weights, build the lane-packed banded
    matrices (long-K layout) and cast them to bf16.  Runs once per module."""
    def bn_affine(g, b, m, v):
        s = g / jnp.sqrt(v + EPS)
        return s, b - m * s

    s1, sh1 = bn_affine(p['bn1_gamma'], p['bn1_beta'],
                        p['bn1_mean'], p['bn1_var'])
    s2, sh2 = bn_affine(p['bn2_gamma'], p['bn2_beta'],
                        p['bn2_mean'], p['bn2_var'])
    ssc, shsc = bn_affine(p['bnsc_gamma'], p['bnsc_beta'],
                          p['bnsc_mean'], p['bnsc_var'])

    out_c, in_c = p['conv1_w'].shape[0], p['conv1_w'].shape[1]
    nci, nco = n * in_c, n * out_c

    t1 = _banded_weight(p['conv1_w'], s1, n).reshape(9 * nci, nco)
    t2 = _banded_weight(p['conv2_w'], s2, n).reshape(9 * nco, nco)
    tsc = _pointwise_weight(p['convsc_w'], ssc, n)          # (nci, nco)
    return {
        't1': t1.astype(jnp.bfloat16),
        # conv2 band and shortcut share one K axis -> one fused matmul.
        't2sc': jnp.concatenate([t2, tsc], axis=0).astype(jnp.bfloat16),
        'b1': jnp.tile(sh1, (n,)).reshape(1, nco).astype(jnp.float32),
        'b2': jnp.tile(sh2 + shsc, (n,)).reshape(1, nco).astype(jnp.float32),
    }


# --------------------------------------------------------------- forward ----

def residual_block_3d_forward(x, folded, *, n, in_c, out_c):
    """x: (B, in_c, n, n, n) float32 (PyTorch NCDHW). Returns same layout."""
    B = x.shape[0]
    nci, nco = n * in_c, n * out_c

    # NCDHW -> (B, D, H, W*C) lane-packed.  D/H zero-padding happens inside
    # the kernel (halo-only zeroing of a VMEM scratch), W padding is folded
    # into the banded weights.
    x_cl = jnp.transpose(x, (0, 2, 3, 4, 1)).reshape(B, n, n, nci)

    out = pl.pallas_call(
        _resblock_kernel,
        out_shape=jax.ShapeDtypeStruct((B, n, n, nco), jnp.float32),
        grid=(B,),
        in_specs=[
            pl.BlockSpec((1, n, n, nci), lambda b: (b, 0, 0, 0)),
            # constant index_map -> weights DMA'd once, resident across steps
            pl.BlockSpec((9 * nci, nco), lambda b: (0, 0)),
            pl.BlockSpec((9 * nco + nci, nco), lambda b: (0, 0)),
            pl.BlockSpec((1, nco), lambda b: (0, 0)),
            pl.BlockSpec((1, nco), lambda b: (0, 0)),
        ],
        out_specs=pl.BlockSpec((1, n, n, nco), lambda b: (b, 0, 0, 0)),
        scratch_shapes=[
            pltpu.VMEM((n + 2, n + 2, nci), jnp.float32),       # xpad
            pltpu.VMEM((n + 2, n + 2, nco), jnp.float32),       # hpad
            pltpu.VMEM((n * n, 9 * nci), jnp.bfloat16),         # im2col conv1
            pltpu.VMEM((n * n, 9 * nco + nci), jnp.bfloat16),   # im2col conv2+sc
        ],
        compiler_params=pltpu.CompilerParams(
            dimension_semantics=("parallel",)),
    )(x_cl, folded['t1'], folded['t2sc'], folded['b1'], folded['b2'])

    # (B, D, H, W*C) -> NCDHW
    return jnp.transpose(out.reshape(B, n, n, n, out_c), (0, 4, 1, 2, 3))


# ----------------------------------------------------------- pure-JAX ref ---

def reference(x, p):
    def bn(v, g, b, m, var):
        sh = (1, -1, 1, 1, 1)
        return ((v - m.reshape(sh)) / jnp.sqrt(var.reshape(sh) + EPS)
                * g.reshape(sh) + b.reshape(sh))

    def lrelu(v):
        return jnp.where(v >= 0, v, NEG_SLOPE * v)

    def conv(v, w, pad):
        return lax.conv_general_dilated(
            v, w, (1, 1, 1), ((pad, pad),) * 3,
            dimension_numbers=('NCDHW', 'OIDHW', 'NCDHW'),
            precision=lax.Precision.HIGHEST)

    h = lrelu(bn(conv(x, p['conv1_w'], 1),
                 p['bn1_gamma'], p['bn1_beta'], p['bn1_mean'], p['bn1_var']))
    main = bn(conv(h, p['conv2_w'], 1),
              p['bn2_gamma'], p['bn2_beta'], p['bn2_mean'], p['bn2_var'])
    sc = bn(conv(x, p['convsc_w'], 0),
            p['bnsc_gamma'], p['bnsc_beta'], p['bnsc_mean'], p['bnsc_var'])
    return lrelu(main + sc)


# ------------------------------------------------------------------- main ---

if __name__ == "__main__":
    B, in_c, out_c, n = 2, 16, 16, 8          # small shapes; n*C = 128 lanes
    key = jax.random.PRNGKey(0)
    ks = jax.random.split(key, 16)

    params = {
        'conv1_w': 0.05 * jax.random.normal(ks[0], (out_c, in_c, 3, 3, 3),
                                            jnp.float32),
        'conv2_w': 0.05 * jax.random.normal(ks[1], (out_c, out_c, 3, 3, 3),
                                            jnp.float32),
        'convsc_w': 0.2 * jax.random.normal(ks[2], (out_c, in_c, 1, 1, 1),
                                            jnp.float32),
        'bn1_gamma': 1.0 + 0.1 * jax.random.normal(ks[3], (out_c,), jnp.float32),
        'bn1_beta': 0.1 * jax.random.normal(ks[4], (out_c,), jnp.float32),
        'bn1_mean': 0.1 * jax.random.normal(ks[5], (out_c,), jnp.float32),
        'bn1_var': 1.0 + 0.5 * jax.random.uniform(ks[6], (out_c,), jnp.float32),
        'bn2_gamma': 1.0 + 0.1 * jax.random.normal(ks[7], (out_c,), jnp.float32),
        'bn2_beta': 0.1 * jax.random.normal(ks[8], (out_c,), jnp.float32),
        'bn2_mean': 0.1 * jax.random.normal(ks[9], (out_c,), jnp.float32),
        'bn2_var': 1.0 + 0.5 * jax.random.uniform(ks[10], (out_c,), jnp.float32),
        'bnsc_gamma': 1.0 + 0.1 * jax.random.normal(ks[11], (out_c,), jnp.float32),
        'bnsc_beta': 0.1 * jax.random.normal(ks[12], (out_c,), jnp.float32),
        'bnsc_mean': 0.1 * jax.random.normal(ks[13], (out_c,), jnp.float32),
        'bnsc_var': 1.0 + 0.5 * jax.random.uniform(ks[14], (out_c,), jnp.float32),
    }
    x = jax.random.normal(ks[15], (B, in_c, n, n, n), jnp.float32)

    folded = fold_params(params, n=n)         # one-time weight preprocessing
    fwd = jax.jit(functools.partial(residual_block_3d_forward,
                                    n=n, in_c=in_c, out_c=out_c))
    out = jax.block_until_ready(fwd(x, folded))

    ref = reference(x, params)
    assert out.shape == (B, out_c, n, n, n), out.shape
    err = float(jnp.max(jnp.abs(out - ref)))
    # bf16 MXU operands (K up to ~1280) -> tolerance loosened vs the f32
    # version; observed error is typically ~1e-2 at these magnitudes.
    assert bool(jnp.allclose(out, ref, atol=2.5e-2, rtol=2.5e-2)), (
        "max abs err = %e" % err)
    print("KERNEL_OK")
</pallas_src>

<mosaic_0001>
module attributes {stable_mosaic.version = 11 : i64} {
  func.func @_resblock_kernel(%arg0: i32, %arg1: memref<1x8x8x128xf32, #tpu.memory_space<vmem>>, %arg2: memref<1152x128xbf16, #tpu.memory_space<vmem>>, %arg3: memref<1280x128xbf16, #tpu.memory_space<vmem>>, %arg4: memref<1x128xf32, #tpu.memory_space<vmem>>, %arg5: memref<1x128xf32, #tpu.memory_space<vmem>>, %arg6: memref<1x8x8x128xf32, #tpu.memory_space<vmem>>, %arg7: memref<10x10x128xf32, #tpu.memory_space<vmem>>, %arg8: memref<10x10x128xf32, #tpu.memory_space<vmem>>, %arg9: memref<64x1152xbf16, #tpu.memory_space<vmem>>, %arg10: memref<64x1280xbf16, #tpu.memory_space<vmem>>) attributes {dimension_semantics = [#tpu.dimension_semantics<parallel>], iteration_bounds = array<i64: 2>, scalar_prefetch = 0 : i64, scratch_operands = 4 : i64, tpu.core_type = #tpu.core_type<tc>, window_params = [{transform_indices = @transform_0, window_bounds = array<i64: 1, 8, 8, 128>}, {pipeline_mode = #tpu.pipeline_mode<synchronous>, transform_indices = @transform_1, window_bounds = array<i64: 1152, 128>}, {pipeline_mode = #tpu.pipeline_mode<synchronous>, transform_indices = @transform_2, window_bounds = array<i64: 1280, 128>}, {pipeline_mode = #tpu.pipeline_mode<synchronous>, transform_indices = @transform_3, window_bounds = array<i64: 1, 128>}, {pipeline_mode = #tpu.pipeline_mode<synchronous>, transform_indices = @transform_4, window_bounds = array<i64: 1, 128>}, {transform_indices = @transform_5, window_bounds = array<i64: 1, 8, 8, 128>}]} {
    %cst = arith.constant 0.000000e+00 : f32
    %0 = vector.broadcast %cst : f32 to vector<1x10x128xf32>
    %c0 = arith.constant 0 : index
    %c0_0 = arith.constant 0 : index
    %c0_1 = arith.constant 0 : index
    %1 = vector.load %arg7[%c0, %c0_0, %c0_1] : memref<10x10x128xf32, #tpu.memory_space<vmem>>, vector<1x10x128xf32>
    tpu.vector_store %arg7[%c0, %c0_0, %c0_1], %0 {strides = array<i32>} : memref<10x10x128xf32, #tpu.memory_space<vmem>>, vector<1x10x128xf32>,
    %cst_2 = arith.constant 0.000000e+00 : f32
    %2 = vector.broadcast %cst_2 : f32 to vector<1x10x128xf32>
    %c9 = arith.constant 9 : index
    %c0_3 = arith.constant 0 : index
    %c0_4 = arith.constant 0 : index
    %3 = vector.load %arg7[%c9, %c0_3, %c0_4] : memref<10x10x128xf32, #tpu.memory_space<vmem>>, vector<1x10x128xf32>
    tpu.vector_store %arg7[%c9, %c0_3, %c0_4], %2 {strides = array<i32>} : memref<10x10x128xf32, #tpu.memory_space<vmem>>, vector<1x10x128xf32>,
    %cst_5 = arith.constant 0.000000e+00 : f32
    %4 = vector.broadcast %cst_5 : f32 to vector<10x1x128xf32>
    %c0_6 = arith.constant 0 : index
    %c0_7 = arith.constant 0 : index
    %c0_8 = arith.constant 0 : index
    %5 = vector.load %arg7[%c0_6, %c0_7, %c0_8] : memref<10x10x128xf32, #tpu.memory_space<vmem>>, vector<10x1x128xf32>
    tpu.vector_store %arg7[%c0_6, %c0_7, %c0_8], %4 {strides = array<i32>} : memref<10x10x128xf32, #tpu.memory_space<vmem>>, vector<10x1x128xf32>,
    %cst_9 = arith.constant 0.000000e+00 : f32
    %6 = vector.broadcast %cst_9 : f32 to vector<10x1x128xf32>
    %c0_10 = arith.constant 0 : index
    %c9_11 = arith.constant 9 : index
    %c0_12 = arith.constant 0 : index
    %7 = vector.load %arg7[%c0_10, %c9_11, %c0_12] : memref<10x10x128xf32, #tpu.memory_space<vmem>>, vector<10x1x128xf32>
    tpu.vector_store %arg7[%c0_10, %c9_11, %c0_12], %6 {strides = array<i32>} : memref<10x10x128xf32, #tpu.memory_space<vmem>>, vector<10x1x128xf32>,
    %cst_13 = arith.constant 0.000000e+00 : f32
    %8 = vector.broadcast %cst_13 : f32 to vector<1x10x128xf32>
    %c0_14 = arith.constant 0 : index
    %c0_15 = arith.constant 0 : index
    %c0_16 = arith.constant 0 : index
    %9 = vector.load %arg8[%c0_14, %c0_15, %c0_16] : memref<10x10x128xf32, #tpu.memory_space<vmem>>, vector<1x10x128xf32>
    tpu.vector_store %arg8[%c0_14, %c0_15, %c0_16], %8 {strides = array<i32>} : memref<10x10x128xf32, #tpu.memory_space<vmem>>, vector<1x10x128xf32>,
    %cst_17 = arith.constant 0.000000e+00 : f32
    %10 = vector.broadcast %cst_17 : f32 to vector<1x10x128xf32>
    %c9_18 = arith.constant 9 : index
    %c0_19 = arith.constant 0 : index
    %c0_20 = arith.constant 0 : index
    %11 = vector.load %arg8[%c9_18, %c0_19, %c0_20] : memref<10x10x128xf32, #tpu.memory_space<vmem>>, vector<1x10x128xf32>
    tpu.vector_store %arg8[%c9_18, %c0_19, %c0_20], %10 {strides = array<i32>} : memref<10x10x128xf32, #tpu.memory_space<vmem>>, vector<1x10x128xf32>,
    %cst_21 = arith.constant 0.000000e+00 : f32
    %12 = vector.broadcast %cst_21 : f32 to vector<10x1x128xf32>
    %c0_22 = arith.constant 0 : index
    %c0_23 = arith.constant 0 : index
    %c0_24 = arith.constant 0 : index
    %13 = vector.load %arg8[%c0_22, %c0_23, %c0_24] : memref<10x10x128xf32, #tpu.memory_space<vmem>>, vector<10x1x128xf32>
    tpu.vector_store %arg8[%c0_22, %c0_23, %c0_24], %12 {strides = array<i32>} : memref<10x10x128xf32, #tpu.memory_space<vmem>>, vector<10x1x128xf32>,
    %cst_25 = arith.constant 0.000000e+00 : f32
    %14 = vector.broadcast %cst_25 : f32 to vector<10x1x128xf32>
    %c0_26 = arith.constant 0 : index
    %c9_27 = arith.constant 9 : index
    %c0_28 = arith.constant 0 : index
    %15 = vector.load %arg8[%c0_26, %c9_27, %c0_28] : memref<10x10x128xf32, #tpu.memory_space<vmem>>, vector<10x1x128xf32>
    tpu.vector_store %arg8[%c0_26, %c9_27, %c0_28], %14 {strides = array<i32>} : memref<10x10x128xf32, #tpu.memory_space<vmem>>, vector<10x1x128xf32>,
    %c0_29 = arith.constant 0 : index
    %c0_30 = arith.constant 0 : index
    %c0_31 = arith.constant 0 : index
    %c0_32 = arith.constant 0 : index
    %16 = vector.load %arg1[%c0_29, %c0_30, %c0_31, %c0_32] : memref<1x8x8x128xf32, #tpu.memory_space<vmem>>, vector<1x8x8x128xf32>
    %17 = vector.shape_cast %16 : vector<1x8x8x128xf32> to vector<8x8x128xf32>
    %c1 = arith.constant 1 : index
    %c1_33 = arith.constant 1 : index
    %c0_34 = arith.constant 0 : index
    %18 = vector.load %arg7[%c1, %c1_33, %c0_34] : memref<10x10x128xf32, #tpu.memory_space<vmem>>, vector<8x8x128xf32>
    tpu.vector_store %arg7[%c1, %c1_33, %c0_34], %17 {strides = array<i32>} : memref<10x10x128xf32, #tpu.memory_space<vmem>>, vector<8x8x128xf32>,
    %19 = vector.shape_cast %17 : vector<8x8x128xf32> to vector<64x128xf32>
    %20 = arith.truncf %19 : vector<64x128xf32> to vector<64x128xbf16>
    %c0_35 = arith.constant 0 : index
    %c1152 = arith.constant 1152 : index
    %21 = vector.load %arg10[%c0_35, %c1152] : memref<64x1280xbf16, #tpu.memory_space<vmem>>, vector<64x128xbf16>
    tpu.vector_store %arg10[%c0_35, %c1152], %20 {strides = array<i32>} : memref<64x1280xbf16, #tpu.memory_space<vmem>>, vector<64x128xbf16>,
    %c0_36 = arith.constant 0 : index
    %c0_37 = arith.constant 0 : index
    %c0_38 = arith.constant 0 : index
    %22 = vector.load %arg7[%c0_36, %c0_37, %c0_38] : memref<10x10x128xf32, #tpu.memory_space<vmem>>, vector<8x8x128xf32>
    %23 = vector.shape_cast %22 : vector<8x8x128xf32> to vector<64x128xf32>
    %24 = arith.truncf %23 : vector<64x128xf32> to vector<64x128xbf16>
    %c0_39 = arith.constant 0 : index
    %c0_40 = arith.constant 0 : index
    %25 = vector.load %arg9[%c0_39, %c0_40] : memref<64x1152xbf16, #tpu.memory_space<vmem>>, vector<64x128xbf16>
    tpu.vector_store %arg9[%c0_39, %c0_40], %24 {strides = array<i32>} : memref<64x1152xbf16, #tpu.memory_space<vmem>>, vector<64x128xbf16>,
    %c0_41 = arith.constant 0 : index
    %c1_42 = arith.constant 1 : index
    %c0_43 = arith.constant 0 : index
    %26 = vector.load %arg7[%c0_41, %c1_42, %c0_43] : memref<10x10x128xf32, #tpu.memory_space<vmem>>, vector<8x8x128xf32>
    %27 = vector.shape_cast %26 : vector<8x8x128xf32> to vector<64x128xf32>
    %28 = arith.truncf %27 : vector<64x128xf32> to vector<64x128xbf16>
    %c0_44 = arith.constant 0 : index
    %c128 = arith.constant 128 : index
    %29 = vector.load %arg9[%c0_44, %c128] : memref<64x1152xbf16, #tpu.memory_space<vmem>>, vector<64x128xbf16>
    tpu.vector_store %arg9[%c0_44, %c128], %28 {strides = array<i32>} : memref<64x1152xbf16, #tpu.memory_space<vmem>>, vector<64x128xbf16>,
    %c0_45 = arith.constant 0 : index
    %c2 = arith.constant 2 : index
    %c0_46 = arith.constant 0 : index
    %30 = vector.load %arg7[%c0_45, %c2, %c0_46] : memref<10x10x128xf32, #tpu.memory_space<vmem>>, vector<8x8x128xf32>
    %31 = vector.shape_cast %30 : vector<8x8x128xf32> to vector<64x128xf32>
    %32 = arith.truncf %31 : vector<64x128xf32> to vector<64x128xbf16>
    %c0_47 = arith.constant 0 : index
    %c256 = arith.constant 256 : index
    %33 = vector.load %arg9[%c0_47, %c256] : memref<64x1152xbf16, #tpu.memory_space<vmem>>, vector<64x128xbf16>
    tpu.vector_store %arg9[%c0_47, %c256], %32 {strides = array<i32>} : memref<64x1152xbf16, #tpu.memory_space<vmem>>, vector<64x128xbf16>,
    %c1_48 = arith.constant 1 : index
    %c0_49 = arith.constant 0 : index
    %c0_50 = arith.constant 0 : index
    %34 = vector.load %arg7[%c1_48, %c0_49, %c0_50] : memref<10x10x128xf32, #tpu.memory_space<vmem>>, vector<8x8x128xf32>
    %35 = vector.shape_cast %34 : vector<8x8x128xf32> to vector<64x128xf32>
    %36 = arith.truncf %35 : vector<64x128xf32> to vector<64x128xbf16>
    %c0_51 = arith.constant 0 : index
    %c384 = arith.constant 384 : index
    %37 = vector.load %arg9[%c0_51, %c384] : memref<64x1152xbf16, #tpu.memory_space<vmem>>, vector<64x128xbf16>
    tpu.vector_store %arg9[%c0_51, %c384], %36 {strides = array<i32>} : memref<64x1152xbf16, #tpu.memory_space<vmem>>, vector<64x128xbf16>,
    %c1_52 = arith.constant 1 : index
    %c1_53 = arith.constant 1 : index
    %c0_54 = arith.constant 0 : index
    %38 = vector.load %arg7[%c1_52, %c1_53, %c0_54] : memref<10x10x128xf32, #tpu.memory_space<vmem>>, vector<8x8x128xf32>
    %39 = vector.shape_cast %38 : vector<8x8x128xf32> to vector<64x128xf32>
    %40 = arith.truncf %39 : vector<64x128xf32> to vector<64x128xbf16>
    %c0_55 = arith.constant 0 : index
    %c512 = arith.constant 512 : index
    %41 = vector.load %arg9[%c0_55, %c512] : memref<64x1152xbf16, #tpu.memory_space<vmem>>, vector<64x128xbf16>
    tpu.vector_store %arg9[%c0_55, %c512], %40 {strides = array<i32>} : memref<64x1152xbf16, #tpu.memory_space<vmem>>, vector<64x128xbf16>,
    %c1_56 = arith.constant 1 : index
    %c2_57 = arith.constant 2 : index
    %c0_58 = arith.constant 0 : index
    %42 = vector.load %arg7[%c1_56, %c2_57, %c0_58] : memref<10x10x128xf32, #tpu.memory_space<vmem>>, vector<8x8x128xf32>
    %43 = vector.shape_cast %42 : vector<8x8x128xf32> to vector<64x128xf32>
    %44 = arith.truncf %43 : vector<64x128xf32> to vector<64x128xbf16>
    %c0_59 = arith.constant 0 : index
    %c640 = arith.constant 640 : index
    %45 = vector.load %arg9[%c0_59, %c640] : memref<64x1152xbf16, #tpu.memory_space<vmem>>, vector<64x128xbf16>
    tpu.vector_store %arg9[%c0_59, %c640], %44 {strides = array<i32>} : memref<64x1152xbf16, #tpu.memory_space<vmem>>, vector<64x128xbf16>,
    %c2_60 = arith.constant 2 : index
    %c0_61 = arith.constant 0 : index
    %c0_62 = arith.constant 0 : index
    %46 = vector.load %arg7[%c2_60, %c0_61, %c0_62] : memref<10x10x128xf32, #tpu.memory_space<vmem>>, vector<8x8x128xf32>
    %47 = vector.shape_cast %46 : vector<8x8x128xf32> to vector<64x128xf32>
    %48 = arith.truncf %47 : vector<64x128xf32> to vector<64x128xbf16>
    %c0_63 = arith.constant 0 : index
    %c768 = arith.constant 768 : index
    %49 = vector.load %arg9[%c0_63, %c768] : memref<64x1152xbf16, #tpu.memory_space<vmem>>, vector<64x128xbf16>
    tpu.vector_store %arg9[%c0_63, %c768], %48 {strides = array<i32>} : memref<64x1152xbf16, #tpu.memory_space<vmem>>, vector<64x128xbf16>,
    %c2_64 = arith.constant 2 : index
    %c1_65 = arith.constant 1 : index
    %c0_66 = arith.constant 0 : index
    %50 = vector.load %arg7[%c2_64, %c1_65, %c0_66] : memref<10x10x128xf32, #tpu.memory_space<vmem>>, vector<8x8x128xf32>
    %51 = vector.shape_cast %50 : vector<8x8x128xf32> to vector<64x128xf32>
    %52 = arith.truncf %51 : vector<64x128xf32> to vector<64x128xbf16>
    %c0_67 = arith.constant 0 : index
    %c896 = arith.constant 896 : index
    %53 = vector.load %arg9[%c0_67, %c896] : memref<64x1152xbf16, #tpu.memory_space<vmem>>, vector<64x128xbf16>
    tpu.vector_store %arg9[%c0_67, %c896], %52 {strides = array<i32>} : memref<64x1152xbf16, #tpu.memory_space<vmem>>, vector<64x128xbf16>,
    %c2_68 = arith.constant 2 : index
    %c2_69 = arith.constant 2 : index
    %c0_70 = arith.constant 0 : index
    %54 = vector.load %arg7[%c2_68, %c2_69, %c0_70] : memref<10x10x128xf32, #tpu.memory_space<vmem>>, vector<8x8x128xf32>
    %55 = vector.shape_cast %54 : vector<8x8x128xf32> to vector<64x128xf32>
    %56 = arith.truncf %55 : vector<64x128xf32> to vector<64x128xbf16>
    %c0_71 = arith.constant 0 : index
    %c1024 = arith.constant 1024 : index
    %57 = vector.load %arg9[%c0_71, %c1024] : memref<64x1152xbf16, #tpu.memory_space<vmem>>, vector<64x128xbf16>
    tpu.vector_store %arg9[%c0_71, %c1024], %56 {strides = array<i32>} : memref<64x1152xbf16, #tpu.memory_space<vmem>>, vector<64x128xbf16>,
    %c0_72 = arith.constant 0 : index
    %c0_73 = arith.constant 0 : index
    %58 = vector.load %arg9[%c0_72, %c0_73] : memref<64x1152xbf16, #tpu.memory_space<vmem>>, vector<64x1152xbf16>
    %c0_74 = arith.constant 0 : index
    %c0_75 = arith.constant 0 : index
    %59 = vector.load %arg2[%c0_74, %c0_75] : memref<1152x128xbf16, #tpu.memory_space<vmem>>, vector<1152x128xbf16>
    %cst_76 = arith.constant dense<0.000000e+00> : vector<64x128xf32>
    %60 = tpu.matmul %58, %59, %cst_76 {dimension_numbers = #tpu.dot_dimension_numbers<[1], [0], [0], [1], [0, 0, 1, 1], [], []>} : vector<64x1152xbf16>, vector<1152x128xbf16>, vector<64x128xf32> -> vector<64x128xf32>
    %c0_77 = arith.constant 0 : index
    %c0_78 = arith.constant 0 : index
    %61 = vector.load %arg4[%c0_77, %c0_78] : memref<1x128xf32, #tpu.memory_space<vmem>>, vector<1x128xf32>
    %62 = vector.broadcast %61 : vector<1x128xf32> to vector<64x128xf32>
    %63 = arith.addf %60, %62 : vector<64x128xf32>
    %cst_79 = arith.constant 0.000000e+00 : f32
    %64 = vector.broadcast %cst_79 : f32 to vector<64x128xf32>
    %65 = arith.cmpf oge, %63, %64 : vector<64x128xf32>
    %cst_80 = arith.constant 1.000000e-01 : f32
    %66 = vector.broadcast %cst_80 : f32 to vector<64x128xf32>
    %67 = arith.mulf %66, %63 : vector<64x128xf32>
    %68 = arith.select %65, %63, %67 : vector<64x128xi1>, vector<64x128xf32>
    %69 = vector.shape_cast %68 : vector<64x128xf32> to vector<8x8x128xf32>
    %c1_81 = arith.constant 1 : index
    %c1_82 = arith.constant 1 : index
    %c0_83 = arith.constant 0 : index
    %70 = vector.load %arg8[%c1_81, %c1_82, %c0_83] : memref<10x10x128xf32, #tpu.memory_space<vmem>>, vector<8x8x128xf32>
    tpu.vector_store %arg8[%c1_81, %c1_82, %c0_83], %69 {strides = array<i32>} : memref<10x10x128xf32, #tpu.memory_space<vmem>>, vector<8x8x128xf32>,
    %c0_84 = arith.constant 0 : index
    %c0_85 = arith.constant 0 : index
    %c0_86 = arith.constant 0 : index
    %71 = vector.load %arg8[%c0_84, %c0_85, %c0_86] : memref<10x10x128xf32, #tpu.memory_space<vmem>>, vector<8x8x128xf32>
    %72 = vector.shape_cast %71 : vector<8x8x128xf32> to vector<64x128xf32>
    %73 = arith.truncf %72 : vector<64x128xf32> to vector<64x128xbf16>
    %c0_87 = arith.constant 0 : index
    %c0_88 = arith.constant 0 : index
    %74 = vector.load %arg10[%c0_87, %c0_88] : memref<64x1280xbf16, #tpu.memory_space<vmem>>, vector<64x128xbf16>
    tpu.vector_store %arg10[%c0_87, %c0_88], %73 {strides = array<i32>} : memref<64x1280xbf16, #tpu.memory_space<vmem>>, vector<64x128xbf16>,
    %c0_89 = arith.constant 0 : index
    %c1_90 = arith.constant 1 : index
    %c0_91 = arith.constant 0 : index
    %75 = vector.load %arg8[%c0_89, %c1_90, %c0_91] : memref<10x10x128xf32, #tpu.memory_space<vmem>>, vector<8x8x128xf32>
    %76 = vector.shape_cast %75 : vector<8x8x128xf32> to vector<64x128xf32>
    %77 = arith.truncf %76 : vector<64x128xf32> to vector<64x128xbf16>
    %c0_92 = arith.constant 0 : index
    %c128_93 = arith.constant 128 : index
    %78 = vector.load %arg10[%c0_92, %c128_93] : memref<64x1280xbf16, #tpu.memory_space<vmem>>, vector<64x128xbf16>
    tpu.vector_store %arg10[%c0_92, %c128_93], %77 {strides = array<i32>} : memref<64x1280xbf16, #tpu.memory_space<vmem>>, vector<64x128xbf16>,
    %c0_94 = arith.constant 0 : index
    %c2_95 = arith.constant 2 : index
    %c0_96 = arith.constant 0 : index
    %79 = vector.load %arg8[%c0_94, %c2_95, %c0_96] : memref<10x10x128xf32, #tpu.memory_space<vmem>>, vector<8x8x128xf32>
    %80 = vector.shape_cast %79 : vector<8x8x128xf32> to vector<64x128xf32>
    %81 = arith.truncf %80 : vector<64x128xf32> to vector<64x128xbf16>
    %c0_97 = arith.constant 0 : index
    %c256_98 = arith.constant 256 : index
    %82 = vector.load %arg10[%c0_97, %c256_98] : memref<64x1280xbf16, #tpu.memory_space<vmem>>, vector<64x128xbf16>
    tpu.vector_store %arg10[%c0_97, %c256_98], %81 {strides = array<i32>} : memref<64x1280xbf16, #tpu.memory_space<vmem>>, vector<64x128xbf16>,
    %c1_99 = arith.constant 1 : index
    %c0_100 = arith.constant 0 : index
    %c0_101 = arith.constant 0 : index
    %83 = vector.load %arg8[%c1_99, %c0_100, %c0_101] : memref<10x10x128xf32, #tpu.memory_space<vmem>>, vector<8x8x128xf32>
    %84 = vector.shape_cast %83 : vector<8x8x128xf32> to vector<64x128xf32>
    %85 = arith.truncf %84 : vector<64x128xf32> to vector<64x128xbf16>
    %c0_102 = arith.constant 0 : index
    %c384_103 = arith.constant 384 : index
    %86 = vector.load %arg10[%c0_102, %c384_103] : memref<64x1280xbf16, #tpu.memory_space<vmem>>, vector<64x128xbf16>
    tpu.vector_store %arg10[%c0_102, %c384_103], %85 {strides = array<i32>} : memref<64x1280xbf16, #tpu.memory_space<vmem>>, vector<64x128xbf16>,
    %c1_104 = arith.constant 1 : index
    %c1_105 = arith.constant 1 : index
    %c0_106 = arith.constant 0 : index
    %87 = vector.load %arg8[%c1_104, %c1_105, %c0_106] : memref<10x10x128xf32, #tpu.memory_space<vmem>>, vector<8x8x128xf32>
    %88 = vector.shape_cast %87 : vector<8x8x128xf32> to vector<64x128xf32>
    %89 = arith.truncf %88 : vector<64x128xf32> to vector<64x128xbf16>
    %c0_107 = arith.constant 0 : index
    %c512_108 = arith.constant 512 : index
    %90 = vector.load %arg10[%c0_107, %c512_108] : memref<64x1280xbf16, #tpu.memory_space<vmem>>, vector<64x128xbf16>
    tpu.vector_store %arg10[%c0_107, %c512_108], %89 {strides = array<i32>} : memref<64x1280xbf16, #tpu.memory_space<vmem>>, vector<64x128xbf16>,
    %c1_109 = arith.constant 1 : index
    %c2_110 = arith.constant 2 : index
    %c0_111 = arith.constant 0 : index
    %91 = vector.load %arg8[%c1_109, %c2_110, %c0_111] : memref<10x10x128xf32, #tpu.memory_space<vmem>>, vector<8x8x128xf32>
    %92 = vector.shape_cast %91 : vector<8x8x128xf32> to vector<64x128xf32>
    %93 = arith.truncf %92 : vector<64x128xf32> to vector<64x128xbf16>
    %c0_112 = arith.constant 0 : index
    %c640_113 = arith.constant 640 : index
    %94 = vector.load %arg10[%c0_112, %c640_113] : memref<64x1280xbf16, #tpu.memory_space<vmem>>, vector<64x128xbf16>
    tpu.vector_store %arg10[%c0_112, %c640_113], %93 {strides = array<i32>} : memref<64x1280xbf16, #tpu.memory_space<vmem>>, vector<64x128xbf16>,
    %c2_114 = arith.constant 2 : index
    %c0_115 = arith.constant 0 : index
    %c0_116 = arith.constant 0 : index
    %95 = vector.load %arg8[%c2_114, %c0_115, %c0_116] : memref<10x10x128xf32, #tpu.memory_space<vmem>>, vector<8x8x128xf32>
    %96 = vector.shape_cast %95 : vector<8x8x128xf32> to vector<64x128xf32>
    %97 = arith.truncf %96 : vector<64x128xf32> to vector<64x128xbf16>
    %c0_117 = arith.constant 0 : index
    %c768_118 = arith.constant 768 : index
    %98 = vector.load %arg10[%c0_117, %c768_118] : memref<64x1280xbf16, #tpu.memory_space<vmem>>, vector<64x128xbf16>
    tpu.vector_store %arg10[%c0_117, %c768_118], %97 {strides = array<i32>} : memref<64x1280xbf16, #tpu.memory_space<vmem>>, vector<64x128xbf16>,
    %c2_119 = arith.constant 2 : index
    %c1_120 = arith.constant 1 : index
    %c0_121 = arith.constant 0 : index
    %99 = vector.load %arg8[%c2_119, %c1_120, %c0_121] : memref<10x10x128xf32, #tpu.memory_space<vmem>>, vector<8x8x128xf32>
    %100 = vector.shape_cast %99 : vector<8x8x128xf32> to vector<64x128xf32>
    %101 = arith.truncf %100 : vector<64x128xf32> to vector<64x128xbf16>
    %c0_122 = arith.constant 0 : index
    %c896_123 = arith.constant 896 : index
    %102 = vector.load %arg10[%c0_122, %c896_123] : memref<64x1280xbf16, #tpu.memory_space<vmem>>, vector<64x128xbf16>
    tpu.vector_store %arg10[%c0_122, %c896_123], %101 {strides = array<i32>} : memref<64x1280xbf16, #tpu.memory_space<vmem>>, vector<64x128xbf16>,
    %c2_124 = arith.constant 2 : index
    %c2_125 = arith.constant 2 : index
    %c0_126 = arith.constant 0 : index
    %103 = vector.load %arg8[%c2_124, %c2_125, %c0_126] : memref<10x10x128xf32, #tpu.memory_space<vmem>>, vector<8x8x128xf32>
    %104 = vector.shape_cast %103 : vector<8x8x128xf32> to vector<64x128xf32>
    %105 = arith.truncf %104 : vector<64x128xf32> to vector<64x128xbf16>
    %c0_127 = arith.constant 0 : index
    %c1024_128 = arith.constant 1024 : index
    %106 = vector.load %arg10[%c0_127, %c1024_128] : memref<64x1280xbf16, #tpu.memory_space<vmem>>, vector<64x128xbf16>
    tpu.vector_store %arg10[%c0_127, %c1024_128], %105 {strides = array<i32>} : memref<64x1280xbf16, #tpu.memory_space<vmem>>, vector<64x128xbf16>,
    %c0_129 = arith.constant 0 : index
    %c0_130 = arith.constant 0 : index
    %107 = vector.load %arg10[%c0_129, %c0_130] : memref<64x1280xbf16, #tpu.memory_space<vmem>>, vector<64x1280xbf16>
    %c0_131 = arith.constant 0 : index
    %c0_132 = arith.constant 0 : index
    %108 = vector.load %arg3[%c0_131, %c0_132] : memref<1280x128xbf16, #tpu.memory_space<vmem>>, vector<1280x128xbf16>
    %cst_133 = arith.constant dense<0.000000e+00> : vector<64x128xf32>
    %109 = tpu.matmul %107, %108, %cst_133 {dimension_numbers = #tpu.dot_dimension_numbers<[1], [0], [0], [1], [0, 0, 1, 1], [], []>} : vector<64x1280xbf16>, vector<1280x128xbf16>, vector<64x128xf32> -> vector<64x128xf32>
    %c0_134 = arith.constant 0 : index
    %c0_135 = arith.constant 0 : index
    %110 = vector.load %arg5[%c0_134, %c0_135] : memref<1x128xf32, #tpu.memory_space<vmem>>, vector<1x128xf32>
    %111 = vector.broadcast %110 : vector<1x128xf32> to vector<64x128xf32>
    %112 = arith.addf %109, %111 : vector<64x128xf32>
    %cst_136 = arith.constant 0.000000e+00 : f32
    %113 = vector.broadcast %cst_136 : f32 to vector<64x128xf32>
    %114 = arith.cmpf oge, %112, %113 : vector<64x128xf32>
    %cst_137 = arith.constant 1.000000e-01 : f32
    %115 = vector.broadcast %cst_137 : f32 to vector<64x128xf32>
    %116 = arith.mulf %115, %112 : vector<64x128xf32>
    %117 = arith.select %114, %112, %116 : vector<64x128xi1>, vector<64x128xf32>
    %118 = vector.shape_cast %117 : vector<64x128xf32> to vector<1x8x8x128xf32>
    %c0_138 = arith.constant 0 : index
    %c0_139 = arith.constant 0 : index
    %c0_140 = arith.constant 0 : index
    %c0_141 = arith.constant 0 : index
    %119 = vector.load %arg6[%c0_138, %c0_139, %c0_140, %c0_141] : memref<1x8x8x128xf32, #tpu.memory_space<vmem>>, vector<1x8x8x128xf32>
    tpu.vector_store %arg6[%c0_138, %c0_139, %c0_140, %c0_141], %118 {strides = array<i32>} : memref<1x8x8x128xf32, #tpu.memory_space<vmem>>, vector<1x8x8x128xf32>,
    return
  }
  func.func @transform_0(%arg0: i32) -> (i32, i32, i32, i32) {
    %c0_i32 = arith.constant 0 : i32
    %c0_i32_0 = arith.constant 0 : i32
    %c0_i32_1 = arith.constant 0 : i32
    %c0_i32_2 = arith.constant 0 : i32
    return %arg0, %c0_i32, %c0_i32_0, %c0_i32_1 : i32, i32, i32, i32
  }
  func.func @transform_1(%arg0: i32) -> (i32, i32) {
    %c0_i32 = arith.constant 0 : i32
    %c0_i32_0 = arith.constant 0 : i32
    %c0_i32_1 = arith.constant 0 : i32
    return %c0_i32, %c0_i32_0 : i32, i32
  }
  func.func @transform_2(%arg0: i32) -> (i32, i32) {
    %c0_i32 = arith.constant 0 : i32
    %c0_i32_0 = arith.constant 0 : i32
    %c0_i32_1 = arith.constant 0 : i32
    return %c0_i32, %c0_i32_0 : i32, i32
  }
  func.func @transform_3(%arg0: i32) -> (i32, i32) {
    %c0_i32 = arith.constant 0 : i32
    %c0_i32_0 = arith.constant 0 : i32
    %c0_i32_1 = arith.constant 0 : i32
    return %c0_i32, %c0_i32_0 : i32, i32
  }
  func.func @transform_4(%arg0: i32) -> (i32, i32) {
    %c0_i32 = arith.constant 0 : i32
    %c0_i32_0 = arith.constant 0 : i32
    %c0_i32_1 = arith.constant 0 : i32
    return %c0_i32, %c0_i32_0 : i32, i32
  }
  func.func @transform_5(%arg0: i32) -> (i32, i32, i32, i32) {
    %c0_i32 = arith.constant 0 : i32
    %c0_i32_0 = arith.constant 0 : i32
    %c0_i32_1 = arith.constant 0 : i32
    %c0_i32_2 = arith.constant 0 : i32
    return %arg0, %c0_i32, %c0_i32_0, %c0_i32_1 : i32, i32, i32, i32
  }
}

</mosaic_0001>

<llo_original>
// kernel: residual_block_3d_forward.1
$region0: #{residual_block_3d_forward.1}
  #allocation0 [shape = 'u32[]', space=smem, size = 0x4, offset = 0x4, fixed_abs, tag = 'smem constant byte address 0x4 - core index']
  #allocation1 [shape = 'u32[72,128]{1,0:T(1,128)}', space=vmem, size = 0x9000, scoped, tag = 'internal scratch']
  #allocation2 [shape = 'f32[10,10,128]{2,1,0:T(8,128)}', space=vmem, size = 0x14000, scoped, tag = 'scratch operand']
  #allocation3 [shape = 'f32[10,10,128]{2,1,0:T(8,128)}', space=vmem, size = 0x14000, scoped, tag = 'scratch operand']
  #allocation4 [shape = 'bf16[64,1152]{1,0:T(8,128)(2,1)}', space=vmem, size = 0x24000, scoped, tag = 'scratch operand']
  #allocation5 [shape = 'bf16[64,1280]{1,0:T(8,128)(2,1)}', space=vmem, size = 0x28000, scoped, tag = 'scratch operand']
  %s0 = inlined_call_operand.vmem [shape: f32[2,8,8,128], index: 0, kind: input, shape index: {}]
  %s1 = inlined_call_operand.hbm [shape: bf16[1152,128], index: 1, kind: input, shape index: {}]
  %s2 = inlined_call_operand.vmem [shape: bf16[1280,128], index: 2, kind: input, shape index: {}]
  %s3 = inlined_call_operand.vmem [shape: f32[1,128], index: 3, kind: input, shape index: {}]
  %s4 = inlined_call_operand.vmem [shape: f32[1,128], index: 4, kind: input, shape index: {}]
  %s5 = inlined_call_operand.vmem [shape: f32[2,8,8,128], index: 5, kind: output, shape index: {}]
  %s6 = sld [smem:[#allocation0]]
  $region57: #{residual_block_3d_forward.1} parent=0
    _
  %s8 = ssub.s32 1, %s6
  %s9 = scalar_select 0, %s8, %s6
  $region1: #{residual_block_3d_forward.1} parent=0
    #allocation6 [shape = 'u8[294912]{0}', space=vmem, size = 0x48000, scoped, tag = 'input window, operand 1, single buffered']
    #allocation7 [shape = 's32[2]{0}', space=sflag, size = 0x8, scoped, tag = 'scoped memory for residual_block_3d_forward.1']
    %10 = vsyncpa [#allocation7], 0
    loop: start=0, step=1, limit=4
    $region2: #{residual_block_3d_forward.1} parent=1 // loop_pre_header
      _
    $region3: #{residual_block_3d_forward.1} parent=1 // loop_header
      %s12 = sphi 0, %s16
      %p13 = scmp.ge.s32.totalorder %s12, 4
      %s22 = sphi 0, %s24
      %s25 = sphi 0, %s22
      %s26 = sphi 0, %s25
      %s42 = sphi 0, %s26
      %s46 = sphi 0, %s46
      %s48 = sphi 0, %s46
      %s49 = sphi 0, %s48
      %s63 = sphi 0, %s49
      %s67 = sphi 0, %s67
      %s69 = sphi 0, %s67
      %s70 = sphi 0, %s69
      %s84 = sphi 0, %s70
      %s88 = sphi 0, %s88
      %s90 = sphi 0, %s88
      %s91 = sphi 0, %s90
      %s105 = sphi 0, %s91
      %s109 = sphi 0, %s109
      %s111 = sphi 0, %s109
      %s112 = sphi 0, %s111
      %s126 = sphi 0, %s112
      %s132 = sphi 0, %s134
      %s135 = sphi 0, %s132
      %s136 = sphi 0, %s135
      %s152 = sphi 0, %s136
    $region4: #{residual_block_3d_forward.1} parent=1 // loop_header_branch
      %15 = sbr.rel (%p13) target = $region8
    $region5: #{residual_block_3d_forward.1} parent=1 // loop_body
      %s17 = ssub.s32 %s12, 1
      %s18 = ssub.s32 %s12, 2
      %s19 = sadd.s32 %s12, 1
      %s20 = ssub.s32 %s12, %s19
      %p21 = scmp.eq.s32.totalorder %s20, 0
      %s23 = sadd.s32 %s22, 1
      %s24 = scalar_select %p21, %s22, %s23
      %p27 = pneg %p21
      %p28 = scmp.eq.s32.totalorder %s12, 1
      %p29 = por %p27, %p28
      %p30 = scmp.ne.s32.totalorder %s22, %s25
      %p31 = scmp.eq.s32.totalorder %s12, 0
      %p32 = por %p30, %p31
      %p33 = scmp.ne.s32.totalorder %s22, %s25
      %p34 = scmp.eq.s32.totalorder %s17, 1
      %p35 = por %p33, %p34
      %p36 = scmp.ne.s32.totalorder %s25, %s26
      %p37 = scmp.eq.s32.totalorder %s17, 0
      %p38 = por %p36, %p37
      %p39 = scmp.ne.s32.totalorder %s25, %s26
      %p40 = scmp.eq.s32.totalorder %s18, 1
      %p41 = por %p39, %p40
      %p43 = scmp.ne.s32.totalorder %s26, %s42
      %p44 = scmp.eq.s32.totalorder %s18, 0
      %p45 = por %p43, %p44
      %s47 = sadd.s32 %s46, 1
      %p50 = scmp.eq.s32.totalorder %s12, 1
      %p51 = scmp.ne.s32.totalorder %s46, %s48
      %p52 = scmp.eq.s32.totalorder %s12, 0
      %p53 = por %p51, %p52
      %p54 = scmp.ne.s32.totalorder %s46, %s48
      %p55 = scmp.eq.s32.totalorder %s17, 1
      %p56 = por %p54, %p55
      %p57 = scmp.ne.s32.totalorder %s48, %s49
      %p58 = scmp.eq.s32.totalorder %s17, 0
      %p59 = por %p57, %p58
      %p60 = scmp.ne.s32.totalorder %s48, %s49
      %p61 = scmp.eq.s32.totalorder %s18, 1
      %p62 = por %p60, %p61
      %p64 = scmp.ne.s32.totalorder %s49, %s63
      %p65 = scmp.eq.s32.totalorder %s18, 0
      %p66 = por %p64, %p65
      %s68 = sadd.s32 %s67, 1
      %p71 = scmp.eq.s32.totalorder %s12, 1
      %p72 = scmp.ne.s32.totalorder %s67, %s69
      %p73 = scmp.eq.s32.totalorder %s12, 0
      %p74 = por %p72, %p73
      %p75 = scmp.ne.s32.totalorder %s67, %s69
      %p76 = scmp.eq.s32.totalorder %s17, 1
      %p77 = por %p75, %p76
      %p78 = scmp.ne.s32.totalorder %s69, %s70
      %p79 = scmp.eq.s32.totalorder %s17, 0
      %p80 = por %p78, %p79
      %p81 = scmp.ne.s32.totalorder %s69, %s70
      %p82 = scmp.eq.s32.totalorder %s18, 1
      %p83 = por %p81, %p82
      %p85 = scmp.ne.s32.totalorder %s70, %s84
      %p86 = scmp.eq.s32.totalorder %s18, 0
      %p87 = por %p85, %p86
      %s89 = sadd.s32 %s88, 1
      %p92 = scmp.eq.s32.totalorder %s12, 1
      %p93 = scmp.ne.s32.totalorder %s88, %s90
      %p94 = scmp.eq.s32.totalorder %s12, 0
      %p95 = por %p93, %p94
      %p96 = scmp.ne.s32.totalorder %s88, %s90
      %p97 = scmp.eq.s32.totalorder %s17, 1
      %p98 = por %p96, %p97
      %p99 = scmp.ne.s32.totalorder %s90, %s91
      %p100 = scmp.eq.s32.totalorder %s17, 0
      %p101 = por %p99, %p100
      %p102 = scmp.ne.s32.totalorder %s90, %s91
      %p103 = scmp.eq.s32.totalorder %s18, 1
      %p104 = por %p102, %p103
      %p106 = scmp.ne.s32.totalorder %s91, %s105
      %p107 = scmp.eq.s32.totalorder %s18, 0
      %p108 = por %p106, %p107
      %s110 = sadd.s32 %s109, 1
      %p113 = scmp.eq.s32.totalorder %s12, 1
      %p114 = scmp.ne.s32.totalorder %s109, %s111
      %p115 = scmp.eq.s32.totalorder %s12, 0
      %p116 = por %p114, %p115
      %p117 = scmp.ne.s32.totalorder %s109, %s111
      %p118 = scmp.eq.s32.totalorder %s17, 1
      %p119 = por %p117, %p118
      %p120 = scmp.ne.s32.totalorder %s111, %s112
      %p121 = scmp.eq.s32.totalorder %s17, 0
      %p122 = por %p120, %p121
      %p123 = scmp.ne.s32.totalorder %s111, %s112
      %p124 = scmp.eq.s32.totalorder %s18, 1
      %p125 = por %p123, %p124
      %p127 = scmp.ne.s32.totalorder %s112, %s126
      %p128 = scmp.eq.s32.totalorder %s18, 0
      %p129 = por %p127, %p128
      %s130 = ssub.s32 %s12, %s19
      %p131 = scmp.eq.s32.totalorder %s130, 0
      %s133 = sadd.s32 %s132, 1
      %s134 = scalar_select %p131, %s132, %s133
      %p137 = pneg %p131
      %p138 = scmp.eq.s32.totalorder %s12, 1
      %p139 = por %p137, %p138
      %p140 = scmp.ne.s32.totalorder %s132, %s135
      %p141 = scmp.eq.s32.totalorder %s12, 0
      %p142 = por %p140, %p141
      %p143 = scmp.ne.s32.totalorder %s132, %s135
      %p144 = scmp.eq.s32.totalorder %s17, 1
      %p145 = por %p143, %p144
      %p146 = scmp.ne.s32.totalorder %s135, %s136
      %p147 = scmp.eq.s32.totalorder %s17, 0
      %p148 = por %p146, %p147
      %p149 = scmp.ne.s32.totalorder %s135, %s136
      %p150 = scmp.eq.s32.totalorder %s18, 1
      %p151 = por %p149, %p150
      %p153 = scmp.ne.s32.totalorder %s136, %s152
      %p154 = scmp.eq.s32.totalorder %s18, 0
      %p155 = por %p153, %p154
      %p156 = scmp.le.s32.totalorder 1, %s12
      %p157 = scmp.lt.s32.totalorder %s12, 3
      %p158 = pnand %p156, %p157
      %p159 = pneg %p158
      // Predicated region
      $region9: #{residual_block_3d_forward.1} parent=5 // pred_check
        _
      $region10: #{residual_block_3d_forward.1} parent=5 // pred_check_branch
        %161 = sbr.rel (%p158) target = $region12
      $region11: #{residual_block_3d_forward.1} parent=5 // pred_region
        %s162 = ssub.s32 %s12, 1
        // Predicated region
        $region13: #{residual_block_3d_forward.1} parent=11 // pred_check
          %p163 = pneg %p59
        $region14: #{residual_block_3d_forward.1} parent=11 // pred_check_branch
          %165 = sbr.rel (%p163) target = $region16
        $region15: #{residual_block_3d_forward.1} parent=11 // pred_region
          %167 = vsyncadd [#allocation7], 0
          %s168 = sshll.u32 %s1, 4
          %s169 = int_to_ptr.hbm [resolvable:$true] %s168
          %s170 = sshll.u32 [#allocation6], 4
          %s171 = int_to_ptr.vmem [resolvable:$true] %s170
          %176 = dma.hbm_to_vmem [thread:$0]  %s169, 9216, %s171, [#allocation7], 64, 64, 4
        $region16: #{residual_block_3d_forward.1} parent=11 // pred_fallthru
          _
        // Predicated region
        $region17: #{residual_block_3d_forward.1} parent=11 // pred_check
          %p177 = pneg %p80
        $region18: #{residual_block_3d_forward.1} parent=11 // pred_check_branch
          %179 = sbr.rel (%p177) target = $region20
        $region19: #{residual_block_3d_forward.1} parent=11 // pred_region
          _
        $region20: #{residual_block_3d_forward.1} parent=11 // pred_fallthru
          _
        // Predicated region
        $region21: #{residual_block_3d_forward.1} parent=11 // pred_check
          %p180 = pneg %p101
        $region22: #{residual_block_3d_forward.1} parent=11 // pred_check_branch
          %182 = sbr.rel (%p180) target = $region24
        $region23: #{residual_block_3d_forward.1} parent=11 // pred_region
          _
        $region24: #{residual_block_3d_forward.1} parent=11 // pred_fallthru
          _
        // Predicated region
        $region25: #{residual_block_3d_forward.1} parent=11 // pred_check
          %p183 = pneg %p122
        $region26: #{residual_block_3d_forward.1} parent=11 // pred_check_branch
          %185 = sbr.rel (%p183) target = $region28
        $region27: #{residual_block_3d_forward.1} parent=11 // pred_region
          _
        $region28: #{residual_block_3d_forward.1} parent=11 // pred_fallthru
          _
      $region12: #{residual_block_3d_forward.1} parent=5 // pred_fallthru
        _
      %p186 = scmp.lt.s32.totalorder %s12, 2
      // Predicated region
      $region29: #{residual_block_3d_forward.1} parent=5 // pred_check
        %p187 = pneg %p186
      $region30: #{residual_block_3d_forward.1} parent=5 // pred_check_branch
        %189 = sbr.rel (%p187) target = $region32
      $region31: #{residual_block_3d_forward.1} parent=5 // pred_region
        // Predicated region
        $region33: #{residual_block_3d_forward.1} parent=31 // pred_check
          %p190 = pneg %p32
        $region34: #{residual_block_3d_forward.1} parent=31 // pred_check_branch
          %192 = sbr.rel (%p190) target = $region36
        $region35: #{residual_block_3d_forward.1} parent=31 // pred_region
          %p193 = scmp.lt.s32.totalorder %s12, 1
          %s194 = scalar_select %p193, %s12, 1
          %s195 = smul.addr %s194, 8
          %s196 = smul.addr %s195, 8
          %s197 = scalar_lea.vmem %s0, %s196
        $region36: #{residual_block_3d_forward.1} parent=31 // pred_fallthru
          _
      $region32: #{residual_block_3d_forward.1} parent=5 // pred_fallthru
        _
      %p198 = scmp.le.s32.totalorder 1, %s12
      %p199 = scmp.lt.s32.totalorder %s12, 3
      %p200 = pnand %p198, %p199
      %p201 = pneg %p200
      // Predicated region
      $region37: #{residual_block_3d_forward.1} parent=5 // pred_check
        _
      $region38: #{residual_block_3d_forward.1} parent=5 // pred_check_branch
        %203 = sbr.rel (%p200) target = $region40
      $region39: #{residual_block_3d_forward.1} parent=5 // pred_region
        %s204 = ssub.s32 %s12, 1
        // Predicated region
        $region41: #{residual_block_3d_forward.1} parent=39 // pred_check
          %p205 = pneg %p59
        $region42: #{residual_block_3d_forward.1} parent=39 // pred_check_branch
          %207 = sbr.rel (%p205) target = $region44
        $region43: #{residual_block_3d_forward.1} parent=39 // pred_region
          %209 = dma.done [#allocation7], 9216
        $region44: #{residual_block_3d_forward.1} parent=39 // pred_fallthru
          _
        %p210 = scmp.lt.s32.totalorder %s17, 1
        %s211 = scalar_select %p210, %s17, 1
        %s212 = smul.addr %s211, 8
        %s213 = smul.addr %s212, 8
        %s214 = scalar_lea.vmem %s0, %s213
        %p215 = pneg %p38
        %p216 = pneg %p35
        %p217 = pneg %p59
        %p218 = pneg %p56
        %p219 = pneg %p80
        %p220 = pneg %p77
        %p221 = pneg %p101
        %p222 = pneg %p98
        %p223 = pneg %p122
        %p224 = pneg %p119
        %p225 = pneg %p148
        %p226 = pneg %p145
        %p227 = scmp.lt.s32.totalorder %s17, 1
        %s228 = scalar_select %p227, %s17, 1
        %s229 = smul.addr %s228, 8
        %s230 = smul.addr %s229, 8
        %s231 = scalar_lea.vmem %s5, %s230
        %p232 = scmp.lt.s32.totalorder %s17, 1
        %s233 = scalar_select %p232, %s17, 1
        %s234 = smul.addr %s233, 8
        %s235 = smul.addr %s234, 8
        %s236 = scalar_lea.vmem %s0, %s235
        %p237 = scmp.lt.s32.totalorder %s17, 1
        %s238 = scalar_select %p237, %s17, 1
        %s239 = smul.addr %s238, 8
        %s240 = smul.addr %s239, 8
        %s241 = scalar_lea.vmem %s5, %s240
        %242 = vst [vmem:[#allocation2] sm:$0xff] 0.0
        %243 = vst [vmem:[#allocation2 + $0x8] sm:$0x3] 0.0
        %s244 = scalar_lea.vmem [#allocation2], 144
        %245 = vst [vmem:[%s244] sm:$0xff] 0.0
        %246 = vst [vmem:[%s244 + $0x8] sm:$0x3] 0.0
        %247 = vst [vmem:[#allocation2] sm:$0x1] 0.0
        %248 = vst [vmem:[#allocation2 + $0x10] sm:$0x1] 0.0
        %249 = vst [vmem:[#allocation2 + $0x20] sm:$0x1] 0.0
        %250 = vst [vmem:[#allocation2 + $0x30] sm:$0x1] 0.0
        %251 = vst [vmem:[#allocation2 + $0x40] sm:$0x1] 0.0
        %252 = vst [vmem:[#allocation2 + $0x50] sm:$0x1] 0.0
        %253 = vst [vmem:[#allocation2 + $0x60] sm:$0x1] 0.0
        %254 = vst [vmem:[#allocation2 + $0x70] sm:$0x1] 0.0
        %255 = vst [vmem:[#allocation2 + $0x80] sm:$0x1] 0.0
        %256 = vst [vmem:[#allocation2 + $0x90] sm:$0x1] 0.0
        %257 = vst [vmem:[#allocation2 + $0x9] sm:$0x1] 0.0
        %258 = vst [vmem:[#allocation2 + $0x19] sm:$0x1] 0.0
        %259 = vst [vmem:[#allocation2 + $0x29] sm:$0x1] 0.0
        %260 = vst [vmem:[#allocation2 + $0x39] sm:$0x1] 0.0
        %261 = vst [vmem:[#allocation2 + $0x49] sm:$0x1] 0.0
        %262 = vst [vmem:[#allocation2 + $0x59] sm:$0x1] 0.0
        %263 = vst [vmem:[#allocation2 + $0x69] sm:$0x1] 0.0
        %264 = vst [vmem:[#allocation2 + $0x79] sm:$0x1] 0.0
        %265 = vst [vmem:[#allocation2 + $0x89] sm:$0x1] 0.0
        %266 = vst [vmem:[#allocation2 + $0x99] sm:$0x1] 0.0
        %267 = vst [vmem:[#allocation3] sm:$0xff] 0.0
        %268 = vst [vmem:[#allocation3 + $0x8] sm:$0x3] 0.0
        %s269 = scalar_lea.vmem [#allocation3], 144
        %270 = vst [vmem:[%s269] sm:$0xff] 0.0
        %271 = vst [vmem:[%s269 + $0x8] sm:$0x3] 0.0
        %272 = vst [vmem:[#allocation3] sm:$0x1] 0.0
        %273 = vst [vmem:[#allocation3 + $0x10] sm:$0x1] 0.0
        %274 = vst [vmem:[#allocation3 + $0x20] sm:$0x1] 0.0
        %275 = vst [vmem:[#allocation3 + $0x30] sm:$0x1] 0.0
        %276 = vst [vmem:[#allocation3 + $0x40] sm:$0x1] 0.0
        %277 = vst [vmem:[#allocation3 + $0x50] sm:$0x1] 0.0
        %278 = vst [vmem:[#allocation3 + $0x60] sm:$0x1] 0.0
        %279 = vst [vmem:[#allocation3 + $0x70] sm:$0x1] 0.0
        %280 = vst [vmem:[#allocation3 + $0x80] sm:$0x1] 0.0
        %281 = vst [vmem:[#allocation3 + $0x90] sm:$0x1] 0.0
        %282 = vst [vmem:[#allocation3 + $0x9] sm:$0x1] 0.0
        %283 = vst [vmem:[#allocation3 + $0x19] sm:$0x1] 0.0
        %284 = vst [vmem:[#allocation3 + $0x29] sm:$0x1] 0.0
        %285 = vst [vmem:[#allocation3 + $0x39] sm:$0x1] 0.0
        %286 = vst [vmem:[#allocation3 + $0x49] sm:$0x1] 0.0
        %287 = vst [vmem:[#allocation3 + $0x59] sm:$0x1] 0.0
        %288 = vst [vmem:[#allocation3 + $0x69] sm:$0x1] 0.0
        %289 = vst [vmem:[#allocation3 + $0x79] sm:$0x1] 0.0
        %290 = vst [vmem:[#allocation3 + $0x89] sm:$0x1] 0.0
        %291 = vst [vmem:[#allocation3 + $0x99] sm:$0x1] 0.0
        %v292 = vld [vmem:[%s236] sm:$0xff]
        %v293 = vld [vmem:[%s236 + $0x8] sm:$0xff]
        %v294 = vld [vmem:[%s236 + $0x10] sm:$0xff]
        %v295 = vld [vmem:[%s236 + $0x18] sm:$0xff]
        %v296 = vld [vmem:[%s236 + $0x20] sm:$0xff]
        %v297 = vld [vmem:[%s236 + $0x28] sm:$0xff]
        %v298 = vld [vmem:[%s236 + $0x30] sm:$0xff]
        %v299 = vld [vmem:[%s236 + $0x38] sm:$0xff]
        %s300 = scalar_lea.vmem [#allocation2], 16
        %301 = vst [vmem:[%s300 + $0x1] sm:$0xff] %v292
        %302 = vst [vmem:[%s300 + $0x11] sm:$0xff] %v293
        %303 = vst [vmem:[%s300 + $0x21] sm:$0xff] %v294
        %304 = vst [vmem:[%s300 + $0x31] sm:$0xff] %v295
        %305 = vst [vmem:[%s300 + $0x41] sm:$0xff] %v296
        %306 = vst [vmem:[%s300 + $0x51] sm:$0xff] %v297
        %307 = vst [vmem:[%s300 + $0x61] sm:$0xff] %v298
        %308 = vst [vmem:[%s300 + $0x71] sm:$0xff] %v299
        %v309 = vpack.c.bf16 %v292, %v292
        %v310 = vpack.c.bf16 %v293, %v293
        %v311 = vpack.c.bf16 %v294, %v294
        %v312 = vpack.c.bf16 %v295, %v295
        %v313 = vpack.c.bf16 %v296, %v296
        %v314 = vpack.c.bf16 %v297, %v297
        %v315 = vpack.c.bf16 %v298, %v298
        %v316 = vpack.c.bf16 %v299, %v299
        %317 = vst [vmem:[#allocation5 + $0x24] sm:$0xf] %v309
        %318 = vst [vmem:[#allocation5 + $0x4c] sm:$0xf] %v310
        %319 = vst [vmem:[#allocation5 + $0x74] sm:$0xf] %v311
        %320 = vst [vmem:[#allocation5 + $0x9c] sm:$0xf] %v312
        %321 = vst [vmem:[#allocation5 + $0xc4] sm:$0xf] %v313
        %322 = vst [vmem:[#allocation5 + $0xec] sm:$0xf] %v314
        %323 = vst [vmem:[#allocation5 + $0x114] sm:$0xf] %v315
        %324 = vst [vmem:[#allocation5 + $0x13c] sm:$0xf] %v316
        %v325 = vld [vmem:[#allocation2] sm:$0xff]
        %v326 = vld [vmem:[#allocation2 + $0x10] sm:$0xff]
        %v327 = vld [vmem:[#allocation2 + $0x20] sm:$0xff]
        %v328 = vld [vmem:[#allocation2 + $0x30] sm:$0xff]
        %v329 = vld [vmem:[#allocation2 + $0x40] sm:$0xff]
        %v330 = vld [vmem:[#allocation2 + $0x50] sm:$0xff]
        %v331 = vld [vmem:[#allocation2 + $0x60] sm:$0xff]
        %v332 = vld [vmem:[#allocation2 + $0x70] sm:$0xff]
        %v333 = vpack.c.bf16 %v325, %v325
        %v334 = vpack.c.bf16 %v326, %v326
        %v335 = vpack.c.bf16 %v327, %v327
        %v336 = vpack.c.bf16 %v328, %v328
        %v337 = vpack.c.bf16 %v329, %v329
        %v338 = vpack.c.bf16 %v330, %v330
        %v339 = vpack.c.bf16 %v331, %v331
        %v340 = vpack.c.bf16 %v332, %v332
        %341 = vst [vmem:[#allocation4] sm:$0xf] %v333
        %342 = vst [vmem:[#allocation4 + $0x24] sm:$0xf] %v334
        %343 = vst [vmem:[#allocation4 + $0x48] sm:$0xf] %v335
        %344 = vst [vmem:[#allocation4 + $0x6c] sm:$0xf] %v336
        %345 = vst [vmem:[#allocation4 + $0x90] sm:$0xf] %v337
        %346 = vst [vmem:[#allocation4 + $0xb4] sm:$0xf] %v338
        %347 = vst [vmem:[#allocation4 + $0xd8] sm:$0xf] %v339
        %348 = vst [vmem:[#allocation4 + $0xfc] sm:$0xf] %v340
        %v349 = vld [vmem:[#allocation2 + $0x1] sm:$0xff]
        %v350 = vld [vmem:[#allocation2 + $0x11] sm:$0xff]
        %v351 = vld [vmem:[#allocation2 + $0x21] sm:$0xff]
        %v352 = vld [vmem:[#allocation2 + $0x31] sm:$0xff]
        %v353 = vld [vmem:[#allocation2 + $0x41] sm:$0xff]
        %v354 = vld [vmem:[#allocation2 + $0x51] sm:$0xff]
        %v355 = vld [vmem:[#allocation2 + $0x61] sm:$0xff]
        %v356 = vld [vmem:[#allocation2 + $0x71] sm:$0xff]
        %v357 = vpack.c.bf16 %v349, %v349
        %v358 = vpack.c.bf16 %v350, %v350
        %v359 = vpack.c.bf16 %v351, %v351
        %v360 = vpack.c.bf16 %v352, %v352
        %v361 = vpack.c.bf16 %v353, %v353
        %v362 = vpack.c.bf16 %v354, %v354
        %v363 = vpack.c.bf16 %v355, %v355
        %v364 = vpack.c.bf16 %v356, %v356
        %365 = vst [vmem:[#allocation4 + $0x4] sm:$0xf] %v357
        %366 = vst [vmem:[#allocation4 + $0x28] sm:$0xf] %v358
        %367 = vst [vmem:[#allocation4 + $0x4c] sm:$0xf] %v359
        %368 = vst [vmem:[#allocation4 + $0x70] sm:$0xf] %v360
        %369 = vst [vmem:[#allocation4 + $0x94] sm:$0xf] %v361
        %370 = vst [vmem:[#allocation4 + $0xb8] sm:$0xf] %v362
        %371 = vst [vmem:[#allocation4 + $0xdc] sm:$0xf] %v363
        %372 = vst [vmem:[#allocation4 + $0x100] sm:$0xf] %v364
        %v373 = vld [vmem:[#allocation2 + $0x2] sm:$0xff]
        %v374 = vld [vmem:[#allocation2 + $0x12] sm:$0xff]
        %v375 = vld [vmem:[#allocation2 + $0x22] sm:$0xff]
        %v376 = vld [vmem:[#allocation2 + $0x32] sm:$0xff]
        %v377 = vld [vmem:[#allocation2 + $0x42] sm:$0xff]
        %v378 = vld [vmem:[#allocation2 + $0x52] sm:$0xff]
        %v379 = vld [vmem:[#allocation2 + $0x62] sm:$0xff]
        %v380 = vld [vmem:[#allocation2 + $0x72] sm:$0xff]
        %v381 = vpack.c.bf16 %v373, %v373
        %v382 = vpack.c.bf16 %v374, %v374
        %v383 = vpack.c.bf16 %v375, %v375
        %v384 = vpack.c.bf16 %v376, %v376
        %v385 = vpack.c.bf16 %v377, %v377
        %v386 = vpack.c.bf16 %v378, %v378
        %v387 = vpack.c.bf16 %v379, %v379
        %v388 = vpack.c.bf16 %v380, %v380
        %389 = vst [vmem:[#allocation4 + $0x8] sm:$0xf] %v381
        %390 = vst [vmem:[#allocation4 + $0x2c] sm:$0xf] %v382
        %391 = vst [vmem:[#allocation4 + $0x50] sm:$0xf] %v383
        %392 = vst [vmem:[#allocation4 + $0x74] sm:$0xf] %v384
        %393 = vst [vmem:[#allocation4 + $0x98] sm:$0xf] %v385
        %394 = vst [vmem:[#allocation4 + $0xbc] sm:$0xf] %v386
        %395 = vst [vmem:[#allocation4 + $0xe0] sm:$0xf] %v387
        %396 = vst [vmem:[#allocation4 + $0x104] sm:$0xf] %v388
        %v397 = vld [vmem:[%s300] sm:$0xff]
        %v398 = vld [vmem:[%s300 + $0x10] sm:$0xff]
        %v399 = vld [vmem:[%s300 + $0x20] sm:$0xff]
        %v400 = vld [vmem:[%s300 + $0x30] sm:$0xff]
        %v401 = vld [vmem:[%s300 + $0x40] sm:$0xff]
        %v402 = vld [vmem:[%s300 + $0x50] sm:$0xff]
        %v403 = vld [vmem:[%s300 + $0x60] sm:$0xff]
        %v404 = vld [vmem:[%s300 + $0x70] sm:$0xff]
        %v405 = vpack.c.bf16 %v397, %v397
        %v406 = vpack.c.bf16 %v398, %v398
        %v407 = vpack.c.bf16 %v399, %v399
        %v408 = vpack.c.bf16 %v400, %v400
        %v409 = vpack.c.bf16 %v401, %v401
        %v410 = vpack.c.bf16 %v402, %v402
        %v411 = vpack.c.bf16 %v403, %v403
        %v412 = vpack.c.bf16 %v404, %v404
        %413 = vst [vmem:[#allocation4 + $0xc] sm:$0xf] %v405
        %414 = vst [vmem:[#allocation4 + $0x30] sm:$0xf] %v406
        %415 = vst [vmem:[#allocation4 + $0x54] sm:$0xf] %v407
        %416 = vst [vmem:[#allocation4 + $0x78] sm:$0xf] %v408
        %417 = vst [vmem:[#allocation4 + $0x9c] sm:$0xf] %v409
        %418 = vst [vmem:[#allocation4 + $0xc0] sm:$0xf] %v410
        %419 = vst [vmem:[#allocation4 + $0xe4] sm:$0xf] %v411
        %420 = vst [vmem:[#allocation4 + $0x108] sm:$0xf] %v412
        %v421 = vld [vmem:[%s300 + $0x1] sm:$0xff]
        %v422 = vld [vmem:[%s300 + $0x11] sm:$0xff]
        %v423 = vld [vmem:[%s300 + $0x21] sm:$0xff]
        %v424 = vld [vmem:[%s300 + $0x31] sm:$0xff]
        %v425 = vld [vmem:[%s300 + $0x41] sm:$0xff]
        %v426 = vld [vmem:[%s300 + $0x51] sm:$0xff]
        %v427 = vld [vmem:[%s300 + $0x61] sm:$0xff]
        %v428 = vld [vmem:[%s300 + $0x71] sm:$0xff]
        %v429 = vpack.c.bf16 %v421, %v421
        %v430 = vpack.c.bf16 %v422, %v422
        %v431 = vpack.c.bf16 %v423, %v423
        %v432 = vpack.c.bf16 %v424, %v424
        %v433 = vpack.c.bf16 %v425, %v425
        %v434 = vpack.c.bf16 %v426, %v426
        %v435 = vpack.c.bf16 %v427, %v427
        %v436 = vpack.c.bf16 %v428, %v428
        %437 = vst [vmem:[#allocation4 + $0x10] sm:$0xf] %v429
        %438 = vst [vmem:[#allocation4 + $0x34] sm:$0xf] %v430
        %439 = vst [vmem:[#allocation4 + $0x58] sm:$0xf] %v431
        %440 = vst [vmem:[#allocation4 + $0x7c] sm:$0xf] %v432
        %441 = vst [vmem:[#allocation4 + $0xa0] sm:$0xf] %v433
        %442 = vst [vmem:[#allocation4 + $0xc4] sm:$0xf] %v434
        %443 = vst [vmem:[#allocation4 + $0xe8] sm:$0xf] %v435
        %444 = vst [vmem:[#allocation4 + $0x10c] sm:$0xf] %v436
        %v445 = vld [vmem:[%s300 + $0x2] sm:$0xff]
        %v446 = vld [vmem:[%s300 + $0x12] sm:$0xff]
        %v447 = vld [vmem:[%s300 + $0x22] sm:$0xff]
        %v448 = vld [vmem:[%s300 + $0x32] sm:$0xff]
        %v449 = vld [vmem:[%s300 + $0x42] sm:$0xff]
        %v450 = vld [vmem:[%s300 + $0x52] sm:$0xff]
        %v451 = vld [vmem:[%s300 + $0x62] sm:$0xff]
        %v452 = vld [vmem:[%s300 + $0x72] sm:$0xff]
        %v453 = vpack.c.bf16 %v445, %v445
        %v454 = vpack.c.bf16 %v446, %v446
        %v455 = vpack.c.bf16 %v447, %v447
        %v456 = vpack.c.bf16 %v448, %v448
        %v457 = vpack.c.bf16 %v449, %v449
        %v458 = vpack.c.bf16 %v450, %v450
        %v459 = vpack.c.bf16 %v451, %v451
        %v460 = vpack.c.bf16 %v452, %v452
        %461 = vst [vmem:[#allocation4 + $0x14] sm:$0xf] %v453
        %462 = vst [vmem:[#allocation4 + $0x38] sm:$0xf] %v454
        %463 = vst [vmem:[#allocation4 + $0x5c] sm:$0xf] %v455
        %464 = vst [vmem:[#allocation4 + $0x80] sm:$0xf] %v456
        %465 = vst [vmem:[#allocation4 + $0xa4] sm:$0xf] %v457
        %466 = vst [vmem:[#allocation4 + $0xc8] sm:$0xf] %v458
        %467 = vst [vmem:[#allocation4 + $0xec] sm:$0xf] %v459
        %468 = vst [vmem:[#allocation4 + $0x110] sm:$0xf] %v460
        %s469 = scalar_lea.vmem [#allocation2], 32
        %v470 = vld [vmem:[%s469] sm:$0xff]
        %v471 = vld [vmem:[%s469 + $0x10] sm:$0xff]
        %v472 = vld [vmem:[%s469 + $0x20] sm:$0xff]
        %v473 = vld [vmem:[%s469 + $0x30] sm:$0xff]
        %v474 = vld [vmem:[%s469 + $0x40] sm:$0xff]
        %v475 = vld [vmem:[%s469 + $0x50] sm:$0xff]
        %v476 = vld [vmem:[%s469 + $0x60] sm:$0xff]
        %v477 = vld [vmem:[%s469 + $0x70] sm:$0xff]
        %v478 = vpack.c.bf16 %v470, %v470
        %v479 = vpack.c.bf16 %v471, %v471
        %v480 = vpack.c.bf16 %v472, %v472
        %v481 = vpack.c.bf16 %v473, %v473
        %v482 = vpack.c.bf16 %v474, %v474
        %v483 = vpack.c.bf16 %v475, %v475
        %v484 = vpack.c.bf16 %v476, %v476
        %v485 = vpack.c.bf16 %v477, %v477
        %486 = vst [vmem:[#allocation4 + $0x18] sm:$0xf] %v478
        %487 = vst [vmem:[#allocation4 + $0x3c] sm:$0xf] %v479
        %488 = vst [vmem:[#allocation4 + $0x60] sm:$0xf] %v480
        %489 = vst [vmem:[#allocation4 + $0x84] sm:$0xf] %v481
        %490 = vst [vmem:[#allocation4 + $0xa8] sm:$0xf] %v482
        %491 = vst [vmem:[#allocation4 + $0xcc] sm:$0xf] %v483
        %492 = vst [vmem:[#allocation4 + $0xf0] sm:$0xf] %v484
        %493 = vst [vmem:[#allocation4 + $0x114] sm:$0xf] %v485
        %v494 = vld [vmem:[%s469 + $0x1] sm:$0xff]
        %v495 = vld [vmem:[%s469 + $0x11] sm:$0xff]
        %v496 = vld [vmem:[%s469 + $0x21] sm:$0xff]
        %v497 = vld [vmem:[%s469 + $0x31] sm:$0xff]
        %v498 = vld [vmem:[%s469 + $0x41] sm:$0xff]
        %v499 = vld [vmem:[%s469 + $0x51] sm:$0xff]
        %v500 = vld [vmem:[%s469 + $0x61] sm:$0xff]
        %v501 = vld [vmem:[%s469 + $0x71] sm:$0xff]
        %v502 = vpack.c.bf16 %v494, %v494
        %v503 = vpack.c.bf16 %v495, %v495
        %v504 = vpack.c.bf16 %v496, %v496
        %v505 = vpack.c.bf16 %v497, %v497
        %v506 = vpack.c.bf16 %v498, %v498
        %v507 = vpack.c.bf16 %v499, %v499
        %v508 = vpack.c.bf16 %v500, %v500
        %v509 = vpack.c.bf16 %v501, %v501
        %510 = vst [vmem:[#allocation4 + $0x1c] sm:$0xf] %v502
        %511 = vst [vmem:[#allocation4 + $0x40] sm:$0xf] %v503
        %512 = vst [vmem:[#allocation4 + $0x64] sm:$0xf] %v504
        %513 = vst [vmem:[#allocation4 + $0x88] sm:$0xf] %v505
        %514 = vst [vmem:[#allocation4 + $0xac] sm:$0xf] %v506
        %515 = vst [vmem:[#allocation4 + $0xd0] sm:$0xf] %v507
        %516 = vst [vmem:[#allocation4 + $0xf4] sm:$0xf] %v508
        %517 = vst [vmem:[#allocation4 + $0x118] sm:$0xf] %v509
        %v518 = vld [vmem:[%s469 + $0x2] sm:$0xff]
        %v519 = vld [vmem:[%s469 + $0x12] sm:$0xff]
        %v520 = vld [vmem:[%s469 + $0x22] sm:$0xff]
        %v521 = vld [vmem:[%s469 + $0x32] sm:$0xff]
        %v522 = vld [vmem:[%s469 + $0x42] sm:$0xff]
        %v523 = vld [vmem:[%s469 + $0x52] sm:$0xff]
        %v524 = vld [vmem:[%s469 + $0x62] sm:$0xff]
        %v525 = vld [vmem:[%s469 + $0x72] sm:$0xff]
        %v526 = vpack.c.bf16 %v518, %v518
        %v527 = vpack.c.bf16 %v519, %v519
        %v528 = vpack.c.bf16 %v520, %v520
        %v529 = vpack.c.bf16 %v521, %v521
        %v530 = vpack.c.bf16 %v522, %v522
        %v531 = vpack.c.bf16 %v523, %v523
        %v532 = vpack.c.bf16 %v524, %v524
        %v533 = vpack.c.bf16 %v525, %v525
        %534 = vst [vmem:[#allocation4 + $0x20] sm:$0xf] %v526
        %535 = vst [vmem:[#allocation4 + $0x44] sm:$0xf] %v527
        %536 = vst [vmem:[#allocation4 + $0x68] sm:$0xf] %v528
        %537 = vst [vmem:[#allocation4 + $0x8c] sm:$0xf] %v529
        %538 = vst [vmem:[#allocation4 + $0xb0] sm:$0xf] %v530
        %539 = vst [vmem:[#allocation4 + $0xd4] sm:$0xf] %v531
        %540 = vst [vmem:[#allocation4 + $0xf8] sm:$0xf] %v532
        %541 = vst [vmem:[#allocation4 + $0x11c] sm:$0xf] %v533
        %v542 = vld [vmem:[#allocation4] sm:$0xff]
        %v543 = vld [vmem:[#allocation4 + $0x8] sm:$0xff]
        %v544 = vld [vmem:[#allocation4 + $0x10] sm:$0xff]
        %v545 = vld [vmem:[#allocation4 + $0x18] sm:$0xff]
        %v546 = vld [vmem:[#allocation4 + $0x20] sm:$0xf]
        %v547 = vld [vmem:[#allocation4 + $0x24] sm:$0xff]
        %v548 = vld [vmem:[#allocation4 + $0x2c] sm:$0xff]
        %v549 = vld [vmem:[#allocation4 + $0x34] sm:$0xff]
        %v550 = vld [vmem:[#allocation4 + $0x3c] sm:$0xff]
        %v551 = vld [vmem:[#allocation4 + $0x44] sm:$0xf]
        %v552 = vld [vmem:[#allocation4 + $0x48] sm:$0xff]
        %v553 = vld [vmem:[#allocation4 + $0x50] sm:$0xff]
        %v554 = vld [vmem:[#allocation4 + $0x58] sm:$0xff]
        %v555 = vld [vmem:[#allocation4 + $0x60] sm:$0xff]
        %v556 = vld [vmem:[#allocation4 + $0x68] sm:$0xf]
        %v557 = vld [vmem:[#allocation4 + $0x6c] sm:$0xff]
        %v558 = vld [vmem:[#allocation4 + $0x74] sm:$0xff]
        %v559 = vld [vmem:[#allocation4 + $0x7c] sm:$0xff]
        %v560 = vld [vmem:[#allocation4 + $0x84] sm:$0xff]
        %v561 = vld [vmem:[#allocation4 + $0x8c] sm:$0xf]
        %v562 = vld [vmem:[#allocation4 + $0x90] sm:$0xff]
        %v563 = vld [vmem:[#allocation4 + $0x98] sm:$0xff]
        %v564 = vld [vmem:[#allocation4 + $0xa0] sm:$0xff]
        %v565 = vld [vmem:[#allocation4 + $0xa8] sm:$0xff]
        %v566 = vld [vmem:[#allocation4 + $0xb0] sm:$0xf]
        %v567 = vld [vmem:[#allocation4 + $0xb4] sm:$0xff]
        %v568 = vld [vmem:[#allocation4 + $0xbc] sm:$0xff]
        %v569 = vld [vmem:[#allocation4 + $0xc4] sm:$0xff]
        %v570 = vld [vmem:[#allocation4 + $0xcc] sm:$0xff]
        %v571 = vld [vmem:[#allocation4 + $0xd4] sm:$0xf]
        %v572 = vld [vmem:[#allocation4 + $0xd8] sm:$0xff]
        %v573 = vld [vmem:[#allocation4 + $0xe0] sm:$0xff]
        %v574 = vld [vmem:[#allocation4 + $0xe8] sm:$0xff]
        %v575 = vld [vmem:[#allocation4 + $0xf0] sm:$0xff]
        %v576 = vld [vmem:[#allocation4 + $0xf8] sm:$0xf]
        %v577 = vld [vmem:[#allocation4 + $0xfc] sm:$0xff]
        %v578 = vld [vmem:[#allocation4 + $0x104] sm:$0xff]
        %v579 = vld [vmem:[#allocation4 + $0x10c] sm:$0xff]
        %v580 = vld [vmem:[#allocation4 + $0x114] sm:$0xff]
        %v581 = vld [vmem:[#allocation4 + $0x11c] sm:$0xf]
        %v582 = vld [vmem:[#allocation6] sm:$0xf]
        %v583 = vld [vmem:[#allocation6 + $0x4] sm:$0xf]
        %v584 = vld [vmem:[#allocation6 + $0x8] sm:$0xf]
        %v585 = vld [vmem:[#allocation6 + $0xc] sm:$0xf]
        %v586 = vld [vmem:[#allocation6 + $0x10] sm:$0xf]
        %v587 = vld [vmem:[#allocation6 + $0x14] sm:$0xf]
        %v588 = vld [vmem:[#allocation6 + $0x18] sm:$0xf]
        %v589 = vld [vmem:[#allocation6 + $0x1c] sm:$0xf]
        %v590 = vld [vmem:[#allocation6 + $0x20] sm:$0xf]
        %v591 = vld [vmem:[#allocation6 + $0x24] sm:$0xf]
        %v592 = vld [vmem:[#allocation6 + $0x28] sm:$0xf]
        %v593 = vld [vmem:[#allocation6 + $0x2c] sm:$0xf]
        %v594 = vld [vmem:[#allocation6 + $0x30] sm:$0xf]
        %v595 = vld [vmem:[#allocation6 + $0x34] sm:$0xf]
        %v596 = vld [vmem:[#allocation6 + $0x38] sm:$0xf]
        %v597 = vld [vmem:[#allocation6 + $0x3c] sm:$0xf]
        %v598 = vld [vmem:[#allocation6 + $0x40] sm:$0xf]
        %v599 = vld [vmem:[#allocation6 + $0x44] sm:$0xf]
        %v600 = vld [vmem:[#allocation6 + $0x48] sm:$0xf]
        %v601 = vld [vmem:[#allocation6 + $0x4c] sm:$0xf]
        %v602 = vld [vmem:[#allocation6 + $0x50] sm:$0xf]
        %v603 = vld [vmem:[#allocation6 + $0x54] sm:$0xf]
        %v604 = vld [vmem:[#allocation6 + $0x58] sm:$0xf]
        %v605 = vld [vmem:[#allocation6 + $0x5c] sm:$0xf]
        %v606 = vld [vmem:[#allocation6 + $0x60] sm:$0xf]
        %v607 = vld [vmem:[#allocation6 + $0x64] sm:$0xf]
        %v608 = vld [vmem:[#allocation6 + $0x68] sm:$0xf]
        %v609 = vld [vmem:[#allocation6 + $0x6c] sm:$0xf]
        %v610 = vld [vmem:[#allocation6 + $0x70] sm:$0xf]
        %v611 = vld [vmem:[#allocation6 + $0x74] sm:$0xf]
        %v612 = vld [vmem:[#allocation6 + $0x78] sm:$0xf]
        %v613 = vld [vmem:[#allocation6 + $0x7c] sm:$0xf]
        %v614 = vld [vmem:[#allocation6 + $0x80] sm:$0xf]
        %v615 = vld [vmem:[#allocation6 + $0x84] sm:$0xf]
        %v616 = vld [vmem:[#allocation6 + $0x88] sm:$0xf]
        %v617 = vld [vmem:[#allocation6 + $0x8c] sm:$0xf]
        %v618 = vld [vmem:[#allocation6 + $0x90] sm:$0xf]
        %v619 = vld [vmem:[#allocation6 + $0x94] sm:$0xf]
        %v620 = vld [vmem:[#allocation6 + $0x98] sm:$0xf]
        %v621 = vld [vmem:[#allocation6 + $0x9c] sm:$0xf]
        %v622 = vld [vmem:[#allocation6 + $0xa0] sm:$0xf]
        %v623 = vld [vmem:[#allocation6 + $0xa4] sm:$0xf]
        %v624 = vld [vmem:[#allocation6 + $0xa8] sm:$0xf]
        %v625 = vld [vmem:[#allocation6 + $0xac] sm:$0xf]
        %v626 = vld [vmem:[#allocation6 + $0xb0] sm:$0xf]
        %v627 = vld [vmem:[#allocation6 + $0xb4] sm:$0xf]
        %v628 = vld [vmem:[#allocation6 + $0xb8] sm:$0xf]
        %v629 = vld [vmem:[#allocation6 + $0xbc] sm:$0xf]
        %v630 = vld [vmem:[#allocation6 + $0xc0] sm:$0xf]
        %v631 = vld [vmem:[#allocation6 + $0xc4] sm:$0xf]
        %v632 = vld [vmem:[#allocation6 + $0xc8] sm:$0xf]
        %v633 = vld [vmem:[#allocation6 + $0xcc] sm:$0xf]
        %v634 = vld [vmem:[#allocation6 + $0xd0] sm:$0xf]
        %v635 = vld [vmem:[#allocation6 + $0xd4] sm:$0xf]
        %v636 = vld [vmem:[#allocation6 + $0xd8] sm:$0xf]
        %v637 = vld [vmem:[#allocation6 + $0xdc] sm:$0xf]
        %v638 = vld [vmem:[#allocation6 + $0xe0] sm:$0xf]
        %v639 = vld [vmem:[#allocation6 + $0xe4] sm:$0xf]
        %v640 = vld [vmem:[#allocation6 + $0xe8] sm:$0xf]
        %v641 = vld [vmem:[#allocation6 + $0xec] sm:$0xf]
        %v642 = vld [vmem:[#allocation6 + $0xf0] sm:$0xf]
        %v643 = vld [vmem:[#allocation6 + $0xf4] sm:$0xf]
        %v644 = vld [vmem:[#allocation6 + $0xf8] sm:$0xf]
        %v645 = vld [vmem:[#allocation6 + $0xfc] sm:$0xf]
        %v646 = vld [vmem:[#allocation6 + $0x100] sm:$0xf]
        %v647 = vld [vmem:[#allocation6 + $0x104] sm:$0xf]
        %v648 = vld [vmem:[#allocation6 + $0x108] sm:$0xf]
        %v649 = vld [vmem:[#allocation6 + $0x10c] sm:$0xf]
        %v650 = vld [vmem:[#allocation6 + $0x110] sm:$0xf]
        %v651 = vld [vmem:[#allocation6 + $0x114] sm:$0xf]
        %v652 = vld [vmem:[#allocation6 + $0x118] sm:$0xf]
        %v653 = vld [vmem:[#allocation6 + $0x11c] sm:$0xf]
        %v654 = vld [vmem:[#allocation6 + $0x120] sm:$0xf]
        %v655 = vld [vmem:[#allocation6 + $0x124] sm:$0xf]
        %v656 = vld [vmem:[#allocation6 + $0x128] sm:$0xf]
        %v657 = vld [vmem:[#allocation6 + $0x12c] sm:$0xf]
        %v658 = vld [vmem:[#allocation6 + $0x130] sm:$0xf]
        %v659 = vld [vmem:[#allocation6 + $0x134] sm:$0xf]
        %v660 = vld [vmem:[#allocation6 + $0x138] sm:$0xf]
        %v661 = vld [vmem:[#allocation6 + $0x13c] sm:$0xf]
        %v662 = vld [vmem:[#allocation6 + $0x140] sm:$0xf]
        %v663 = vld [vmem:[#allocation6 + $0x144] sm:$0xf]
        %v664 = vld [vmem:[#allocation6 + $0x148] sm:$0xf]
        %v665 = vld [vmem:[#allocation6 + $0x14c] sm:$0xf]
        %v666 = vld [vmem:[#allocation6 + $0x150] sm:$0xf]
        %v667 = vld [vmem:[#allocation6 + $0x154] sm:$0xf]
        %v668 = vld [vmem:[#allocation6 + $0x158] sm:$0xf]
        %v669 = vld [vmem:[#allocation6 + $0x15c] sm:$0xf]
        %v670 = vld [vmem:[#allocation6 + $0x160] sm:$0xf]
        %v671 = vld [vmem:[#allocation6 + $0x164] sm:$0xf]
        %v672 = vld [vmem:[#allocation6 + $0x168] sm:$0xf]
        %v673 = vld [vmem:[#allocation6 + $0x16c] sm:$0xf]
        %v674 = vld [vmem:[#allocation6 + $0x170] sm:$0xf]
        %v675 = vld [vmem:[#allocation6 + $0x174] sm:$0xf]
        %v676 = vld [vmem:[#allocation6 + $0x178] sm:$0xf]
        %v677 = vld [vmem:[#allocation6 + $0x17c] sm:$0xf]
        %v678 = vld [vmem:[#allocation6 + $0x180] sm:$0xf]
        %v679 = vld [vmem:[#allocation6 + $0x184] sm:$0xf]
        %v680 = vld [vmem:[#allocation6 + $0x188] sm:$0xf]
        %v681 = vld [vmem:[#allocation6 + $0x18c] sm:$0xf]
        %v682 = vld [vmem:[#allocation6 + $0x190] sm:$0xf]
        %v683 = vld [vmem:[#allocation6 + $0x194] sm:$0xf]
        %v684 = vld [vmem:[#allocation6 + $0x198] sm:$0xf]
        %v685 = vld [vmem:[#allocation6 + $0x19c] sm:$0xf]
        %v686 = vld [vmem:[#allocation6 + $0x1a0] sm:$0xf]
        %v687 = vld [vmem:[#allocation6 + $0x1a4] sm:$0xf]
        %v688 = vld [vmem:[#allocation6 + $0x1a8] sm:$0xf]
        %v689 = vld [vmem:[#allocation6 + $0x1ac] sm:$0xf]
        %v690 = vld [vmem:[#allocation6 + $0x1b0] sm:$0xf]
        %v691 = vld [vmem:[#allocation6 + $0x1b4] sm:$0xf]
        %v692 = vld [vmem:[#allocation6 + $0x1b8] sm:$0xf]
        %v693 = vld [vmem:[#allocation6 + $0x1bc] sm:$0xf]
        %v694 = vld [vmem:[#allocation6 + $0x1c0] sm:$0xf]
        %v695 = vld [vmem:[#allocation6 + $0x1c4] sm:$0xf]
        %v696 = vld [vmem:[#allocation6 + $0x1c8] sm:$0xf]
        %v697 = vld [vmem:[#allocation6 + $0x1cc] sm:$0xf]
        %v698 = vld [vmem:[#allocation6 + $0x1d0] sm:$0xf]
        %v699 = vld [vmem:[#allocation6 + $0x1d4] sm:$0xf]
        %v700 = vld [vmem:[#allocation6 + $0x1d8] sm:$0xf]
        %v701 = vld [vmem:[#allocation6 + $0x1dc] sm:$0xf]
        %v702 = vld [vmem:[#allocation6 + $0x1e0] sm:$0xf]
        %v703 = vld [vmem:[#allocation6 + $0x1e4] sm:$0xf]
        %v704 = vld [vmem:[#allocation6 + $0x1e8] sm:$0xf]
        %v705 = vld [vmem:[#allocation6 + $0x1ec] sm:$0xf]
        %v706 = vld [vmem:[#allocation6 + $0x1f0] sm:$0xf]
        %v707 = vld [vmem:[#allocation6 + $0x1f4] sm:$0xf]
        %v708 = vld [vmem:[#allocation6 + $0x1f8] sm:$0xf]
        %v709 = vld [vmem:[#allocation6 + $0x1fc] sm:$0xf]
        %v710 = vld [vmem:[#allocation6 + $0x200] sm:$0xf]
        %v711 = vld [vmem:[#allocation6 + $0x204] sm:$0xf]
        %v712 = vld [vmem:[#allocation6 + $0x208] sm:$0xf]
        %v713 = vld [vmem:[#allocation6 + $0x20c] sm:$0xf]
        %v714 = vld [vmem:[#allocation6 + $0x210] sm:$0xf]
        %v715 = vld [vmem:[#allocation6 + $0x214] sm:$0xf]
        %v716 = vld [vmem:[#allocation6 + $0x218] sm:$0xf]
        %v717 = vld [vmem:[#allocation6 + $0x21c] sm:$0xf]
        %v718 = vld [vmem:[#allocation6 + $0x220] sm:$0xf]
        %v719 = vld [vmem:[#allocation6 + $0x224] sm:$0xf]
        %v720 = vld [vmem:[#allocation6 + $0x228] sm:$0xf]
        %v721 = vld [vmem:[#allocation6 + $0x22c] sm:$0xf]
        %v722 = vld [vmem:[#allocation6 + $0x230] sm:$0xf]
        %v723 = vld [vmem:[#allocation6 + $0x234] sm:$0xf]
        %v724 = vld [vmem:[#allocation6 + $0x238] sm:$0xf]
        %v725 = vld [vmem:[#allocation6 + $0x23c] sm:$0xf]
        %v726 = vld [vmem:[%s3] sm:$0x1]
        %v728 = vperm.slane %v726, 0
        %v770 = vunpack.c.l.b16 %v542
        %v771 = vunpack.c.h.b16 %v542
        %v772 = vunpack.c.l.b16 %v543
        %v773 = vunpack.c.h.b16 %v543
        %v774 = vunpack.c.l.b16 %v544
        %v775 = vunpack.c.h.b16 %v544
        %v776 = vunpack.c.l.b16 %v545
        %v777 = vunpack.c.h.b16 %v545
        %v778 = vunpack.c.l.b16 %v546
        %v779 = vunpack.c.l.b16 %v547
        %v780 = vunpack.c.h.b16 %v547
        %v781 = vunpack.c.l.b16 %v548
        %v782 = vunpack.c.h.b16 %v548
        %v783 = vunpack.c.l.b16 %v549
        %v784 = vunpack.c.h.b16 %v549
        %v785 = vunpack.c.l.b16 %v550
        %v786 = vunpack.c.h.b16 %v550
        %v787 = vunpack.c.l.b16 %v551
        %v788 = vunpack.c.l.b16 %v552
        %v789 = vunpack.c.h.b16 %v552
        %v790 = vunpack.c.l.b16 %v553
        %v791 = vunpack.c.h.b16 %v553
        %v792 = vunpack.c.l.b16 %v554
        %v793 = vunpack.c.h.b16 %v554
        %v794 = vunpack.c.l.b16 %v555
        %v795 = vunpack.c.h.b16 %v555
        %v796 = vunpack.c.l.b16 %v556
        %v797 = vunpack.c.l.b16 %v557
        %v798 = vunpack.c.h.b16 %v557
        %v799 = vunpack.c.l.b16 %v558
        %v800 = vunpack.c.h.b16 %v558
        %v801 = vunpack.c.l.b16 %v559
        %v802 = vunpack.c.h.b16 %v559
        %v803 = vunpack.c.l.b16 %v560
        %v804 = vunpack.c.h.b16 %v560
        %v805 = vunpack.c.l.b16 %v561
        %v806 = vunpack.c.l.b16 %v562
        %v807 = vunpack.c.h.b16 %v562
        %v808 = vunpack.c.l.b16 %v563
        %v809 = vunpack.c.h.b16 %v563
        %v810 = vunpack.c.l.b16 %v564
        %v811 = vunpack.c.h.b16 %v564
        %v812 = vunpack.c.l.b16 %v565
        %v813 = vunpack.c.h.b16 %v565
        %v814 = vunpack.c.l.b16 %v566
        %v815 = vunpack.c.l.b16 %v567
        %v816 = vunpack.c.h.b16 %v567
        %v817 = vunpack.c.l.b16 %v568
        %v818 = vunpack.c.h.b16 %v568
        %v819 = vunpack.c.l.b16 %v569
        %v820 = vunpack.c.h.b16 %v569
        %v821 = vunpack.c.l.b16 %v570
        %v822 = vunpack.c.h.b16 %v570
        %v823 = vunpack.c.l.b16 %v571
        %v824 = vunpack.c.l.b16 %v572
        %v825 = vunpack.c.h.b16 %v572
        %v826 = vunpack.c.l.b16 %v573
        %v827 = vunpack.c.h.b16 %v573
        %v828 = vunpack.c.l.b16 %v574
        %v829 = vunpack.c.h.b16 %v574
        %v830 = vunpack.c.l.b16 %v575
        %v831 = vunpack.c.h.b16 %v575
        %v832 = vunpack.c.l.b16 %v576
        %v833 = vunpack.c.l.b16 %v577
        %v834 = vunpack.c.h.b16 %v577
        %v835 = vunpack.c.l.b16 %v578
        %v836 = vunpack.c.h.b16 %v578
        %v837 = vunpack.c.l.b16 %v579
        %v838 = vunpack.c.h.b16 %v579
        %v839 = vunpack.c.l.b16 %v580
        %v840 = vunpack.c.h.b16 %v580
        %v841 = vunpack.c.l.b16 %v581
        %v842 = vpack.c.b16 %v779, %v770
        %v843 = vpack.c.b16 %v780, %v771
        %v844 = vpack.c.b16 %v781, %v772
        %v845 = vpack.c.b16 %v782, %v773
        %v846 = vpack.c.b16 %v783, %v774
        %v847 = vpack.c.b16 %v784, %v775
        %v848 = vpack.c.b16 %v785, %v776
        %v849 = vpack.c.b16 %v786, %v777
        %v850 = vpack.c.b16 %v787, %v778
        %v851 = vpack.c.b16 %v797, %v788
        %v852 = vpack.c.b16 %v798, %v789
        %v853 = vpack.c.b16 %v799, %v790
        %v854 = vpack.c.b16 %v800, %v791
        %v855 = vpack.c.b16 %v801, %v792
        %v856 = vpack.c.b16 %v802, %v793
        %v857 = vpack.c.b16 %v803, %v794
        %v858 = vpack.c.b16 %v804, %v795
        %v859 = vpack.c.b16 %v805, %v796
        %v860 = vpack.c.b16 %v815, %v806
        %v861 = vpack.c.b16 %v816, %v807
        %v862 = vpack.c.b16 %v817, %v808
        %v863 = vpack.c.b16 %v818, %v809
        %v864 = vpack.c.b16 %v819, %v810
        %v865 = vpack.c.b16 %v820, %v811
        %v866 = vpack.c.b16 %v821, %v812
        %v867 = vpack.c.b16 %v822, %v813
        %v868 = vpack.c.b16 %v823, %v814
        %v869 = vpack.c.b16 %v833, %v824
        %v870 = vpack.c.b16 %v834, %v825
        %v871 = vpack.c.b16 %v835, %v826
        %v872 = vpack.c.b16 %v836, %v827
        %v873 = vpack.c.b16 %v837, %v828
        %v874 = vpack.c.b16 %v838, %v829
        %v875 = vpack.c.b16 %v839, %v830
        %v876 = vpack.c.b16 %v840, %v831
        %v877 = vpack.c.b16 %v841, %v832
        %v1058 = vunpack.c.l.b16 %v582
        %v1059 = vunpack.c.l.b16 %v583
        %v1060 = vunpack.c.l.b16 %v584
        %v1061 = vunpack.c.l.b16 %v585
        %v1062 = vunpack.c.l.b16 %v586
        %v1063 = vunpack.c.l.b16 %v587
        %v1064 = vunpack.c.l.b16 %v588
        %v1065 = vunpack.c.l.b16 %v589
        %v1066 = vunpack.c.l.b16 %v590
        %v1067 = vunpack.c.l.b16 %v591
        %v1068 = vunpack.c.l.b16 %v592
        %v1069 = vunpack.c.l.b16 %v593
        %v1070 = vunpack.c.l.b16 %v594
        %v1071 = vunpack.c.l.b16 %v595
        %v1072 = vunpack.c.l.b16 %v596
        %v1073 = vunpack.c.l.b16 %v597
        %v1074 = vunpack.c.l.b16 %v598
        %v1075 = vunpack.c.l.b16 %v599
        %v1076 = vunpack.c.l.b16 %v600
        %v1077 = vunpack.c.l.b16 %v601
        %v1078 = vunpack.c.l.b16 %v602
        %v1079 = vunpack.c.l.b16 %v603
        %v1080 = vunpack.c.l.b16 %v604
        %v1081 = vunpack.c.l.b16 %v605
        %v1082 = vunpack.c.l.b16 %v606
        %v1083 = vunpack.c.l.b16 %v607
        %v1084 = vunpack.c.l.b16 %v608
        %v1085 = vunpack.c.l.b16 %v609
        %v1086 = vunpack.c.l.b16 %v610
        %v1087 = vunpack.c.l.b16 %v611
        %v1088 = vunpack.c.l.b16 %v612
        %v1089 = vunpack.c.l.b16 %v613
        %v1090 = vunpack.c.l.b16 %v614
        %v1091 = vunpack.c.l.b16 %v615
        %v1092 = vunpack.c.l.b16 %v616
        %v1093 = vunpack.c.l.b16 %v617
        %v1094 = vunpack.c.l.b16 %v618
        %v1095 = vunpack.c.l.b16 %v619
        %v1096 = vunpack.c.l.b16 %v620
        %v1097 = vunpack.c.l.b16 %v621
        %v1098 = vunpack.c.l.b16 %v622
        %v1099 = vunpack.c.l.b16 %v623
        %v1100 = vunpack.c.l.b16 %v624
        %v1101 = vunpack.c.l.b16 %v625
        %v1102 = vunpack.c.l.b16 %v626
        %v1103 = vunpack.c.l.b16 %v627
        %v1104 = vunpack.c.l.b16 %v628
        %v1105 = vunpack.c.l.b16 %v629
        %v1106 = vunpack.c.l.b16 %v630
        %v1107 = vunpack.c.l.b16 %v631
        %v1108 = vunpack.c.l.b16 %v632
        %v1109 = vunpack.c.l.b16 %v633
        %v1110 = vunpack.c.l.b16 %v634
        %v1111 = vunpack.c.l.b16 %v635
        %v1112 = vunpack.c.l.b16 %v636
        %v1113 = vunpack.c.l.b16 %v637
        %v1114 = vunpack.c.l.b16 %v638
        %v1115 = vunpack.c.l.b16 %v639
        %v1116 = vunpack.c.l.b16 %v640
        %v1117 = vunpack.c.l.b16 %v641
        %v1118 = vunpack.c.l.b16 %v642
        %v1119 = vunpack.c.l.b16 %v643
        %v1120 = vunpack.c.l.b16 %v644
        %v1121 = vunpack.c.l.b16 %v645
        %v1122 = vunpack.c.l.b16 %v646
        %v1123 = vunpack.c.l.b16 %v647
        %v1124 = vunpack.c.l.b16 %v648
        %v1125 = vunpack.c.l.b16 %v649
        %v1126 = vunpack.c.l.b16 %v650
        %v1127 = vunpack.c.l.b16 %v651
        %v1128 = vunpack.c.l.b16 %v652
        %v1129 = vunpack.c.l.b16 %v653
        %v1130 = vunpack.c.l.b16 %v654
        %v1131 = vunpack.c.l.b16 %v655
        %v1132 = vunpack.c.l.b16 %v656
        %v1133 = vunpack.c.l.b16 %v657
        %v1134 = vunpack.c.l.b16 %v658
        %v1135 = vunpack.c.l.b16 %v659
        %v1136 = vunpack.c.l.b16 %v660
        %v1137 = vunpack.c.l.b16 %v661
        %v1138 = vunpack.c.l.b16 %v662
        %v1139 = vunpack.c.l.b16 %v663
        %v1140 = vunpack.c.l.b16 %v664
        %v1141 = vunpack.c.l.b16 %v665
        %v1142 = vunpack.c.l.b16 %v666
        %v1143 = vunpack.c.l.b16 %v667
        %v1144 = vunpack.c.l.b16 %v668
        %v1145 = vunpack.c.l.b16 %v669
        %v1146 = vunpack.c.l.b16 %v670
        %v1147 = vunpack.c.l.b16 %v671
        %v1148 = vunpack.c.l.b16 %v672
        %v1149 = vunpack.c.l.b16 %v673
        %v1150 = vunpack.c.l.b16 %v674
        %v1151 = vunpack.c.l.b16 %v675
        %v1152 = vunpack.c.l.b16 %v676
        %v1153 = vunpack.c.l.b16 %v677
        %v1154 = vunpack.c.l.b16 %v678
        %v1155 = vunpack.c.l.b16 %v679
        %v1156 = vunpack.c.l.b16 %v680
        %v1157 = vunpack.c.l.b16 %v681
        %v1158 = vunpack.c.l.b16 %v682
        %v1159 = vunpack.c.l.b16 %v683
        %v1160 = vunpack.c.l.b16 %v684
        %v1161 = vunpack.c.l.b16 %v685
        %v1162 = vunpack.c.l.b16 %v686
        %v1163 = vunpack.c.l.b16 %v687
        %v1164 = vunpack.c.l.b16 %v688
        %v1165 = vunpack.c.l.b16 %v689
        %v1166 = vunpack.c.l.b16 %v690
        %v1167 = vunpack.c.l.b16 %v691
        %v1168 = vunpack.c.l.b16 %v692
        %v1169 = vunpack.c.l.b16 %v693
        %v1170 = vunpack.c.l.b16 %v694
        %v1171 = vunpack.c.l.b16 %v695
        %v1172 = vunpack.c.l.b16 %v696
        %v1173 = vunpack.c.l.b16 %v697
        %v1174 = vunpack.c.l.b16 %v698
        %v1175 = vunpack.c.l.b16 %v699
        %v1176 = vunpack.c.l.b16 %v700
        %v1177 = vunpack.c.l.b16 %v701
        %v1178 = vunpack.c.l.b16 %v702
        %v1179 = vunpack.c.l.b16 %v703
        %v1180 = vunpack.c.l.b16 %v704
        %v1181 = vunpack.c.l.b16 %v705
        %v1182 = vunpack.c.l.b16 %v706
        %v1183 = vunpack.c.l.b16 %v707
        %v1184 = vunpack.c.l.b16 %v708
        %v1185 = vunpack.c.l.b16 %v709
        %v1186 = vunpack.c.l.b16 %v710
        %v1187 = vunpack.c.l.b16 %v711
        %v1188 = vunpack.c.l.b16 %v712
        %v1189 = vunpack.c.l.b16 %v713
        %v1190 = vunpack.c.l.b16 %v714
        %v1191 = vunpack.c.l.b16 %v715
        %v1192 = vunpack.c.l.b16 %v716
        %v1193 = vunpack.c.l.b16 %v717
        %v1194 = vunpack.c.l.b16 %v718
        %v1195 = vunpack.c.l.b16 %v719
        %v1196 = vunpack.c.l.b16 %v720
        %v1197 = vunpack.c.l.b16 %v721
        %v1198 = vunpack.c.l.b16 %v722
        %v1199 = vunpack.c.l.b16 %v723
        %v1200 = vunpack.c.l.b16 %v724
        %v1201 = vunpack.c.l.b16 %v725
        %v1202 = vpack.c.b16 %v1059, %v1058
        %v1203 = vpack.c.b16 %v1061, %v1060
        %v1204 = vpack.c.b16 %v1063, %v1062
        %v1205 = vpack.c.b16 %v1065, %v1064
        %v1206 = vpack.c.b16 %v1067, %v1066
        %v1207 = vpack.c.b16 %v1069, %v1068
        %v1208 = vpack.c.b16 %v1071, %v1070
        %v1209 = vpack.c.b16 %v1073, %v1072
        %v1210 = vpack.c.b16 %v1075, %v1074
        %v1211 = vpack.c.b16 %v1077, %v1076
        %v1212 = vpack.c.b16 %v1079, %v1078
        %v1213 = vpack.c.b16 %v1081, %v1080
        %v1214 = vpack.c.b16 %v1083, %v1082
        %v1215 = vpack.c.b16 %v1085, %v1084
        %v1216 = vpack.c.b16 %v1087, %v1086
        %v1217 = vpack.c.b16 %v1089, %v1088
        %v1218 = vpack.c.b16 %v1091, %v1090
        %v1219 = vpack.c.b16 %v1093, %v1092
        %v1220 = vpack.c.b16 %v1095, %v1094
        %v1221 = vpack.c.b16 %v1097, %v1096
        %v1222 = vpack.c.b16 %v1099, %v1098
        %v1223 = vpack.c.b16 %v1101, %v1100
        %v1224 = vpack.c.b16 %v1103, %v1102
        %v1225 = vpack.c.b16 %v1105, %v1104
        %v1226 = vpack.c.b16 %v1107, %v1106
        %v1227 = vpack.c.b16 %v1109, %v1108
        %v1228 = vpack.c.b16 %v1111, %v1110
        %v1229 = vpack.c.b16 %v1113, %v1112
        %v1230 = vpack.c.b16 %v1115, %v1114
        %v1231 = vpack.c.b16 %v1117, %v1116
        %v1232 = vpack.c.b16 %v1119, %v1118
        %v1233 = vpack.c.b16 %v1121, %v1120
        %v1234 = vpack.c.b16 %v1123, %v1122
        %v1235 = vpack.c.b16 %v1125, %v1124
        %v1236 = vpack.c.b16 %v1127, %v1126
        %v1237 = vpack.c.b16 %v1129, %v1128
        %v1238 = vpack.c.b16 %v1131, %v1130
        %v1239 = vpack.c.b16 %v1133, %v1132
        %v1240 = vpack.c.b16 %v1135, %v1134
        %v1241 = vpack.c.b16 %v1137, %v1136
        %v1242 = vpack.c.b16 %v1139, %v1138
        %v1243 = vpack.c.b16 %v1141, %v1140
        %v1244 = vpack.c.b16 %v1143, %v1142
        %v1245 = vpack.c.b16 %v1145, %v1144
        %v1246 = vpack.c.b16 %v1147, %v1146
        %v1247 = vpack.c.b16 %v1149, %v1148
        %v1248 = vpack.c.b16 %v1151, %v1150
        %v1249 = vpack.c.b16 %v1153, %v1152
        %v1250 = vpack.c.b16 %v1155, %v1154
        %v1251 = vpack.c.b16 %v1157, %v1156
        %v1252 = vpack.c.b16 %v1159, %v1158
        %v1253 = vpack.c.b16 %v1161, %v1160
        %v1254 = vpack.c.b16 %v1163, %v1162
        %v1255 = vpack.c.b16 %v1165, %v1164
        %v1256 = vpack.c.b16 %v1167, %v1166
        %v1257 = vpack.c.b16 %v1169, %v1168
        %v1258 = vpack.c.b16 %v1171, %v1170
        %v1259 = vpack.c.b16 %v1173, %v1172
        %v1260 = vpack.c.b16 %v1175, %v1174
        %v1261 = vpack.c.b16 %v1177, %v1176
        %v1262 = vpack.c.b16 %v1179, %v1178
        %v1263 = vpack.c.b16 %v1181, %v1180
        %v1264 = vpack.c.b16 %v1183, %v1182
        %v1265 = vpack.c.b16 %v1185, %v1184
        %v1266 = vpack.c.b16 %v1187, %v1186
        %v1267 = vpack.c.b16 %v1189, %v1188
        %v1268 = vpack.c.b16 %v1191, %v1190
        %v1269 = vpack.c.b16 %v1193, %v1192
        %v1270 = vpack.c.b16 %v1195, %v1194
        %v1271 = vpack.c.b16 %v1197, %v1196
        %v1272 = vpack.c.b16 %v1199, %v1198
        %v1273 = vpack.c.b16 %v1201, %v1200
        %1346 = vmatpush.bf16.msra.mxu0 %v1209
        %1347 = vmatpush.bf16.msra.mxu0 %v1208
        %1348 = vmatpush.bf16.msra.mxu0 %v1207
        %1349 = vmatpush.bf16.msra.mxu0 %v1206
        %1350 = vmatpush.bf16.msra.mxu0 %v1205
        %1351 = vmatpush.bf16.msra.mxu0 %v1204
        %1352 = vmatpush.bf16.msra.mxu0 %v1203
        %1353 = vmatpush.bf16.msra.mxu0 %v1202
        %1354 = vmatmul.bf16.gmra.mxu0 %v842
        %v1355 = vpop.f32.mrf.mxu0
        %v1356 = vadd.f32 %v728, %v1355
        %v1357 = vpop.f32.mrf.mxu0
        %v1358 = vadd.f32 %v728, %v1357
        %1359 = vmatmul.bf16.gmra.mxu0 %v851
        %v1360 = vpop.f32.mrf.mxu0
        %v1361 = vadd.f32 %v728, %v1360
        %v1362 = vpop.f32.mrf.mxu0
        %v1363 = vadd.f32 %v728, %v1362
        %1364 = vmatmul.bf16.gmra.mxu0 %v860
        %v1365 = vpop.f32.mrf.mxu0
        %v1366 = vadd.f32 %v728, %v1365
        %v1367 = vpop.f32.mrf.mxu0
        %v1368 = vadd.f32 %v728, %v1367
        %1369 = vmatmul.bf16.gmra.mxu0 %v869
        %v1370 = vpop.f32.mrf.mxu0
        %v1371 = vadd.f32 %v728, %v1370
        %v1372 = vpop.f32.mrf.mxu0
        %v1373 = vadd.f32 %v728, %v1372
        %1374 = vdwg.mxu0
        %1375 = vmatpush.bf16.msra.mxu0 %v1217
        %1376 = vmatpush.bf16.msra.mxu0 %v1216
        %1377 = vmatpush.bf16.msra.mxu0 %v1215
        %1378 = vmatpush.bf16.msra.mxu0 %v1214
        %1379 = vmatpush.bf16.msra.mxu0 %v1213
        %1380 = vmatpush.bf16.msra.mxu0 %v1212
        %1381 = vmatpush.bf16.msra.mxu0 %v1211
        %1382 = vmatpush.bf16.msra.mxu0 %v1210
        %1383 = vmatmul.bf16.gmra.mxu0 %v843
        %v1384 = vpop.f32.mrf.mxu0
        %v1385 = vadd.f32 %v1356, %v1384
        %v1386 = vpop.f32.mrf.mxu0
        %v1387 = vadd.f32 %v1358, %v1386
        %1388 = vmatmul.bf16.gmra.mxu0 %v852
        %v1389 = vpop.f32.mrf.mxu0
        %v1390 = vadd.f32 %v1361, %v1389
        %v1391 = vpop.f32.mrf.mxu0
        %v1392 = vadd.f32 %v1363, %v1391
        %1393 = vmatmul.bf16.gmra.mxu0 %v861
        %v1394 = vpop.f32.mrf.mxu0
        %v1395 = vadd.f32 %v1366, %v1394
        %v1396 = vpop.f32.mrf.mxu0
        %v1397 = vadd.f32 %v1368, %v1396
        %1398 = vmatmul.bf16.gmra.mxu0 %v870
        %v1399 = vpop.f32.mrf.mxu0
        %v1400 = vadd.f32 %v1371, %v1399
        %v1401 = vpop.f32.mrf.mxu0
        %v1402 = vadd.f32 %v1373, %v1401
        %1403 = vdwg.mxu0
        %1404 = vmatpush.bf16.msra.mxu0 %v1225
        %1405 = vmatpush.bf16.msra.mxu0 %v1224
        %1406 = vmatpush.bf16.msra.mxu0 %v1223
        %1407 = vmatpush.bf16.msra.mxu0 %v1222
        %1408 = vmatpush.bf16.msra.mxu0 %v1221
        %1409 = vmatpush.bf16.msra.mxu0 %v1220
        %1410 = vmatpush.bf16.msra.mxu0 %v1219
        %1411 = vmatpush.bf16.msra.mxu0 %v1218
        %1412 = vmatmul.bf16.gmra.mxu0 %v844
        %v1413 = vpop.f32.mrf.mxu0
        %v1414 = vadd.f32 %v1385, %v1413
        %v1415 = vpop.f32.mrf.mxu0
        %v1416 = vadd.f32 %v1387, %v1415
        %1417 = vmatmul.bf16.gmra.mxu0 %v853
        %v1418 = vpop.f32.mrf.mxu0
        %v1419 = vadd.f32 %v1390, %v1418
        %v1420 = vpop.f32.mrf.mxu0
        %v1421 = vadd.f32 %v1392, %v1420
        %1422 = vmatmul.bf16.gmra.mxu0 %v862
        %v1423 = vpop.f32.mrf.mxu0
        %v1424 = vadd.f32 %v1395, %v1423
        %v1425 = vpop.f32.mrf.mxu0
        %v1426 = vadd.f32 %v1397, %v1425
        %1427 = vmatmul.bf16.gmra.mxu0 %v871
        %v1428 = vpop.f32.mrf.mxu0
        %v1429 = vadd.f32 %v1400, %v1428
        %v1430 = vpop.f32.mrf.mxu0
        %v1431 = vadd.f32 %v1402, %v1430
        %1432 = vdwg.mxu0
        %1433 = vmatpush.bf16.msra.mxu0 %v1233
        %1434 = vmatpush.bf16.msra.mxu0 %v1232
        %1435 = vmatpush.bf16.msra.mxu0 %v1231
        %1436 = vmatpush.bf16.msra.mxu0 %v1230
        %1437 = vmatpush.bf16.msra.mxu0 %v1229
        %1438 = vmatpush.bf16.msra.mxu0 %v1228
        %1439 = vmatpush.bf16.msra.mxu0 %v1227
        %1440 = vmatpush.bf16.msra.mxu0 %v1226
        %1441 = vmatmul.bf16.gmra.mxu0 %v845
        %v1442 = vpop.f32.mrf.mxu0
        %v1443 = vadd.f32 %v1414, %v1442
        %v1444 = vpop.f32.mrf.mxu0
        %v1445 = vadd.f32 %v1416, %v1444
        %1446 = vmatmul.bf16.gmra.mxu0 %v854
        %v1447 = vpop.f32.mrf.mxu0
        %v1448 = vadd.f32 %v1419, %v1447
        %v1449 = vpop.f32.mrf.mxu0
        %v1450 = vadd.f32 %v1421, %v1449
        %1451 = vmatmul.bf16.gmra.mxu0 %v863
        %v1452 = vpop.f32.mrf.mxu0
        %v1453 = vadd.f32 %v1424, %v1452
        %v1454 = vpop.f32.mrf.mxu0
        %v1455 = vadd.f32 %v1426, %v1454
        %1456 = vmatmul.bf16.gmra.mxu0 %v872
        %v1457 = vpop.f32.mrf.mxu0
        %v1458 = vadd.f32 %v1429, %v1457
        %v1459 = vpop.f32.mrf.mxu0
        %v1460 = vadd.f32 %v1431, %v1459
        %1461 = vdwg.mxu0
        %1462 = vmatpush.bf16.msra.mxu0 %v1241
        %1463 = vmatpush.bf16.msra.mxu0 %v1240
        %1464 = vmatpush.bf16.msra.mxu0 %v1239
        %1465 = vmatpush.bf16.msra.mxu0 %v1238
        %1466 = vmatpush.bf16.msra.mxu0 %v1237
        %1467 = vmatpush.bf16.msra.mxu0 %v1236
        %1468 = vmatpush.bf16.msra.mxu0 %v1235
        %1469 = vmatpush.bf16.msra.mxu0 %v1234
        %1470 = vmatmul.bf16.gmra.mxu0 %v846
        %v1471 = vpop.f32.mrf.mxu0
        %v1472 = vadd.f32 %v1443, %v1471
        %v1473 = vpop.f32.mrf.mxu0
        %v1474 = vadd.f32 %v1445, %v1473
        %1475 = vmatmul.bf16.gmra.mxu0 %v855
        %v1476 = vpop.f32.mrf.mxu0
        %v1477 = vadd.f32 %v1448, %v1476
        %v1478 = vpop.f32.mrf.mxu0
        %v1479 = vadd.f32 %v1450, %v1478
        %1480 = vmatmul.bf16.gmra.mxu0 %v864
        %v1481 = vpop.f32.mrf.mxu0
        %v1482 = vadd.f32 %v1453, %v1481
        %v1483 = vpop.f32.mrf.mxu0
        %v1484 = vadd.f32 %v1455, %v1483
        %1485 = vmatmul.bf16.gmra.mxu0 %v873
        %v1486 = vpop.f32.mrf.mxu0
        %v1487 = vadd.f32 %v1458, %v1486
        %v1488 = vpop.f32.mrf.mxu0
        %v1489 = vadd.f32 %v1460, %v1488
        %1490 = vdwg.mxu0
        %1491 = vmatpush.bf16.msra.mxu0 %v1249
        %1492 = vmatpush.bf16.msra.mxu0 %v1248
        %1493 = vmatpush.bf16.msra.mxu0 %v1247
        %1494 = vmatpush.bf16.msra.mxu0 %v1246
        %1495 = vmatpush.bf16.msra.mxu0 %v1245
        %1496 = vmatpush.bf16.msra.mxu0 %v1244
        %1497 = vmatpush.bf16.msra.mxu0 %v1243
        %1498 = vmatpush.bf16.msra.mxu0 %v1242
        %1499 = vmatmul.bf16.gmra.mxu0 %v847
        %v1500 = vpop.f32.mrf.mxu0
        %v1501 = vadd.f32 %v1472, %v1500
        %v1502 = vpop.f32.mrf.mxu0
        %v1503 = vadd.f32 %v1474, %v1502
        %1504 = vmatmul.bf16.gmra.mxu0 %v856
        %v1505 = vpop.f32.mrf.mxu0
        %v1506 = vadd.f32 %v1477, %v1505
        %v1507 = vpop.f32.mrf.mxu0
        %v1508 = vadd.f32 %v1479, %v1507
        %1509 = vmatmul.bf16.gmra.mxu0 %v865
        %v1510 = vpop.f32.mrf.mxu0
        %v1511 = vadd.f32 %v1482, %v1510
        %v1512 = vpop.f32.mrf.mxu0
        %v1513 = vadd.f32 %v1484, %v1512
        %1514 = vmatmul.bf16.gmra.mxu0 %v874
        %v1515 = vpop.f32.mrf.mxu0
        %v1516 = vadd.f32 %v1487, %v1515
        %v1517 = vpop.f32.mrf.mxu0
        %v1518 = vadd.f32 %v1489, %v1517
        %1519 = vdwg.mxu0
        %1520 = vmatpush.bf16.msra.mxu0 %v1257
        %1521 = vmatpush.bf16.msra.mxu0 %v1256
        %1522 = vmatpush.bf16.msra.mxu0 %v1255
        %1523 = vmatpush.bf16.msra.mxu0 %v1254
        %1524 = vmatpush.bf16.msra.mxu0 %v1253
        %1525 = vmatpush.bf16.msra.mxu0 %v1252
        %1526 = vmatpush.bf16.msra.mxu0 %v1251
        %1527 = vmatpush.bf16.msra.mxu0 %v1250
        %1528 = vmatmul.bf16.gmra.mxu0 %v848
        %v1529 = vpop.f32.mrf.mxu0
        %v1530 = vadd.f32 %v1501, %v1529
        %v1531 = vpop.f32.mrf.mxu0
        %v1532 = vadd.f32 %v1503, %v1531
        %1533 = vmatmul.bf16.gmra.mxu0 %v857
        %v1534 = vpop.f32.mrf.mxu0
        %v1535 = vadd.f32 %v1506, %v1534
        %v1536 = vpop.f32.mrf.mxu0
        %v1537 = vadd.f32 %v1508, %v1536
        %1538 = vmatmul.bf16.gmra.mxu0 %v866
        %v1539 = vpop.f32.mrf.mxu0
        %v1540 = vadd.f32 %v1511, %v1539
        %v1541 = vpop.f32.mrf.mxu0
        %v1542 = vadd.f32 %v1513, %v1541
        %1543 = vmatmul.bf16.gmra.mxu0 %v875
        %v1544 = vpop.f32.mrf.mxu0
        %v1545 = vadd.f32 %v1516, %v1544
        %v1546 = vpop.f32.mrf.mxu0
        %v1547 = vadd.f32 %v1518, %v1546
        %1548 = vdwg.mxu0
        %1549 = vmatpush.bf16.msra.mxu0 %v1265
        %1550 = vmatpush.bf16.msra.mxu0 %v1264
        %1551 = vmatpush.bf16.msra.mxu0 %v1263
        %1552 = vmatpush.bf16.msra.mxu0 %v1262
        %1553 = vmatpush.bf16.msra.mxu0 %v1261
        %1554 = vmatpush.bf16.msra.mxu0 %v1260
        %1555 = vmatpush.bf16.msra.mxu0 %v1259
        %1556 = vmatpush.bf16.msra.mxu0 %v1258
        %1557 = vmatmul.bf16.gmra.mxu0 %v849
        %v1558 = vpop.f32.mrf.mxu0
        %v1559 = vadd.f32 %v1530, %v1558
        %v1560 = vpop.f32.mrf.mxu0
        %v1561 = vadd.f32 %v1532, %v1560
        %1562 = vmatmul.bf16.gmra.mxu0 %v858
        %v1563 = vpop.f32.mrf.mxu0
        %v1564 = vadd.f32 %v1535, %v1563
        %v1565 = vpop.f32.mrf.mxu0
        %v1566 = vadd.f32 %v1537, %v1565
        %1567 = vmatmul.bf16.gmra.mxu0 %v867
        %v1568 = vpop.f32.mrf.mxu0
        %v1569 = vadd.f32 %v1540, %v1568
        %v1570 = vpop.f32.mrf.mxu0
        %v1571 = vadd.f32 %v1542, %v1570
        %1572 = vmatmul.bf16.gmra.mxu0 %v876
        %v1573 = vpop.f32.mrf.mxu0
        %v1574 = vadd.f32 %v1545, %v1573
        %v1575 = vpop.f32.mrf.mxu0
        %v1576 = vadd.f32 %v1547, %v1575
        %1577 = vdwg.mxu0
        %1578 = vmatpush.bf16.msra.mxu0 %v1273
        %1579 = vmatpush.bf16.msra.mxu0 %v1272
        %1580 = vmatpush.bf16.msra.mxu0 %v1271
        %1581 = vmatpush.bf16.msra.mxu0 %v1270
        %1582 = vmatpush.bf16.msra.mxu0 %v1269
        %1583 = vmatpush.bf16.msra.mxu0 %v1268
        %1584 = vmatpush.bf16.msra.mxu0 %v1267
        %1585 = vmatpush.bf16.msra.mxu0 %v1266
        %1586 = vmatmul.bf16.gmra.mxu0 %v850
        %v1587 = vpop.f32.mrf.mxu0
        %v1588 = vadd.f32 %v1559, %v1587
        %v1589 = vpop.f32.mrf.mxu0
        %v1590 = vadd.f32 %v1561, %v1589
        %1591 = vmatmul.bf16.gmra.mxu0 %v859
        %v1592 = vpop.f32.mrf.mxu0
        %v1593 = vadd.f32 %v1564, %v1592
        %v1594 = vpop.f32.mrf.mxu0
        %v1595 = vadd.f32 %v1566, %v1594
        %1596 = vmatmul.bf16.gmra.mxu0 %v868
        %v1597 = vpop.f32.mrf.mxu0
        %v1598 = vadd.f32 %v1569, %v1597
        %v1599 = vpop.f32.mrf.mxu0
        %v1600 = vadd.f32 %v1571, %v1599
        %1601 = vmatmul.bf16.gmra.mxu0 %v877
        %v1602 = vpop.f32.mrf.mxu0
        %v1603 = vadd.f32 %v1574, %v1602
        %v1604 = vpop.f32.mrf.mxu0
        %v1605 = vadd.f32 %v1576, %v1604
        %1606 = vdwg.mxu0
        %vm1607 = vcmp.ge.f32.partialorder %v1588, 0.0
        %vm1608 = vcmp.ge.f32.partialorder %v1590, 0.0
        %vm1609 = vcmp.ge.f32.partialorder %v1593, 0.0
        %vm1610 = vcmp.ge.f32.partialorder %v1595, 0.0
        %vm1611 = vcmp.ge.f32.partialorder %v1598, 0.0
        %vm1612 = vcmp.ge.f32.partialorder %v1600, 0.0
        %vm1613 = vcmp.ge.f32.partialorder %v1603, 0.0
        %vm1614 = vcmp.ge.f32.partialorder %v1605, 0.0
        %v1615 = vmul.f32 %v1588, 0.1
        %v1616 = vmul.f32 %v1590, 0.1
        %v1617 = vmul.f32 %v1593, 0.1
        %v1618 = vmul.f32 %v1595, 0.1
        %v1619 = vmul.f32 %v1598, 0.1
        %v1620 = vmul.f32 %v1600, 0.1
        %v1621 = vmul.f32 %v1603, 0.1
        %v1622 = vmul.f32 %v1605, 0.1
        %v1623 = vsel %vm1607, %v1588, %v1615
        %v1624 = vsel %vm1608, %v1590, %v1616
        %v1625 = vsel %vm1609, %v1593, %v1617
        %v1626 = vsel %vm1610, %v1595, %v1618
        %v1627 = vsel %vm1611, %v1598, %v1619
        %v1628 = vsel %vm1612, %v1600, %v1620
        %v1629 = vsel %vm1613, %v1603, %v1621
        %v1630 = vsel %vm1614, %v1605, %v1622
        %s1631 = scalar_lea.vmem [#allocation3], 16
        %1632 = vst [vmem:[%s1631 + $0x1] sm:$0xff] %v1623
        %1633 = vst [vmem:[%s1631 + $0x11] sm:$0xff] %v1624
        %1634 = vst [vmem:[%s1631 + $0x21] sm:$0xff] %v1625
        %1635 = vst [vmem:[%s1631 + $0x31] sm:$0xff] %v1626
        %1636 = vst [vmem:[%s1631 + $0x41] sm:$0xff] %v1627
        %1637 = vst [vmem:[%s1631 + $0x51] sm:$0xff] %v1628
        %1638 = vst [vmem:[%s1631 + $0x61] sm:$0xff] %v1629
        %1639 = vst [vmem:[%s1631 + $0x71] sm:$0xff] %v1630
        %v1640 = vld [vmem:[#allocation3] sm:$0xff]
        %v1641 = vld [vmem:[#allocation3 + $0x10] sm:$0xff]
        %v1642 = vld [vmem:[#allocation3 + $0x20] sm:$0xff]
        %v1643 = vld [vmem:[#allocation3 + $0x30] sm:$0xff]
        %v1644 = vld [vmem:[#allocation3 + $0x40] sm:$0xff]
        %v1645 = vld [vmem:[#allocation3 + $0x50] sm:$0xff]
        %v1646 = vld [vmem:[#allocation3 + $0x60] sm:$0xff]
        %v1647 = vld [vmem:[#allocation3 + $0x70] sm:$0xff]
        %v1648 = vpack.c.bf16 %v1640, %v1640
        %v1649 = vpack.c.bf16 %v1641, %v1641
        %v1650 = vpack.c.bf16 %v1642, %v1642
        %v1651 = vpack.c.bf16 %v1643, %v1643
        %v1652 = vpack.c.bf16 %v1644, %v1644
        %v1653 = vpack.c.bf16 %v1645, %v1645
        %v1654 = vpack.c.bf16 %v1646, %v1646
        %v1655 = vpack.c.bf16 %v1647, %v1647
        %1656 = vst [vmem:[#allocation5] sm:$0xf] %v1648
        %1657 = vst [vmem:[#allocation5 + $0x28] sm:$0xf] %v1649
        %1658 = vst [vmem:[#allocation5 + $0x50] sm:$0xf] %v1650
        %1659 = vst [vmem:[#allocation5 + $0x78] sm:$0xf] %v1651
        %1660 = vst [vmem:[#allocation5 + $0xa0] sm:$0xf] %v1652
        %1661 = vst [vmem:[#allocation5 + $0xc8] sm:$0xf] %v1653
        %1662 = vst [vmem:[#allocation5 + $0xf0] sm:$0xf] %v1654
        %1663 = vst [vmem:[#allocation5 + $0x118] sm:$0xf] %v1655
        %v1664 = vld [vmem:[#allocation3 + $0x1] sm:$0xff]
        %v1665 = vld [vmem:[#allocation3 + $0x11] sm:$0xff]
        %v1666 = vld [vmem:[#allocation3 + $0x21] sm:$0xff]
        %v1667 = vld [vmem:[#allocation3 + $0x31] sm:$0xff]
        %v1668 = vld [vmem:[#allocation3 + $0x41] sm:$0xff]
        %v1669 = vld [vmem:[#allocation3 + $0x51] sm:$0xff]
        %v1670 = vld [vmem:[#allocation3 + $0x61] sm:$0xff]
        %v1671 = vld [vmem:[#allocation3 + $0x71] sm:$0xff]
        %v1672 = vpack.c.bf16 %v1664, %v1664
        %v1673 = vpack.c.bf16 %v1665, %v1665
        %v1674 = vpack.c.bf16 %v1666, %v1666
        %v1675 = vpack.c.bf16 %v1667, %v1667
        %v1676 = vpack.c.bf16 %v1668, %v1668
        %v1677 = vpack.c.bf16 %v1669, %v1669
        %v1678 = vpack.c.bf16 %v1670, %v1670
        %v1679 = vpack.c.bf16 %v1671, %v1671
        %1680 = vst [vmem:[#allocation5 + $0x4] sm:$0xf] %v1672
        %1681 = vst [vmem:[#allocation5 + $0x2c] sm:$0xf] %v1673
        %1682 = vst [vmem:[#allocation5 + $0x54] sm:$0xf] %v1674
        %1683 = vst [vmem:[#allocation5 + $0x7c] sm:$0xf] %v1675
        %1684 = vst [vmem:[#allocation5 + $0xa4] sm:$0xf] %v1676
        %1685 = vst [vmem:[#allocation5 + $0xcc] sm:$0xf] %v1677
        %1686 = vst [vmem:[#allocation5 + $0xf4] sm:$0xf] %v1678
        %1687 = vst [vmem:[#allocation5 + $0x11c] sm:$0xf] %v1679
        %v1688 = vld [vmem:[#allocation3 + $0x2] sm:$0xff]
        %v1689 = vld [vmem:[#allocation3 + $0x12] sm:$0xff]
        %v1690 = vld [vmem:[#allocation3 + $0x22] sm:$0xff]
        %v1691 = vld [vmem:[#allocation3 + $0x32] sm:$0xff]
        %v1692 = vld [vmem:[#allocation3 + $0x42] sm:$0xff]
        %v1693 = vld [vmem:[#allocation3 + $0x52] sm:$0xff]
        %v1694 = vld [vmem:[#allocation3 + $0x62] sm:$0xff]
        %v1695 = vld [vmem:[#allocation3 + $0x72] sm:$0xff]
        %v1696 = vpack.c.bf16 %v1688, %v1688
        %v1697 = vpack.c.bf16 %v1689, %v1689
        %v1698 = vpack.c.bf16 %v1690, %v1690
        %v1699 = vpack.c.bf16 %v1691, %v1691
        %v1700 = vpack.c.bf16 %v1692, %v1692
        %v1701 = vpack.c.bf16 %v1693, %v1693
        %v1702 = vpack.c.bf16 %v1694, %v1694
        %v1703 = vpack.c.bf16 %v1695, %v1695
        %1704 = vst [vmem:[#allocation5 + $0x8] sm:$0xf] %v1696
        %1705 = vst [vmem:[#allocation5 + $0x30] sm:$0xf] %v1697
        %1706 = vst [vmem:[#allocation5 + $0x58] sm:$0xf] %v1698
        %1707 = vst [vmem:[#allocation5 + $0x80] sm:$0xf] %v1699
        %1708 = vst [vmem:[#allocation5 + $0xa8] sm:$0xf] %v1700
        %1709 = vst [vmem:[#allocation5 + $0xd0] sm:$0xf] %v1701
        %1710 = vst [vmem:[#allocation5 + $0xf8] sm:$0xf] %v1702
        %1711 = vst [vmem:[#allocation5 + $0x120] sm:$0xf] %v1703
        %v1712 = vld [vmem:[%s1631] sm:$0xff]
        %v1713 = vld [vmem:[%s1631 + $0x10] sm:$0xff]
        %v1714 = vld [vmem:[%s1631 + $0x20] sm:$0xff]
        %v1715 = vld [vmem:[%s1631 + $0x30] sm:$0xff]
        %v1716 = vld [vmem:[%s1631 + $0x40] sm:$0xff]
        %v1717 = vld [vmem:[%s1631 + $0x50] sm:$0xff]
        %v1718 = vld [vmem:[%s1631 + $0x60] sm:$0xff]
        %v1719 = vld [vmem:[%s1631 + $0x70] sm:$0xff]
        %v1720 = vpack.c.bf16 %v1712, %v1712
        %v1721 = vpack.c.bf16 %v1713, %v1713
        %v1722 = vpack.c.bf16 %v1714, %v1714
        %v1723 = vpack.c.bf16 %v1715, %v1715
        %v1724 = vpack.c.bf16 %v1716, %v1716
        %v1725 = vpack.c.bf16 %v1717, %v1717
        %v1726 = vpack.c.bf16 %v1718, %v1718
        %v1727 = vpack.c.bf16 %v1719, %v1719
        %1728 = vst [vmem:[#allocation5 + $0xc] sm:$0xf] %v1720
        %1729 = vst [vmem:[#allocation5 + $0x34] sm:$0xf] %v1721
        %1730 = vst [vmem:[#allocation5 + $0x5c] sm:$0xf] %v1722
        %1731 = vst [vmem:[#allocation5 + $0x84] sm:$0xf] %v1723
        %1732 = vst [vmem:[#allocation5 + $0xac] sm:$0xf] %v1724
        %1733 = vst [vmem:[#allocation5 + $0xd4] sm:$0xf] %v1725
        %1734 = vst [vmem:[#allocation5 + $0xfc] sm:$0xf] %v1726
        %1735 = vst [vmem:[#allocation5 + $0x124] sm:$0xf] %v1727
        %v1736 = vld [vmem:[%s1631 + $0x1] sm:$0xff]
        %v1737 = vld [vmem:[%s1631 + $0x11] sm:$0xff]
        %v1738 = vld [vmem:[%s1631 + $0x21] sm:$0xff]
        %v1739 = vld [vmem:[%s1631 + $0x31] sm:$0xff]
        %v1740 = vld [vmem:[%s1631 + $0x41] sm:$0xff]
        %v1741 = vld [vmem:[%s1631 + $0x51] sm:$0xff]
        %v1742 = vld [vmem:[%s1631 + $0x61] sm:$0xff]
        %v1743 = vld [vmem:[%s1631 + $0x71] sm:$0xff]
        %v1744 = vpack.c.bf16 %v1736, %v1736
        %v1745 = vpack.c.bf16 %v1737, %v1737
        %v1746 = vpack.c.bf16 %v1738, %v1738
        %v1747 = vpack.c.bf16 %v1739, %v1739
        %v1748 = vpack.c.bf16 %v1740, %v1740
        %v1749 = vpack.c.bf16 %v1741, %v1741
        %v1750 = vpack.c.bf16 %v1742, %v1742
        %v1751 = vpack.c.bf16 %v1743, %v1743
        %1752 = vst [vmem:[#allocation5 + $0x10] sm:$0xf] %v1744
        %1753 = vst [vmem:[#allocation5 + $0x38] sm:$0xf] %v1745
        %1754 = vst [vmem:[#allocation5 + $0x60] sm:$0xf] %v1746
        %1755 = vst [vmem:[#allocation5 + $0x88] sm:$0xf] %v1747
        %1756 = vst [vmem:[#allocation5 + $0xb0] sm:$0xf] %v1748
        %1757 = vst [vmem:[#allocation5 + $0xd8] sm:$0xf] %v1749
        %1758 = vst [vmem:[#allocation5 + $0x100] sm:$0xf] %v1750
        %1759 = vst [vmem:[#allocation5 + $0x128] sm:$0xf] %v1751
        %v1760 = vld [vmem:[%s1631 + $0x2] sm:$0xff]
        %v1761 = vld [vmem:[%s1631 + $0x12] sm:$0xff]
        %v1762 = vld [vmem:[%s1631 + $0x22] sm:$0xff]
        %v1763 = vld [vmem:[%s1631 + $0x32] sm:$0xff]
        %v1764 = vld [vmem:[%s1631 + $0x42] sm:$0xff]
        %v1765 = vld [vmem:[%s1631 + $0x52] sm:$0xff]
        %v1766 = vld [vmem:[%s1631 + $0x62] sm:$0xff]
        %v1767 = vld [vmem:[%s1631 + $0x72] sm:$0xff]
        %v1768 = vpack.c.bf16 %v1760, %v1760
        %v1769 = vpack.c.bf16 %v1761, %v1761
        %v1770 = vpack.c.bf16 %v1762, %v1762
        %v1771 = vpack.c.bf16 %v1763, %v1763
        %v1772 = vpack.c.bf16 %v1764, %v1764
        %v1773 = vpack.c.bf16 %v1765, %v1765
        %v1774 = vpack.c.bf16 %v1766, %v1766
        %v1775 = vpack.c.bf16 %v1767, %v1767
        %1776 = vst [vmem:[#allocation5 + $0x14] sm:$0xf] %v1768
        %1777 = vst [vmem:[#allocation5 + $0x3c] sm:$0xf] %v1769
        %1778 = vst [vmem:[#allocation5 + $0x64] sm:$0xf] %v1770
        %1779 = vst [vmem:[#allocation5 + $0x8c] sm:$0xf] %v1771
        %1780 = vst [vmem:[#allocation5 + $0xb4] sm:$0xf] %v1772
        %1781 = vst [vmem:[#allocation5 + $0xdc] sm:$0xf] %v1773
        %1782 = vst [vmem:[#allocation5 + $0x104] sm:$0xf] %v1774
        %1783 = vst [vmem:[#allocation5 + $0x12c] sm:$0xf] %v1775
        %s1784 = scalar_lea.vmem [#allocation3], 32
        %v1785 = vld [vmem:[%s1784] sm:$0xff]
        %v1786 = vld [vmem:[%s1784 + $0x10] sm:$0xff]
        %v1787 = vld [vmem:[%s1784 + $0x20] sm:$0xff]
        %v1788 = vld [vmem:[%s1784 + $0x30] sm:$0xff]
        %v1789 = vld [vmem:[%s1784 + $0x40] sm:$0xff]
        %v1790 = vld [vmem:[%s1784 + $0x50] sm:$0xff]
        %v1791 = vld [vmem:[%s1784 + $0x60] sm:$0xff]
        %v1792 = vld [vmem:[%s1784 + $0x70] sm:$0xff]
        %v1793 = vpack.c.bf16 %v1785, %v1785
        %v1794 = vpack.c.bf16 %v1786, %v1786
        %v1795 = vpack.c.bf16 %v1787, %v1787
        %v1796 = vpack.c.bf16 %v1788, %v1788
        %v1797 = vpack.c.bf16 %v1789, %v1789
        %v1798 = vpack.c.bf16 %v1790, %v1790
        %v1799 = vpack.c.bf16 %v1791, %v1791
        %v1800 = vpack.c.bf16 %v1792, %v1792
        %1801 = vst [vmem:[#allocation5 + $0x18] sm:$0xf] %v1793
        %1802 = vst [vmem:[#allocation5 + $0x40] sm:$0xf] %v1794
        %1803 = vst [vmem:[#allocation5 + $0x68] sm:$0xf] %v1795
        %1804 = vst [vmem:[#allocation5 + $0x90] sm:$0xf] %v1796
        %1805 = vst [vmem:[#allocation5 + $0xb8] sm:$0xf] %v1797
        %1806 = vst [vmem:[#allocation5 + $0xe0] sm:$0xf] %v1798
        %1807 = vst [vmem:[#allocation5 + $0x108] sm:$0xf] %v1799
        %1808 = vst [vmem:[#allocation5 + $0x130] sm:$0xf] %v1800
        %v1809 = vld [vmem:[%s1784 + $0x1] sm:$0xff]
        %v1810 = vld [vmem:[%s1784 + $0x11] sm:$0xff]
        %v1811 = vld [vmem:[%s1784 + $0x21] sm:$0xff]
        %v1812 = vld [vmem:[%s1784 + $0x31] sm:$0xff]
        %v1813 = vld [vmem:[%s1784 + $0x41] sm:$0xff]
        %v1814 = vld [vmem:[%s1784 + $0x51] sm:$0xff]
        %v1815 = vld [vmem:[%s1784 + $0x61] sm:$0xff]
        %v1816 = vld [vmem:[%s1784 + $0x71] sm:$0xff]
        %v1817 = vpack.c.bf16 %v1809, %v1809
        %v1818 = vpack.c.bf16 %v1810, %v1810
        %v1819 = vpack.c.bf16 %v1811, %v1811
        %v1820 = vpack.c.bf16 %v1812, %v1812
        %v1821 = vpack.c.bf16 %v1813, %v1813
        %v1822 = vpack.c.bf16 %v1814, %v1814
        %v1823 = vpack.c.bf16 %v1815, %v1815
        %v1824 = vpack.c.bf16 %v1816, %v1816
        %1825 = vst [vmem:[#allocation5 + $0x1c] sm:$0xf] %v1817
        %1826 = vst [vmem:[#allocation5 + $0x44] sm:$0xf] %v1818
        %1827 = vst [vmem:[#allocation5 + $0x6c] sm:$0xf] %v1819
        %1828 = vst [vmem:[#allocation5 + $0x94] sm:$0xf] %v1820
        %1829 = vst [vmem:[#allocation5 + $0xbc] sm:$0xf] %v1821
        %1830 = vst [vmem:[#allocation5 + $0xe4] sm:$0xf] %v1822
        %1831 = vst [vmem:[#allocation5 + $0x10c] sm:$0xf] %v1823
        %1832 = vst [vmem:[#allocation5 + $0x134] sm:$0xf] %v1824
        %v1833 = vld [vmem:[%s1784 + $0x2] sm:$0xff]
        %v1834 = vld [vmem:[%s1784 + $0x12] sm:$0xff]
        %v1835 = vld [vmem:[%s1784 + $0x22] sm:$0xff]
        %v1836 = vld [vmem:[%s1784 + $0x32] sm:$0xff]
        %v1837 = vld [vmem:[%s1784 + $0x42] sm:$0xff]
        %v1838 = vld [vmem:[%s1784 + $0x52] sm:$0xff]
        %v1839 = vld [vmem:[%s1784 + $0x62] sm:$0xff]
        %v1840 = vld [vmem:[%s1784 + $0x72] sm:$0xff]
        %v1841 = vpack.c.bf16 %v1833, %v1833
        %v1842 = vpack.c.bf16 %v1834, %v1834
        %v1843 = vpack.c.bf16 %v1835, %v1835
        %v1844 = vpack.c.bf16 %v1836, %v1836
        %v1845 = vpack.c.bf16 %v1837, %v1837
        %v1846 = vpack.c.bf16 %v1838, %v1838
        %v1847 = vpack.c.bf16 %v1839, %v1839
        %v1848 = vpack.c.bf16 %v1840, %v1840
        %1849 = vst [vmem:[#allocation5 + $0x20] sm:$0xf] %v1841
        %1850 = vst [vmem:[#allocation5 + $0x48] sm:$0xf] %v1842
        %1851 = vst [vmem:[#allocation5 + $0x70] sm:$0xf] %v1843
        %1852 = vst [vmem:[#allocation5 + $0x98] sm:$0xf] %v1844
        %1853 = vst [vmem:[#allocation5 + $0xc0] sm:$0xf] %v1845
        %1854 = vst [vmem:[#allocation5 + $0xe8] sm:$0xf] %v1846
        %1855 = vst [vmem:[#allocation5 + $0x110] sm:$0xf] %v1847
        %1856 = vst [vmem:[#allocation5 + $0x138] sm:$0xf] %v1848
        %v1857 = vld [vmem:[#allocation5] sm:$0xff]
        %v1858 = vld [vmem:[#allocation5 + $0x8] sm:$0xff]
        %v1859 = vld [vmem:[#allocation5 + $0x10] sm:$0xff]
        %v1860 = vld [vmem:[#allocation5 + $0x18] sm:$0xff]
        %v1861 = vld [vmem:[#allocation5 + $0x20] sm:$0xff]
        %v1862 = vld [vmem:[#allocation5 + $0x28] sm:$0xff]
        %v1863 = vld [vmem:[#allocation5 + $0x30] sm:$0xff]
        %v1864 = vld [vmem:[#allocation5 + $0x38] sm:$0xff]
        %v1865 = vld [vmem:[#allocation5 + $0x40] sm:$0xff]
        %v1866 = vld [vmem:[#allocation5 + $0x48] sm:$0xff]
        %v1867 = vld [vmem:[#allocation5 + $0x50] sm:$0xff]
        %v1868 = vld [vmem:[#allocation5 + $0x58] sm:$0xff]
        %v1869 = vld [vmem:[#allocation5 + $0x60] sm:$0xff]
        %v1870 = vld [vmem:[#allocation5 + $0x68] sm:$0xff]
        %v1871 = vld [vmem:[#allocation5 + $0x70] sm:$0xff]
        %v1872 = vld [vmem:[#allocation5 + $0x78] sm:$0xff]
        %v1873 = vld [vmem:[#allocation5 + $0x80] sm:$0xff]
        %v1874 = vld [vmem:[#allocation5 + $0x88] sm:$0xff]
        %v1875 = vld [vmem:[#allocation5 + $0x90] sm:$0xff]
        %v1876 = vld [vmem:[#allocation5 + $0x98] sm:$0xff]
        %v1877 = vld [vmem:[#allocation5 + $0xa0] sm:$0xff]
        %v1878 = vld [vmem:[#allocation5 + $0xa8] sm:$0xff]
        %v1879 = vld [vmem:[#allocation5 + $0xb0] sm:$0xff]
        %v1880 = vld [vmem:[#allocation5 + $0xb8] sm:$0xff]
        %v1881 = vld [vmem:[#allocation5 + $0xc0] sm:$0xff]
        %v1882 = vld [vmem:[#allocation5 + $0xc8] sm:$0xff]
        %v1883 = vld [vmem:[#allocation5 + $0xd0] sm:$0xff]
        %v1884 = vld [vmem:[#allocation5 + $0xd8] sm:$0xff]
        %v1885 = vld [vmem:[#allocation5 + $0xe0] sm:$0xff]
        %v1886 = vld [vmem:[#allocation5 + $0xe8] sm:$0xff]
        %v1887 = vld [vmem:[#allocation5 + $0xf0] sm:$0xff]
        %v1888 = vld [vmem:[#allocation5 + $0xf8] sm:$0xff]
        %v1889 = vld [vmem:[#allocation5 + $0x100] sm:$0xff]
        %v1890 = vld [vmem:[#allocation5 + $0x108] sm:$0xff]
        %v1891 = vld [vmem:[#allocation5 + $0x110] sm:$0xff]
        %v1892 = vld [vmem:[#allocation5 + $0x118] sm:$0xff]
        %v1893 = vld [vmem:[#allocation5 + $0x120] sm:$0xff]
        %v1894 = vld [vmem:[#allocation5 + $0x128] sm:$0xff]
        %v1895 = vld [vmem:[#allocation5 + $0x130] sm:$0xff]
        %v1896 = vld [vmem:[#allocation5 + $0x138] sm:$0xff]
        %v1897 = vld [vmem:[%s2] sm:$0xf]
        %v1898 = vld [vmem:[%s2 + $0x4] sm:$0xf]
        %v1899 = vld [vmem:[%s2 + $0x8] sm:$0xf]
        %v1900 = vld [vmem:[%s2 + $0xc] sm:$0xf]
        %v1901 = vld [vmem:[%s2 + $0x10] sm:$0xf]
        %v1902 = vld [vmem:[%s2 + $0x14] sm:$0xf]
        %v1903 = vld [vmem:[%s2 + $0x18] sm:$0xf]
        %v1904 = vld [vmem:[%s2 + $0x1c] sm:$0xf]
        %v1905 = vld [vmem:[%s2 + $0x20] sm:$0xf]
        %v1906 = vld [vmem:[%s2 + $0x24] sm:$0xf]
        %v1907 = vld [vmem:[%s2 + $0x28] sm:$0xf]
        %v1908 = vld [vmem:[%s2 + $0x2c] sm:$0xf]
        %v1909 = vld [vmem:[%s2 + $0x30] sm:$0xf]
        %v1910 = vld [vmem:[%s2 + $0x34] sm:$0xf]
        %v1911 = vld [vmem:[%s2 + $0x38] sm:$0xf]
        %v1912 = vld [vmem:[%s2 + $0x3c] sm:$0xf]
        %v1913 = vld [vmem:[%s2 + $0x40] sm:$0xf]
        %v1914 = vld [vmem:[%s2 + $0x44] sm:$0xf]
        %v1915 = vld [vmem:[%s2 + $0x48] sm:$0xf]
        %v1916 = vld [vmem:[%s2 + $0x4c] sm:$0xf]
        %v1917 = vld [vmem:[%s2 + $0x50] sm:$0xf]
        %v1918 = vld [vmem:[%s2 + $0x54] sm:$0xf]
        %v1919 = vld [vmem:[%s2 + $0x58] sm:$0xf]
        %v1920 = vld [vmem:[%s2 + $0x5c] sm:$0xf]
        %v1921 = vld [vmem:[%s2 + $0x60] sm:$0xf]
        %v1922 = vld [vmem:[%s2 + $0x64] sm:$0xf]
        %v1923 = vld [vmem:[%s2 + $0x68] sm:$0xf]
        %v1924 = vld [vmem:[%s2 + $0x6c] sm:$0xf]
        %v1925 = vld [vmem:[%s2 + $0x70] sm:$0xf]
        %v1926 = vld [vmem:[%s2 + $0x74] sm:$0xf]
        %v1927 = vld [vmem:[%s2 + $0x78] sm:$0xf]
        %v1928 = vld [vmem:[%s2 + $0x7c] sm:$0xf]
        %v1929 = vld [vmem:[%s2 + $0x80] sm:$0xf]
        %v1930 = vld [vmem:[%s2 + $0x84] sm:$0xf]
        %v1931 = vld [vmem:[%s2 + $0x88] sm:$0xf]
        %v1932 = vld [vmem:[%s2 + $0x8c] sm:$0xf]
        %v1933 = vld [vmem:[%s2 + $0x90] sm:$0xf]
        %v1934 = vld [vmem:[%s2 + $0x94] sm:$0xf]
        %v1935 = vld [vmem:[%s2 + $0x98] sm:$0xf]
        %v1936 = vld [vmem:[%s2 + $0x9c] sm:$0xf]
        %v1937 = vld [vmem:[%s2 + $0xa0] sm:$0xf]
        %v1938 = vld [vmem:[%s2 + $0xa4] sm:$0xf]
        %v1939 = vld [vmem:[%s2 + $0xa8] sm:$0xf]
        %v1940 = vld [vmem:[%s2 + $0xac] sm:$0xf]
        %v1941 = vld [vmem:[%s2 + $0xb0] sm:$0xf]
        %v1942 = vld [vmem:[%s2 + $0xb4] sm:$0xf]
        %v1943 = vld [vmem:[%s2 + $0xb8] sm:$0xf]
        %v1944 = vld [vmem:[%s2 + $0xbc] sm:$0xf]
        %v1945 = vld [vmem:[%s2 + $0xc0] sm:$0xf]
        %v1946 = vld [vmem:[%s2 + $0xc4] sm:$0xf]
        %v1947 = vld [vmem:[%s2 + $0xc8] sm:$0xf]
        %v1948 = vld [vmem:[%s2 + $0xcc] sm:$0xf]
        %v1949 = vld [vmem:[%s2 + $0xd0] sm:$0xf]
        %v1950 = vld [vmem:[%s2 + $0xd4] sm:$0xf]
        %v1951 = vld [vmem:[%s2 + $0xd8] sm:$0xf]
        %v1952 = vld [vmem:[%s2 + $0xdc] sm:$0xf]
        %v1953 = vld [vmem:[%s2 + $0xe0] sm:$0xf]
        %v1954 = vld [vmem:[%s2 + $0xe4] sm:$0xf]
        %v1955 = vld [vmem:[%s2 + $0xe8] sm:$0xf]
        %v1956 = vld [vmem:[%s2 + $0xec] sm:$0xf]
        %v1957 = vld [vmem:[%s2 + $0xf0] sm:$0xf]
        %v1958 = vld [vmem:[%s2 + $0xf4] sm:$0xf]
        %v1959 = vld [vmem:[%s2 + $0xf8] sm:$0xf]
        %v1960 = vld [vmem:[%s2 + $0xfc] sm:$0xf]
        %v1961 = vld [vmem:[%s2 + $0x100] sm:$0xf]
        %v1962 = vld [vmem:[%s2 + $0x104] sm:$0xf]
        %v1963 = vld [vmem:[%s2 + $0x108] sm:$0xf]
        %v1964 = vld [vmem:[%s2 + $0x10c] sm:$0xf]
        %v1965 = vld [vmem:[%s2 + $0x110] sm:$0xf]
        %v1966 = vld [vmem:[%s2 + $0x114] sm:$0xf]
        %v1967 = vld [vmem:[%s2 + $0x118] sm:$0xf]
        %v1968 = vld [vmem:[%s2 + $0x11c] sm:$0xf]
        %v1969 = vld [vmem:[%s2 + $0x120] sm:$0xf]
        %v1970 = vld [vmem:[%s2 + $0x124] sm:$0xf]
        %v1971 = vld [vmem:[%s2 + $0x128] sm:$0xf]
        %v1972 = vld [vmem:[%s2 + $0x12c] sm:$0xf]
        %v1973 = vld [vmem:[%s2 + $0x130] sm:$0xf]
        %v1974 = vld [vmem:[%s2 + $0x134] sm:$0xf]
        %v1975 = vld [vmem:[%s2 + $0x138] sm:$0xf]
        %v1976 = vld [vmem:[%s2 + $0x13c] sm:$0xf]
        %v1977 = vld [vmem:[%s2 + $0x140] sm:$0xf]
        %v1978 = vld [vmem:[%s2 + $0x144] sm:$0xf]
        %v1979 = vld [vmem:[%s2 + $0x148] sm:$0xf]
        %v1980 = vld [vmem:[%s2 + $0x14c] sm:$0xf]
        %v1981 = vld [vmem:[%s2 + $0x150] sm:$0xf]
        %v1982 = vld [vmem:[%s2 + $0x154] sm:$0xf]
        %v1983 = vld [vmem:[%s2 + $0x158] sm:$0xf]
        %v1984 = vld [vmem:[%s2 + $0x15c] sm:$0xf]
        %v1985 = vld [vmem:[%s2 + $0x160] sm:$0xf]
        %v1986 = vld [vmem:[%s2 + $0x164] sm:$0xf]
        %v1987 = vld [vmem:[%s2 + $0x168] sm:$0xf]
        %v1988 = vld [vmem:[%s2 + $0x16c] sm:$0xf]
        %v1989 = vld [vmem:[%s2 + $0x170] sm:$0xf]
        %v1990 = vld [vmem:[%s2 + $0x174] sm:$0xf]
        %v1991 = vld [vmem:[%s2 + $0x178] sm:$0xf]
        %v1992 = vld [vmem:[%s2 + $0x17c] sm:$0xf]
        %v1993 = vld [vmem:[%s2 + $0x180] sm:$0xf]
        %v1994 = vld [vmem:[%s2 + $0x184] sm:$0xf]
        %v1995 = vld [vmem:[%s2 + $0x188] sm:$0xf]
        %v1996 = vld [vmem:[%s2 + $0x18c] sm:$0xf]
        %v1997 = vld [vmem:[%s2 + $0x190] sm:$0xf]
        %v1998 = vld [vmem:[%s2 + $0x194] sm:$0xf]
        %v1999 = vld [vmem:[%s2 + $0x198] sm:$0xf]
        %v2000 = vld [vmem:[%s2 + $0x19c] sm:$0xf]
        %v2001 = vld [vmem:[%s2 + $0x1a0] sm:$0xf]
        %v2002 = vld [vmem:[%s2 + $0x1a4] sm:$0xf]
        %v2003 = vld [vmem:[%s2 + $0x1a8] sm:$0xf]
        %v2004 = vld [vmem:[%s2 + $0x1ac] sm:$0xf]
        %v2005 = vld [vmem:[%s2 + $0x1b0] sm:$0xf]
        %v2006 = vld [vmem:[%s2 + $0x1b4] sm:$0xf]
        %v2007 = vld [vmem:[%s2 + $0x1b8] sm:$0xf]
        %v2008 = vld [vmem:[%s2 + $0x1bc] sm:$0xf]
        %v2009 = vld [vmem:[%s2 + $0x1c0] sm:$0xf]
        %v2010 = vld [vmem:[%s2 + $0x1c4] sm:$0xf]
        %v2011 = vld [vmem:[%s2 + $0x1c8] sm:$0xf]
        %v2012 = vld [vmem:[%s2 + $0x1cc] sm:$0xf]
        %v2013 = vld [vmem:[%s2 + $0x1d0] sm:$0xf]
        %v2014 = vld [vmem:[%s2 + $0x1d4] sm:$0xf]
        %v2015 = vld [vmem:[%s2 + $0x1d8] sm:$0xf]
        %v2016 = vld [vmem:[%s2 + $0x1dc] sm:$0xf]
        %v2017 = vld [vmem:[%s2 + $0x1e0] sm:$0xf]
        %v2018 = vld [vmem:[%s2 + $0x1e4] sm:$0xf]
        %v2019 = vld [vmem:[%s2 + $0x1e8] sm:$0xf]
        %v2020 = vld [vmem:[%s2 + $0x1ec] sm:$0xf]
        %v2021 = vld [vmem:[%s2 + $0x1f0] sm:$0xf]
        %v2022 = vld [vmem:[%s2 + $0x1f4] sm:$0xf]
        %v2023 = vld [vmem:[%s2 + $0x1f8] sm:$0xf]
        %v2024 = vld [vmem:[%s2 + $0x1fc] sm:$0xf]
        %v2025 = vld [vmem:[%s2 + $0x200] sm:$0xf]
        %v2026 = vld [vmem:[%s2 + $0x204] sm:$0xf]
        %v2027 = vld [vmem:[%s2 + $0x208] sm:$0xf]
        %v2028 = vld [vmem:[%s2 + $0x20c] sm:$0xf]
        %v2029 = vld [vmem:[%s2 + $0x210] sm:$0xf]
        %v2030 = vld [vmem:[%s2 + $0x214] sm:$0xf]
        %v2031 = vld [vmem:[%s2 + $0x218] sm:$0xf]
        %v2032 = vld [vmem:[%s2 + $0x21c] sm:$0xf]
        %v2033 = vld [vmem:[%s2 + $0x220] sm:$0xf]
        %v2034 = vld [vmem:[%s2 + $0x224] sm:$0xf]
        %v2035 = vld [vmem:[%s2 + $0x228] sm:$0xf]
        %v2036 = vld [vmem:[%s2 + $0x22c] sm:$0xf]
        %v2037 = vld [vmem:[%s2 + $0x230] sm:$0xf]
        %v2038 = vld [vmem:[%s2 + $0x234] sm:$0xf]
        %v2039 = vld [vmem:[%s2 + $0x238] sm:$0xf]
        %v2040 = vld [vmem:[%s2 + $0x23c] sm:$0xf]
        %v2041 = vld [vmem:[%s2 + $0x240] sm:$0xf]
        %v2042 = vld [vmem:[%s2 + $0x244] sm:$0xf]
        %v2043 = vld [vmem:[%s2 + $0x248] sm:$0xf]
        %v2044 = vld [vmem:[%s2 + $0x24c] sm:$0xf]
        %v2045 = vld [vmem:[%s2 + $0x250] sm:$0xf]
        %v2046 = vld [vmem:[%s2 + $0x254] sm:$0xf]
        %v2047 = vld [vmem:[%s2 + $0x258] sm:$0xf]
        %v2048 = vld [vmem:[%s2 + $0x25c] sm:$0xf]
        %v2049 = vld [vmem:[%s2 + $0x260] sm:$0xf]
        %v2050 = vld [vmem:[%s2 + $0x264] sm:$0xf]
        %v2051 = vld [vmem:[%s2 + $0x268] sm:$0xf]
        %v2052 = vld [vmem:[%s2 + $0x26c] sm:$0xf]
        %v2053 = vld [vmem:[%s2 + $0x270] sm:$0xf]
        %v2054 = vld [vmem:[%s2 + $0x274] sm:$0xf]
        %v2055 = vld [vmem:[%s2 + $0x278] sm:$0xf]
        %v2056 = vld [vmem:[%s2 + $0x27c] sm:$0xf]
        %v2057 = vld [vmem:[%s4] sm:$0x1]
        %v2059 = vperm.slane %v2057, 0
        %v2101 = vunpack.c.l.b16 %v1857
        %v2102 = vunpack.c.h.b16 %v1857
        %v2103 = vunpack.c.l.b16 %v1858
        %v2104 = vunpack.c.h.b16 %v1858
        %v2105 = vunpack.c.l.b16 %v1859
        %v2106 = vunpack.c.h.b16 %v1859
        %v2107 = vunpack.c.l.b16 %v1860
        %v2108 = vunpack.c.h.b16 %v1860
        %v2109 = vunpack.c.l.b16 %v1861
        %v2110 = vunpack.c.h.b16 %v1861
        %v2111 = vunpack.c.l.b16 %v1862
        %v2112 = vunpack.c.h.b16 %v1862
        %v2113 = vunpack.c.l.b16 %v1863
        %v2114 = vunpack.c.h.b16 %v1863
        %v2115 = vunpack.c.l.b16 %v1864
        %v2116 = vunpack.c.h.b16 %v1864
        %v2117 = vunpack.c.l.b16 %v1865
        %v2118 = vunpack.c.h.b16 %v1865
        %v2119 = vunpack.c.l.b16 %v1866
        %v2120 = vunpack.c.h.b16 %v1866
        %v2121 = vunpack.c.l.b16 %v1867
        %v2122 = vunpack.c.h.b16 %v1867
        %v2123 = vunpack.c.l.b16 %v1868
        %v2124 = vunpack.c.h.b16 %v1868
        %v2125 = vunpack.c.l.b16 %v1869
        %v2126 = vunpack.c.h.b16 %v1869
        %v2127 = vunpack.c.l.b16 %v1870
        %v2128 = vunpack.c.h.b16 %v1870
        %v2129 = vunpack.c.l.b16 %v1871
        %v2130 = vunpack.c.h.b16 %v1871
        %v2131 = vunpack.c.l.b16 %v1872
        %v2132 = vunpack.c.h.b16 %v1872
        %v2133 = vunpack.c.l.b16 %v1873
        %v2134 = vunpack.c.h.b16 %v1873
        %v2135 = vunpack.c.l.b16 %v1874
        %v2136 = vunpack.c.h.b16 %v1874
        %v2137 = vunpack.c.l.b16 %v1875
        %v2138 = vunpack.c.h.b16 %v1875
        %v2139 = vunpack.c.l.b16 %v1876
        %v2140 = vunpack.c.h.b16 %v1876
        %v2141 = vunpack.c.l.b16 %v1877
        %v2142 = vunpack.c.h.b16 %v1877
        %v2143 = vunpack.c.l.b16 %v1878
        %v2144 = vunpack.c.h.b16 %v1878
        %v2145 = vunpack.c.l.b16 %v1879
        %v2146 = vunpack.c.h.b16 %v1879
        %v2147 = vunpack.c.l.b16 %v1880
        %v2148 = vunpack.c.h.b16 %v1880
        %v2149 = vunpack.c.l.b16 %v1881
        %v2150 = vunpack.c.h.b16 %v1881
        %v2151 = vunpack.c.l.b16 %v1882
        %v2152 = vunpack.c.h.b16 %v1882
        %v2153 = vunpack.c.l.b16 %v1883
        %v2154 = vunpack.c.h.b16 %v1883
        %v2155 = vunpack.c.l.b16 %v1884
        %v2156 = vunpack.c.h.b16 %v1884
        %v2157 = vunpack.c.l.b16 %v1885
        %v2158 = vunpack.c.h.b16 %v1885
        %v2159 = vunpack.c.l.b16 %v1886
        %v2160 = vunpack.c.h.b16 %v1886
        %v2161 = vunpack.c.l.b16 %v1887
        %v2162 = vunpack.c.h.b16 %v1887
        %v2163 = vunpack.c.l.b16 %v1888
        %v2164 = vunpack.c.h.b16 %v1888
        %v2165 = vunpack.c.l.b16 %v1889
        %v2166 = vunpack.c.h.b16 %v1889
        %v2167 = vunpack.c.l.b16 %v1890
        %v2168 = vunpack.c.h.b16 %v1890
        %v2169 = vunpack.c.l.b16 %v1891
        %v2170 = vunpack.c.h.b16 %v1891
        %v2171 = vunpack.c.l.b16 %v1892
        %v2172 = vunpack.c.h.b16 %v1892
        %v2173 = vunpack.c.l.b16 %v1893
        %v2174 = vunpack.c.h.b16 %v1893
        %v2175 = vunpack.c.l.b16 %v1894
        %v2176 = vunpack.c.h.b16 %v1894
        %v2177 = vunpack.c.l.b16 %v1895
        %v2178 = vunpack.c.h.b16 %v1895
        %v2179 = vunpack.c.l.b16 %v1896
        %v2180 = vunpack.c.h.b16 %v1896
        %v2181 = vpack.c.b16 %v2111, %v2101
        %v2182 = vpack.c.b16 %v2112, %v2102
        %v2183 = vpack.c.b16 %v2113, %v2103
        %v2184 = vpack.c.b16 %v2114, %v2104
        %v2185 = vpack.c.b16 %v2115, %v2105
        %v2186 = vpack.c.b16 %v2116, %v2106
        %v2187 = vpack.c.b16 %v2117, %v2107
        %v2188 = vpack.c.b16 %v2118, %v2108
        %v2189 = vpack.c.b16 %v2119, %v2109
        %v2190 = vpack.c.b16 %v2120, %v2110
        %v2191 = vpack.c.b16 %v2131, %v2121
        %v2192 = vpack.c.b16 %v2132, %v2122
        %v2193 = vpack.c.b16 %v2133, %v2123
        %v2194 = vpack.c.b16 %v2134, %v2124
        %v2195 = vpack.c.b16 %v2135, %v2125
        %v2196 = vpack.c.b16 %v2136, %v2126
        %v2197 = vpack.c.b16 %v2137, %v2127
        %v2198 = vpack.c.b16 %v2138, %v2128
        %v2199 = vpack.c.b16 %v2139, %v2129
        %v2200 = vpack.c.b16 %v2140, %v2130
        %v2201 = vpack.c.b16 %v2151, %v2141
        %v2202 = vpack.c.b16 %v2152, %v2142
        %v2203 = vpack.c.b16 %v2153, %v2143
        %v2204 = vpack.c.b16 %v2154, %v2144
        %v2205 = vpack.c.b16 %v2155, %v2145
        %v2206 = vpack.c.b16 %v2156, %v2146
        %v2207 = vpack.c.b16 %v2157, %v2147
        %v2208 = vpack.c.b16 %v2158, %v2148
        %v2209 = vpack.c.b16 %v2159, %v2149
        %v2210 = vpack.c.b16 %v2160, %v2150
        %v2211 = vpack.c.b16 %v2171, %v2161
        %v2212 = vpack.c.b16 %v2172, %v2162
        %v2213 = vpack.c.b16 %v2173, %v2163
        %v2214 = vpack.c.b16 %v2174, %v2164
        %v2215 = vpack.c.b16 %v2175, %v2165
        %v2216 = vpack.c.b16 %v2176, %v2166
        %v2217 = vpack.c.b16 %v2177, %v2167
        %v2218 = vpack.c.b16 %v2178, %v2168
        %v2219 = vpack.c.b16 %v2179, %v2169
        %v2220 = vpack.c.b16 %v2180, %v2170
        %v2421 = vunpack.c.l.b16 %v1897
        %v2422 = vunpack.c.l.b16 %v1898
        %v2423 = vunpack.c.l.b16 %v1899
        %v2424 = vunpack.c.l.b16 %v1900
        %v2425 = vunpack.c.l.b16 %v1901
        %v2426 = vunpack.c.l.b16 %v1902
        %v2427 = vunpack.c.l.b16 %v1903
        %v2428 = vunpack.c.l.b16 %v1904
        %v2429 = vunpack.c.l.b16 %v1905
        %v2430 = vunpack.c.l.b16 %v1906
        %v2431 = vunpack.c.l.b16 %v1907
        %v2432 = vunpack.c.l.b16 %v1908
        %v2433 = vunpack.c.l.b16 %v1909
        %v2434 = vunpack.c.l.b16 %v1910
        %v2435 = vunpack.c.l.b16 %v1911
        %v2436 = vunpack.c.l.b16 %v1912
        %v2437 = vunpack.c.l.b16 %v1913
        %v2438 = vunpack.c.l.b16 %v1914
        %v2439 = vunpack.c.l.b16 %v1915
        %v2440 = vunpack.c.l.b16 %v1916
        %v2441 = vunpack.c.l.b16 %v1917
        %v2442 = vunpack.c.l.b16 %v1918
        %v2443 = vunpack.c.l.b16 %v1919
        %v2444 = vunpack.c.l.b16 %v1920
        %v2445 = vunpack.c.l.b16 %v1921
        %v2446 = vunpack.c.l.b16 %v1922
        %v2447 = vunpack.c.l.b16 %v1923
        %v2448 = vunpack.c.l.b16 %v1924
        %v2449 = vunpack.c.l.b16 %v1925
        %v2450 = vunpack.c.l.b16 %v1926
        %v2451 = vunpack.c.l.b16 %v1927
        %v2452 = vunpack.c.l.b16 %v1928
        %v2453 = vunpack.c.l.b16 %v1929
        %v2454 = vunpack.c.l.b16 %v1930
        %v2455 = vunpack.c.l.b16 %v1931
        %v2456 = vunpack.c.l.b16 %v1932
        %v2457 = vunpack.c.l.b16 %v1933
        %v2458 = vunpack.c.l.b16 %v1934
        %v2459 = vunpack.c.l.b16 %v1935
        %v2460 = vunpack.c.l.b16 %v1936
        %v2461 = vunpack.c.l.b16 %v1937
        %v2462 = vunpack.c.l.b16 %v1938
        %v2463 = vunpack.c.l.b16 %v1939
        %v2464 = vunpack.c.l.b16 %v1940
        %v2465 = vunpack.c.l.b16 %v1941
        %v2466 = vunpack.c.l.b16 %v1942
        %v2467 = vunpack.c.l.b16 %v1943
        %v2468 = vunpack.c.l.b16 %v1944
        %v2469 = vunpack.c.l.b16 %v1945
        %v2470 = vunpack.c.l.b16 %v1946
        %v2471 = vunpack.c.l.b16 %v1947
        %v2472 = vunpack.c.l.b16 %v1948
        %v2473 = vunpack.c.l.b16 %v1949
        %v2474 = vunpack.c.l.b16 %v1950
        %v2475 = vunpack.c.l.b16 %v1951
        %v2476 = vunpack.c.l.b16 %v1952
        %v2477 = vunpack.c.l.b16 %v1953
        %v2478 = vunpack.c.l.b16 %v1954
        %v2479 = vunpack.c.l.b16 %v1955
        %v2480 = vunpack.c.l.b16 %v1956
        %v2481 = vunpack.c.l.b16 %v1957
        %v2482 = vunpack.c.l.b16 %v1958
        %v2483 = vunpack.c.l.b16 %v1959
        %v2484 = vunpack.c.l.b16 %v1960
        %v2485 = vunpack.c.l.b16 %v1961
        %v2486 = vunpack.c.l.b16 %v1962
        %v2487 = vunpack.c.l.b16 %v1963
        %v2488 = vunpack.c.l.b16 %v1964
        %v2489 = vunpack.c.l.b16 %v1965
        %v2490 = vunpack.c.l.b16 %v1966
        %v2491 = vunpack.c.l.b16 %v1967
        %v2492 = vunpack.c.l.b16 %v1968
        %v2493 = vunpack.c.l.b16 %v1969
        %v2494 = vunpack.c.l.b16 %v1970
        %v2495 = vunpack.c.l.b16 %v1971
        %v2496 = vunpack.c.l.b16 %v1972
        %v2497 = vunpack.c.l.b16 %v1973
        %v2498 = vunpack.c.l.b16 %v1974
        %v2499 = vunpack.c.l.b16 %v1975
        %v2500 = vunpack.c.l.b16 %v1976
        %v2501 = vunpack.c.l.b16 %v1977
        %v2502 = vunpack.c.l.b16 %v1978
        %v2503 = vunpack.c.l.b16 %v1979
        %v2504 = vunpack.c.l.b16 %v1980
        %v2505 = vunpack.c.l.b16 %v1981
        %v2506 = vunpack.c.l.b16 %v1982
        %v2507 = vunpack.c.l.b16 %v1983
        %v2508 = vunpack.c.l.b16 %v1984
        %v2509 = vunpack.c.l.b16 %v1985
        %v2510 = vunpack.c.l.b16 %v1986
        %v2511 = vunpack.c.l.b16 %v1987
        %v2512 = vunpack.c.l.b16 %v1988
        %v2513 = vunpack.c.l.b16 %v1989
        %v2514 = vunpack.c.l.b16 %v1990
        %v2515 = vunpack.c.l.b16 %v1991
        %v2516 = vunpack.c.l.b16 %v1992
        %v2517 = vunpack.c.l.b16 %v1993
        %v2518 = vunpack.c.l.b16 %v1994
        %v2519 = vunpack.c.l.b16 %v1995
        %v2520 = vunpack.c.l.b16 %v1996
        %v2521 = vunpack.c.l.b16 %v1997
        %v2522 = vunpack.c.l.b16 %v1998
        %v2523 = vunpack.c.l.b16 %v1999
        %v2524 = vunpack.c.l.b16 %v2000
        %v2525 = vunpack.c.l.b16 %v2001
        %v2526 = vunpack.c.l.b16 %v2002
        %v2527 = vunpack.c.l.b16 %v2003
        %v2528 = vunpack.c.l.b16 %v2004
        %v2529 = vunpack.c.l.b16 %v2005
        %v2530 = vunpack.c.l.b16 %v2006
        %v2531 = vunpack.c.l.b16 %v2007
        %v2532 = vunpack.c.l.b16 %v2008
        %v2533 = vunpack.c.l.b16 %v2009
        %v2534 = vunpack.c.l.b16 %v2010
        %v2535 = vunpack.c.l.b16 %v2011
        %v2536 = vunpack.c.l.b16 %v2012
        %v2537 = vunpack.c.l.b16 %v2013
        %v2538 = vunpack.c.l.b16 %v2014
        %v2539 = vunpack.c.l.b16 %v2015
        %v2540 = vunpack.c.l.b16 %v2016
        %v2541 = vunpack.c.l.b16 %v2017
        %v2542 = vunpack.c.l.b16 %v2018
        %v2543 = vunpack.c.l.b16 %v2019
        %v2544 = vunpack.c.l.b16 %v2020
        %v2545 = vunpack.c.l.b16 %v2021
        %v2546 = vunpack.c.l.b16 %v2022
        %v2547 = vunpack.c.l.b16 %v2023
        %v2548 = vunpack.c.l.b16 %v2024
        %v2549 = vunpack.c.l.b16 %v2025
        %v2550 = vunpack.c.l.b16 %v2026
        %v2551 = vunpack.c.l.b16 %v2027
        %v2552 = vunpack.c.l.b16 %v2028
        %v2553 = vunpack.c.l.b16 %v2029
        %v2554 = vunpack.c.l.b16 %v2030
        %v2555 = vunpack.c.l.b16 %v2031
        %v2556 = vunpack.c.l.b16 %v2032
        %v2557 = vunpack.c.l.b16 %v2033
        %v2558 = vunpack.c.l.b16 %v2034
        %v2559 = vunpack.c.l.b16 %v2035
        %v2560 = vunpack.c.l.b16 %v2036
        %v2561 = vunpack.c.l.b16 %v2037
        %v2562 = vunpack.c.l.b16 %v2038
        %v2563 = vunpack.c.l.b16 %v2039
        %v2564 = vunpack.c.l.b16 %v2040
        %v2565 = vunpack.c.l.b16 %v2041
        %v2566 = vunpack.c.l.b16 %v2042
        %v2567 = vunpack.c.l.b16 %v2043
        %v2568 = vunpack.c.l.b16 %v2044
        %v2569 = vunpack.c.l.b16 %v2045
        %v2570 = vunpack.c.l.b16 %v2046
        %v2571 = vunpack.c.l.b16 %v2047
        %v2572 = vunpack.c.l.b16 %v2048
        %v2573 = vunpack.c.l.b16 %v2049
        %v2574 = vunpack.c.l.b16 %v2050
        %v2575 = vunpack.c.l.b16 %v2051
        %v2576 = vunpack.c.l.b16 %v2052
        %v2577 = vunpack.c.l.b16 %v2053
        %v2578 = vunpack.c.l.b16 %v2054
        %v2579 = vunpack.c.l.b16 %v2055
        %v2580 = vunpack.c.l.b16 %v2056
        %v2581 = vpack.c.b16 %v2422, %v2421
        %v2582 = vpack.c.b16 %v2424, %v2423
        %v2583 = vpack.c.b16 %v2426, %v2425
        %v2584 = vpack.c.b16 %v2428, %v2427
        %v2585 = vpack.c.b16 %v2430, %v2429
        %v2586 = vpack.c.b16 %v2432, %v2431
        %v2587 = vpack.c.b16 %v2434, %v2433
        %v2588 = vpack.c.b16 %v2436, %v2435
        %v2589 = vpack.c.b16 %v2438, %v2437
        %v2590 = vpack.c.b16 %v2440, %v2439
        %v2591 = vpack.c.b16 %v2442, %v2441
        %v2592 = vpack.c.b16 %v2444, %v2443
        %v2593 = vpack.c.b16 %v2446, %v2445
        %v2594 = vpack.c.b16 %v2448, %v2447
        %v2595 = vpack.c.b16 %v2450, %v2449
        %v2596 = vpack.c.b16 %v2452, %v2451
        %v2597 = vpack.c.b16 %v2454, %v2453
        %v2598 = vpack.c.b16 %v2456, %v2455
        %v2599 = vpack.c.b16 %v2458, %v2457
        %v2600 = vpack.c.b16 %v2460, %v2459
        %v2601 = vpack.c.b16 %v2462, %v2461
        %v2602 = vpack.c.b16 %v2464, %v2463
        %v2603 = vpack.c.b16 %v2466, %v2465
        %v2604 = vpack.c.b16 %v2468, %v2467
        %v2605 = vpack.c.b16 %v2470, %v2469
        %v2606 = vpack.c.b16 %v2472, %v2471
        %v2607 = vpack.c.b16 %v2474, %v2473
        %v2608 = vpack.c.b16 %v2476, %v2475
        %v2609 = vpack.c.b16 %v2478, %v2477
        %v2610 = vpack.c.b16 %v2480, %v2479
        %v2611 = vpack.c.b16 %v2482, %v2481
        %v2612 = vpack.c.b16 %v2484, %v2483
        %v2613 = vpack.c.b16 %v2486, %v2485
        %v2614 = vpack.c.b16 %v2488, %v2487
        %v2615 = vpack.c.b16 %v2490, %v2489
        %v2616 = vpack.c.b16 %v2492, %v2491
        %v2617 = vpack.c.b16 %v2494, %v2493
        %v2618 = vpack.c.b16 %v2496, %v2495
        %v2619 = vpack.c.b16 %v2498, %v2497
        %v2620 = vpack.c.b16 %v2500, %v2499
        %v2621 = vpack.c.b16 %v2502, %v2501
        %v2622 = vpack.c.b16 %v2504, %v2503
        %v2623 = vpack.c.b16 %v2506, %v2505
        %v2624 = vpack.c.b16 %v2508, %v2507
        %v2625 = vpack.c.b16 %v2510, %v2509
        %v2626 = vpack.c.b16 %v2512, %v2511
        %v2627 = vpack.c.b16 %v2514, %v2513
        %v2628 = vpack.c.b16 %v2516, %v2515
        %v2629 = vpack.c.b16 %v2518, %v2517
        %v2630 = vpack.c.b16 %v2520, %v2519
        %v2631 = vpack.c.b16 %v2522, %v2521
        %v2632 = vpack.c.b16 %v2524, %v2523
        %v2633 = vpack.c.b16 %v2526, %v2525
        %v2634 = vpack.c.b16 %v2528, %v2527
        %v2635 = vpack.c.b16 %v2530, %v2529
        %v2636 = vpack.c.b16 %v2532, %v2531
        %v2637 = vpack.c.b16 %v2534, %v2533
        %v2638 = vpack.c.b16 %v2536, %v2535
        %v2639 = vpack.c.b16 %v2538, %v2537
        %v2640 = vpack.c.b16 %v2540, %v2539
        %v2641 = vpack.c.b16 %v2542, %v2541
        %v2642 = vpack.c.b16 %v2544, %v2543
        %v2643 = vpack.c.b16 %v2546, %v2545
        %v2644 = vpack.c.b16 %v2548, %v2547
        %v2645 = vpack.c.b16 %v2550, %v2549
        %v2646 = vpack.c.b16 %v2552, %v2551
        %v2647 = vpack.c.b16 %v2554, %v2553
        %v2648 = vpack.c.b16 %v2556, %v2555
        %v2649 = vpack.c.b16 %v2558, %v2557
        %v2650 = vpack.c.b16 %v2560, %v2559
        %v2651 = vpack.c.b16 %v2562, %v2561
        %v2652 = vpack.c.b16 %v2564, %v2563
        %v2653 = vpack.c.b16 %v2566, %v2565
        %v2654 = vpack.c.b16 %v2568, %v2567
        %v2655 = vpack.c.b16 %v2570, %v2569
        %v2656 = vpack.c.b16 %v2572, %v2571
        %v2657 = vpack.c.b16 %v2574, %v2573
        %v2658 = vpack.c.b16 %v2576, %v2575
        %v2659 = vpack.c.b16 %v2578, %v2577
        %v2660 = vpack.c.b16 %v2580, %v2579
        %2741 = vmatpush.bf16.msra.mxu0 %v2588
        %2742 = vmatpush.bf16.msra.mxu0 %v2587
        %2743 = vmatpush.bf16.msra.mxu0 %v2586
        %2744 = vmatpush.bf16.msra.mxu0 %v2585
        %2745 = vmatpush.bf16.msra.mxu0 %v2584
        %2746 = vmatpush.bf16.msra.mxu0 %v2583
        %2747 = vmatpush.bf16.msra.mxu0 %v2582
        %2748 = vmatpush.bf16.msra.mxu0 %v2581
        %2749 = vmatmul.bf16.gmra.mxu0 %v2181
        %v2750 = vpop.f32.mrf.mxu0
        %v2751 = vadd.f32 %v2059, %v2750
        %v2752 = vpop.f32.mrf.mxu0
        %v2753 = vadd.f32 %v2059, %v2752
        %2754 = vmatmul.bf16.gmra.mxu0 %v2191
        %v2755 = vpop.f32.mrf.mxu0
        %v2756 = vadd.f32 %v2059, %v2755
        %v2757 = vpop.f32.mrf.mxu0
        %v2758 = vadd.f32 %v2059, %v2757
        %2759 = vmatmul.bf16.gmra.mxu0 %v2201
        %v2760 = vpop.f32.mrf.mxu0
        %v2761 = vadd.f32 %v2059, %v2760
        %v2762 = vpop.f32.mrf.mxu0
        %v2763 = vadd.f32 %v2059, %v2762
        %2764 = vmatmul.bf16.gmra.mxu0 %v2211
        %v2765 = vpop.f32.mrf.mxu0
        %v2766 = vadd.f32 %v2059, %v2765
        %v2767 = vpop.f32.mrf.mxu0
        %v2768 = vadd.f32 %v2059, %v2767
        %2769 = vdwg.mxu0
        %2770 = vmatpush.bf16.msra.mxu0 %v2596
        %2771 = vmatpush.bf16.msra.mxu0 %v2595
        %2772 = vmatpush.bf16.msra.mxu0 %v2594
        %2773 = vmatpush.bf16.msra.mxu0 %v2593
        %2774 = vmatpush.bf16.msra.mxu0 %v2592
        %2775 = vmatpush.bf16.msra.mxu0 %v2591
        %2776 = vmatpush.bf16.msra.mxu0 %v2590
        %2777 = vmatpush.bf16.msra.mxu0 %v2589
        %2778 = vmatmul.bf16.gmra.mxu0 %v2182
        %v2779 = vpop.f32.mrf.mxu0
        %v2780 = vadd.f32 %v2751, %v2779
        %v2781 = vpop.f32.mrf.mxu0
        %v2782 = vadd.f32 %v2753, %v2781
        %2783 = vmatmul.bf16.gmra.mxu0 %v2192
        %v2784 = vpop.f32.mrf.mxu0
        %v2785 = vadd.f32 %v2756, %v2784
        %v2786 = vpop.f32.mrf.mxu0
        %v2787 = vadd.f32 %v2758, %v2786
        %2788 = vmatmul.bf16.gmra.mxu0 %v2202
        %v2789 = vpop.f32.mrf.mxu0
        %v2790 = vadd.f32 %v2761, %v2789
        %v2791 = vpop.f32.mrf.mxu0
        %v2792 = vadd.f32 %v2763, %v2791
        %2793 = vmatmul.bf16.gmra.mxu0 %v2212
        %v2794 = vpop.f32.mrf.mxu0
        %v2795 = vadd.f32 %v2766, %v2794
        %v2796 = vpop.f32.mrf.mxu0
        %v2797 = vadd.f32 %v2768, %v2796
        %2798 = vdwg.mxu0
        %2799 = vmatpush.bf16.msra.mxu0 %v2604
        %2800 = vmatpush.bf16.msra.mxu0 %v2603
        %2801 = vmatpush.bf16.msra.mxu0 %v2602
        %2802 = vmatpush.bf16.msra.mxu0 %v2601
        %2803 = vmatpush.bf16.msra.mxu0 %v2600
        %2804 = vmatpush.bf16.msra.mxu0 %v2599
        %2805 = vmatpush.bf16.msra.mxu0 %v2598
        %2806 = vmatpush.bf16.msra.mxu0 %v2597
        %2807 = vmatmul.bf16.gmra.mxu0 %v2183
        %v2808 = vpop.f32.mrf.mxu0
        %v2809 = vadd.f32 %v2780, %v2808
        %v2810 = vpop.f32.mrf.mxu0
        %v2811 = vadd.f32 %v2782, %v2810
        %2812 = vmatmul.bf16.gmra.mxu0 %v2193
        %v2813 = vpop.f32.mrf.mxu0
        %v2814 = vadd.f32 %v2785, %v2813
        %v2815 = vpop.f32.mrf.mxu0
        %v2816 = vadd.f32 %v2787, %v2815
        %2817 = vmatmul.bf16.gmra.mxu0 %v2203
        %v2818 = vpop.f32.mrf.mxu0
        %v2819 = vadd.f32 %v2790, %v2818
        %v2820 = vpop.f32.mrf.mxu0
        %v2821 = vadd.f32 %v2792, %v2820
        %2822 = vmatmul.bf16.gmra.mxu0 %v2213
        %v2823 = vpop.f32.mrf.mxu0
        %v2824 = vadd.f32 %v2795, %v2823
        %v2825 = vpop.f32.mrf.mxu0
        %v2826 = vadd.f32 %v2797, %v2825
        %2827 = vdwg.mxu0
        %2828 = vmatpush.bf16.msra.mxu0 %v2612
        %2829 = vmatpush.bf16.msra.mxu0 %v2611
        %2830 = vmatpush.bf16.msra.mxu0 %v2610
        %2831 = vmatpush.bf16.msra.mxu0 %v2609
        %2832 = vmatpush.bf16.msra.mxu0 %v2608
        %2833 = vmatpush.bf16.msra.mxu0 %v2607
        %2834 = vmatpush.bf16.msra.mxu0 %v2606
        %2835 = vmatpush.bf16.msra.mxu0 %v2605
        %2836 = vmatmul.bf16.gmra.mxu0 %v2184
        %v2837 = vpop.f32.mrf.mxu0
        %v2838 = vadd.f32 %v2809, %v2837
        %v2839 = vpop.f32.mrf.mxu0
        %v2840 = vadd.f32 %v2811, %v2839
        %2841 = vmatmul.bf16.gmra.mxu0 %v2194
        %v2842 = vpop.f32.mrf.mxu0
        %v2843 = vadd.f32 %v2814, %v2842
        %v2844 = vpop.f32.mrf.mxu0
        %v2845 = vadd.f32 %v2816, %v2844
        %2846 = vmatmul.bf16.gmra.mxu0 %v2204
        %v2847 = vpop.f32.mrf.mxu0
        %v2848 = vadd.f32 %v2819, %v2847
        %v2849 = vpop.f32.mrf.mxu0
        %v2850 = vadd.f32 %v2821, %v2849
        %2851 = vmatmul.bf16.gmra.mxu0 %v2214
        %v2852 = vpop.f32.mrf.mxu0
        %v2853 = vadd.f32 %v2824, %v2852
        %v2854 = vpop.f32.mrf.mxu0
        %v2855 = vadd.f32 %v2826, %v2854
        %2856 = vdwg.mxu0
        %2857 = vmatpush.bf16.msra.mxu0 %v2620
        %2858 = vmatpush.bf16.msra.mxu0 %v2619
        %2859 = vmatpush.bf16.msra.mxu0 %v2618
        %2860 = vmatpush.bf16.msra.mxu0 %v2617
        %2861 = vmatpush.bf16.msra.mxu0 %v2616
        %2862 = vmatpush.bf16.msra.mxu0 %v2615
        %2863 = vmatpush.bf16.msra.mxu0 %v2614
        %2864 = vmatpush.bf16.msra.mxu0 %v2613
        %2865 = vmatmul.bf16.gmra.mxu0 %v2185
        %v2866 = vpop.f32.mrf.mxu0
        %v2867 = vadd.f32 %v2838, %v2866
        %v2868 = vpop.f32.mrf.mxu0
        %v2869 = vadd.f32 %v2840, %v2868
        %2870 = vmatmul.bf16.gmra.mxu0 %v2195
        %v2871 = vpop.f32.mrf.mxu0
        %v2872 = vadd.f32 %v2843, %v2871
        %v2873 = vpop.f32.mrf.mxu0
        %v2874 = vadd.f32 %v2845, %v2873
        %2875 = vmatmul.bf16.gmra.mxu0 %v2205
        %v2876 = vpop.f32.mrf.mxu0
        %v2877 = vadd.f32 %v2848, %v2876
        %v2878 = vpop.f32.mrf.mxu0
        %v2879 = vadd.f32 %v2850, %v2878
        %2880 = vmatmul.bf16.gmra.mxu0 %v2215
        %v2881 = vpop.f32.mrf.mxu0
        %v2882 = vadd.f32 %v2853, %v2881
        %v2883 = vpop.f32.mrf.mxu0
        %v2884 = vadd.f32 %v2855, %v2883
        %2885 = vdwg.mxu0
        %2886 = vmatpush.bf16.msra.mxu0 %v2628
        %2887 = vmatpush.bf16.msra.mxu0 %v2627
        %2888 = vmatpush.bf16.msra.mxu0 %v2626
        %2889 = vmatpush.bf16.msra.mxu0 %v2625
        %2890 = vmatpush.bf16.msra.mxu0 %v2624
        %2891 = vmatpush.bf16.msra.mxu0 %v2623
        %2892 = vmatpush.bf16.msra.mxu0 %v2622
        %2893 = vmatpush.bf16.msra.mxu0 %v2621
        %2894 = vmatmul.bf16.gmra.mxu0 %v2186
        %v2895 = vpop.f32.mrf.mxu0
        %v2896 = vadd.f32 %v2867, %v2895
        %v2897 = vpop.f32.mrf.mxu0
        %v2898 = vadd.f32 %v2869, %v2897
        %2899 = vmatmul.bf16.gmra.mxu0 %v2196
        %v2900 = vpop.f32.mrf.mxu0
        %v2901 = vadd.f32 %v2872, %v2900
        %v2902 = vpop.f32.mrf.mxu0
        %v2903 = vadd.f32 %v2874, %v2902
        %2904 = vmatmul.bf16.gmra.mxu0 %v2206
        %v2905 = vpop.f32.mrf.mxu0
        %v2906 = vadd.f32 %v2877, %v2905
        %v2907 = vpop.f32.mrf.mxu0
        %v2908 = vadd.f32 %v2879, %v2907
        %2909 = vmatmul.bf16.gmra.mxu0 %v2216
        %v2910 = vpop.f32.mrf.mxu0
        %v2911 = vadd.f32 %v2882, %v2910
        %v2912 = vpop.f32.mrf.mxu0
        %v2913 = vadd.f32 %v2884, %v2912
        %2914 = vdwg.mxu0
        %2915 = vmatpush.bf16.msra.mxu0 %v2636
        %2916 = vmatpush.bf16.msra.mxu0 %v2635
        %2917 = vmatpush.bf16.msra.mxu0 %v2634
        %2918 = vmatpush.bf16.msra.mxu0 %v2633
        %2919 = vmatpush.bf16.msra.mxu0 %v2632
        %2920 = vmatpush.bf16.msra.mxu0 %v2631
        %2921 = vmatpush.bf16.msra.mxu0 %v2630
        %2922 = vmatpush.bf16.msra.mxu0 %v2629
        %2923 = vmatmul.bf16.gmra.mxu0 %v2187
        %v2924 = vpop.f32.mrf.mxu0
        %v2925 = vadd.f32 %v2896, %v2924
        %v2926 = vpop.f32.mrf.mxu0
        %v2927 = vadd.f32 %v2898, %v2926
        %2928 = vmatmul.bf16.gmra.mxu0 %v2197
        %v2929 = vpop.f32.mrf.mxu0
        %v2930 = vadd.f32 %v2901, %v2929
        %v2931 = vpop.f32.mrf.mxu0
        %v2932 = vadd.f32 %v2903, %v2931
        %2933 = vmatmul.bf16.gmra.mxu0 %v2207
        %v2934 = vpop.f32.mrf.mxu0
        %v2935 = vadd.f32 %v2906, %v2934
        %v2936 = vpop.f32.mrf.mxu0
        %v2937 = vadd.f32 %v2908, %v2936
        %2938 = vmatmul.bf16.gmra.mxu0 %v2217
        %v2939 = vpop.f32.mrf.mxu0
        %v2940 = vadd.f32 %v2911, %v2939
        %v2941 = vpop.f32.mrf.mxu0
        %v2942 = vadd.f32 %v2913, %v2941
        %2943 = vdwg.mxu0
        %2944 = vmatpush.bf16.msra.mxu0 %v2644
        %2945 = vmatpush.bf16.msra.mxu0 %v2643
        %2946 = vmatpush.bf16.msra.mxu0 %v2642
        %2947 = vmatpush.bf16.msra.mxu0 %v2641
        %2948 = vmatpush.bf16.msra.mxu0 %v2640
        %2949 = vmatpush.bf16.msra.mxu0 %v2639
        %2950 = vmatpush.bf16.msra.mxu0 %v2638
        %2951 = vmatpush.bf16.msra.mxu0 %v2637
        %2952 = vmatmul.bf16.gmra.mxu0 %v2188
        %v2953 = vpop.f32.mrf.mxu0
        %v2954 = vadd.f32 %v2925, %v2953
        %v2955 = vpop.f32.mrf.mxu0
        %v2956 = vadd.f32 %v2927, %v2955
        %2957 = vmatmul.bf16.gmra.mxu0 %v2198
        %v2958 = vpop.f32.mrf.mxu0
        %v2959 = vadd.f32 %v2930, %v2958
        %v2960 = vpop.f32.mrf.mxu0
        %v2961 = vadd.f32 %v2932, %v2960
        %2962 = vmatmul.bf16.gmra.mxu0 %v2208
        %v2963 = vpop.f32.mrf.mxu0
        %v2964 = vadd.f32 %v2935, %v2963
        %v2965 = vpop.f32.mrf.mxu0
        %v2966 = vadd.f32 %v2937, %v2965
        %2967 = vmatmul.bf16.gmra.mxu0 %v2218
        %v2968 = vpop.f32.mrf.mxu0
        %v2969 = vadd.f32 %v2940, %v2968
        %v2970 = vpop.f32.mrf.mxu0
        %v2971 = vadd.f32 %v2942, %v2970
        %2972 = vdwg.mxu0
        %2973 = vmatpush.bf16.msra.mxu0 %v2652
        %2974 = vmatpush.bf16.msra.mxu0 %v2651
        %2975 = vmatpush.bf16.msra.mxu0 %v2650
        %2976 = vmatpush.bf16.msra.mxu0 %v2649
        %2977 = vmatpush.bf16.msra.mxu0 %v2648
        %2978 = vmatpush.bf16.msra.mxu0 %v2647
        %2979 = vmatpush.bf16.msra.mxu0 %v2646
        %2980 = vmatpush.bf16.msra.mxu0 %v2645
        %2981 = vmatmul.bf16.gmra.mxu0 %v2189
        %v2982 = vpop.f32.mrf.mxu0
        %v2983 = vadd.f32 %v2954, %v2982
        %v2984 = vpop.f32.mrf.mxu0
        %v2985 = vadd.f32 %v2956, %v2984
        %2986 = vmatmul.bf16.gmra.mxu0 %v2199
        %v2987 = vpop.f32.mrf.mxu0
        %v2988 = vadd.f32 %v2959, %v2987
        %v2989 = vpop.f32.mrf.mxu0
        %v2990 = vadd.f32 %v2961, %v2989
        %2991 = vmatmul.bf16.gmra.mxu0 %v2209
        %v2992 = vpop.f32.mrf.mxu0
        %v2993 = vadd.f32 %v2964, %v2992
        %v2994 = vpop.f32.mrf.mxu0
        %v2995 = vadd.f32 %v2966, %v2994
        %2996 = vmatmul.bf16.gmra.mxu0 %v2219
        %v2997 = vpop.f32.mrf.mxu0
        %v2998 = vadd.f32 %v2969, %v2997
        %v2999 = vpop.f32.mrf.mxu0
        %v3000 = vadd.f32 %v2971, %v2999
        %3001 = vdwg.mxu0
        %3002 = vmatpush.bf16.msra.mxu0 %v2660
        %3003 = vmatpush.bf16.msra.mxu0 %v2659
        %3004 = vmatpush.bf16.msra.mxu0 %v2658
        %3005 = vmatpush.bf16.msra.mxu0 %v2657
        %3006 = vmatpush.bf16.msra.mxu0 %v2656
        %3007 = vmatpush.bf16.msra.mxu0 %v2655
        %3008 = vmatpush.bf16.msra.mxu0 %v2654
        %3009 = vmatpush.bf16.msra.mxu0 %v2653
        %3010 = vmatmul.bf16.gmra.mxu0 %v2190
        %v3011 = vpop.f32.mrf.mxu0
        %v3012 = vadd.f32 %v2983, %v3011
        %v3013 = vpop.f32.mrf.mxu0
        %v3014 = vadd.f32 %v2985, %v3013
        %3015 = vmatmul.bf16.gmra.mxu0 %v2200
        %v3016 = vpop.f32.mrf.mxu0
        %v3017 = vadd.f32 %v2988, %v3016
        %v3018 = vpop.f32.mrf.mxu0
        %v3019 = vadd.f32 %v2990, %v3018
        %3020 = vmatmul.bf16.gmra.mxu0 %v2210
        %v3021 = vpop.f32.mrf.mxu0
        %v3022 = vadd.f32 %v2993, %v3021
        %v3023 = vpop.f32.mrf.mxu0
        %v3024 = vadd.f32 %v2995, %v3023
        %3025 = vmatmul.bf16.gmra.mxu0 %v2220
        %v3026 = vpop.f32.mrf.mxu0
        %v3027 = vadd.f32 %v2998, %v3026
        %v3028 = vpop.f32.mrf.mxu0
        %v3029 = vadd.f32 %v3000, %v3028
        %3030 = vdwg.mxu0
        %vm3031 = vcmp.ge.f32.partialorder %v3012, 0.0
        %vm3032 = vcmp.ge.f32.partialorder %v3014, 0.0
        %vm3033 = vcmp.ge.f32.partialorder %v3017, 0.0
        %vm3034 = vcmp.ge.f32.partialorder %v3019, 0.0
        %vm3035 = vcmp.ge.f32.partialorder %v3022, 0.0
        %vm3036 = vcmp.ge.f32.partialorder %v3024, 0.0
        %vm3037 = vcmp.ge.f32.partialorder %v3027, 0.0
        %vm3038 = vcmp.ge.f32.partialorder %v3029, 0.0
        %v3039 = vmul.f32 %v3012, 0.1
        %v3040 = vmul.f32 %v3014, 0.1
        %v3041 = vmul.f32 %v3017, 0.1
        %v3042 = vmul.f32 %v3019, 0.1
        %v3043 = vmul.f32 %v3022, 0.1
        %v3044 = vmul.f32 %v3024, 0.1
        %v3045 = vmul.f32 %v3027, 0.1
        %v3046 = vmul.f32 %v3029, 0.1
        %v3047 = vsel %vm3031, %v3012, %v3039
        %v3048 = vsel %vm3032, %v3014, %v3040
        %v3049 = vsel %vm3033, %v3017, %v3041
        %v3050 = vsel %vm3034, %v3019, %v3042
        %v3051 = vsel %vm3035, %v3022, %v3043
        %v3052 = vsel %vm3036, %v3024, %v3044
        %v3053 = vsel %vm3037, %v3027, %v3045
        %v3054 = vsel %vm3038, %v3029, %v3046
        %3055 = vst [vmem:[%s241] sm:$0xff] %v3047
        %3056 = vst [vmem:[%s241 + $0x8] sm:$0xff] %v3048
        %3057 = vst [vmem:[%s241 + $0x10] sm:$0xff] %v3049
        %3058 = vst [vmem:[%s241 + $0x18] sm:$0xff] %v3050
        %3059 = vst [vmem:[%s241 + $0x20] sm:$0xff] %v3051
        %3060 = vst [vmem:[%s241 + $0x28] sm:$0xff] %v3052
        %3061 = vst [vmem:[%s241 + $0x30] sm:$0xff] %v3053
        %3062 = vst [vmem:[%s241 + $0x38] sm:$0xff] %v3054
        %p3063 = scmp.lt.s32.totalorder %s17, 1
        %s3064 = scalar_select %p3063, %s17, 1
        %s3065 = smul.addr %s3064, 8
        %s3066 = smul.addr %s3065, 8
        %s3067 = scalar_lea.vmem %s5, %s3066
        // Predicated region
        $region45: #{residual_block_3d_forward.1} parent=39 // pred_check
          %p3068 = pneg %p145
        $region46: #{residual_block_3d_forward.1} parent=39 // pred_check_branch
          %3070 = sbr.rel (%p3068) target = $region48
        $region47: #{residual_block_3d_forward.1} parent=39 // pred_region
          _
        $region48: #{residual_block_3d_forward.1} parent=39 // pred_fallthru
          _
      $region40: #{residual_block_3d_forward.1} parent=5 // pred_fallthru
        _
      %p3071 = scmp.le.s32.totalorder 2, %s12
      // Predicated region
      $region49: #{residual_block_3d_forward.1} parent=5 // pred_check
        %p3072 = pneg %p3071
      $region50: #{residual_block_3d_forward.1} parent=5 // pred_check_branch
        %3074 = sbr.rel (%p3072) target = $region52
      $region51: #{residual_block_3d_forward.1} parent=5 // pred_region
        %s3075 = ssub.s32 %s12, 2
        // Predicated region
        $region53: #{residual_block_3d_forward.1} parent=51 // pred_check
          %p3076 = pneg %p151
        $region54: #{residual_block_3d_forward.1} parent=51 // pred_check_branch
          %3078 = sbr.rel (%p3076) target = $region56
        $region55: #{residual_block_3d_forward.1} parent=51 // pred_region
          %p3079 = scmp.lt.s32.totalorder %s18, 1
          %s3080 = scalar_select %p3079, %s18, 1
          %s3081 = smul.addr %s3080, 8
          %s3082 = smul.addr %s3081, 8
          %s3083 = scalar_lea.vmem %s5, %s3082
        $region56: #{residual_block_3d_forward.1} parent=51 // pred_fallthru
          _
      $region52: #{residual_block_3d_forward.1} parent=5 // pred_fallthru
        _
    $region6: #{residual_block_3d_forward.1} parent=1 // loop_footer
      %s16 = sadd.s32 1, %s12
    $region7: #{residual_block_3d_forward.1} parent=1 // loop_footer_branch
      %11 = sbr.rel target = $region3
    $region8: #{residual_block_3d_forward.1} parent=1 // loop_exit
      _
    %3084 = vsyncpa [#allocation7], 1
    %s3085 = scalar_lea.sflag [#allocation7], 1
    %3086 = vsyncpa %s3085, 1

</llo_original>
